<compile_context>
chip_gen: v7x
topology: tpu7x:2x2x1
jax: 0.10.0
libtpu: 0.0.40
codegen_flags: <defaults>
</compile_context>

<pallas_src>
import jax
import jax.numpy as jnp
from jax.experimental import pallas as pl
from jax.experimental.pallas import tpu as pltpu

NEG_BIG = -1.0e30  # effectively -inf for softmax masking, NaN-safe


def mlp_kernel(x_ref, w1_ref, b1_ref, w2_ref, b2_ref,
               w3_ref, b3_ref, w4_ref, b4_ref, o_ref):
    # layer_input: (TB, dim_in) @ (dim_in, 512) + b1, ReLU   (bf16 MXU, f32 acc)
    x = x_ref[...].astype(jnp.bfloat16)
    h = jnp.dot(x, w1_ref[...], preferred_element_type=jnp.float32) + b1_ref[...]
    h = jnp.maximum(h, 0.0)
    # dropout(p=0) -> identity
    # layer_hidden1: (TB, 512) @ (512, 256) + b2, ReLU
    h = jnp.dot(h.astype(jnp.bfloat16), w2_ref[...],
                preferred_element_type=jnp.float32) + b2_ref[...]
    h = jnp.maximum(h, 0.0)
    # layer_hidden2: (TB, 256) @ (256, 64) + b3, ReLU
    h = jnp.dot(h.astype(jnp.bfloat16), w3_ref[...],
                preferred_element_type=jnp.float32) + b3_ref[...]
    h = jnp.maximum(h, 0.0)
    # layer_out: (TB, 64) @ (64, out_pad) + b4  (padded cols carry NEG_BIG bias)
    logits = jnp.dot(h.astype(jnp.bfloat16), w4_ref[...],
                     preferred_element_type=jnp.float32) + b4_ref[...]
    # softmax over the last axis (PyTorch dim=1); padded lanes -> exp underflows to 0
    m = jnp.max(logits, axis=-1, keepdims=True)
    e = jnp.exp(logits - m)
    inv = pl.reciprocal(jnp.sum(e, axis=-1, keepdims=True), approx=True)
    o_ref[...] = e * inv


def mlp_forward(x_nchw, params, dim_out, *, tb=128):
    """x_nchw: (N, C, H, W). params: bf16 (in,out) weights, f32 (1,out) biases
    (w4/b4 lane-padded). Returns (N, dim_out) f32 softmax probabilities."""
    n = x_nchw.shape[0]
    dim_in = x_nchw.shape[1] * x_nchw.shape[-2] * x_nchw.shape[-1]
    x2d = x_nchw.reshape(n, dim_in).astype(jnp.float32)   # x.view(-1, C*H*W)
    out_pad = params["w4"].shape[1]

    # Pad batch up to a multiple of the tile; padded rows are sliced off below.
    n_tiles = pl.cdiv(n, tb)
    n_pad = n_tiles * tb
    if n_pad != n:
        x2d = jnp.pad(x2d, ((0, n_pad - n), (0, 0)))

    # Weights/biases: constant index_map -> fetched once, resident in VMEM.
    const = lambda i: (0, 0)
    in_specs = [
        pl.BlockSpec((tb, dim_in), lambda i: (i, 0)),           # x tile (pipelined)
        pl.BlockSpec(params["w1"].shape, const),
        pl.BlockSpec(params["b1"].shape, const),
        pl.BlockSpec(params["w2"].shape, const),
        pl.BlockSpec(params["b2"].shape, const),
        pl.BlockSpec(params["w3"].shape, const),
        pl.BlockSpec(params["b3"].shape, const),
        pl.BlockSpec(params["w4"].shape, const),
        pl.BlockSpec(params["b4"].shape, const),
    ]

    out_padded = pl.pallas_call(
        mlp_kernel,
        out_shape=jax.ShapeDtypeStruct((n_pad, out_pad), jnp.float32),
        grid=(n_tiles,),
        in_specs=in_specs,
        out_specs=pl.BlockSpec((tb, out_pad), lambda i: (i, 0)),
        compiler_params=pltpu.CompilerParams(
            dimension_semantics=("parallel",)),
    )(x2d,
      params["w1"], params["b1"],
      params["w2"], params["b2"],
      params["w3"], params["b3"],
      params["w4"], params["b4"])

    return out_padded[:n, :dim_out]


def init_params(key, dim_in, dim_out):
    """Mimics PyTorch nn.Linear default init (uniform +-1/sqrt(fan_in)).
    Weights stored transposed (in, out) in bf16; biases (1, out) in f32.
    Last layer is lane-padded to a multiple of 128 (zero weights, NEG_BIG bias)."""
    out_pad = max(128, ((dim_out + 127) // 128) * 128)
    dims = [(dim_in, 512), (512, 256), (256, 64), (64, dim_out)]
    params = {}
    for i, (fan_in, fan_out) in enumerate(dims, start=1):
        key, kw, kb = jax.random.split(key, 3)
        bound = 1.0 / (fan_in ** 0.5)
        w = jax.random.uniform(kw, (fan_in, fan_out), jnp.float32, -bound, bound)
        b = jax.random.uniform(kb, (1, fan_out), jnp.float32, -bound, bound)
        if i == 4 and fan_out != out_pad:
            w = jnp.pad(w, ((0, 0), (0, out_pad - fan_out)))
            b = jnp.pad(b, ((0, 0), (0, out_pad - fan_out)),
                        constant_values=NEG_BIG)
        params[f"w{i}"] = w.astype(jnp.bfloat16)
        params[f"b{i}"] = b  # keep biases f32 (f32 VPU path; v5e has no bf16 VPU)
    return params


if __name__ == "__main__":
    # Small shapes consistent with the module: NCHW input flattened to dim_in.
    N, C, H, W = 2, 4, 16, 16
    dim_in = C * H * W        # 1024
    dim_out = 10

    key = jax.random.PRNGKey(0)
    key, kx = jax.random.split(key)
    x = jax.random.normal(kx, (N, C, H, W), jnp.float32)
    params = init_params(key, dim_in, dim_out)

    out = jax.block_until_ready(mlp_forward(x, params, dim_out))

    # Sanity: shape matches, softmax rows sum to ~1 (approx reciprocal + bf16 matmuls).
    assert out.shape == (N, dim_out)
    assert jnp.allclose(jnp.sum(out, axis=1), 1.0, atol=2e-2)

    # Cross-check against a plain-JAX f32 reference (bf16 matmul -> loose tolerance).
    def ref(x_nchw, p):
        h = x_nchw.reshape(x_nchw.shape[0], -1).astype(jnp.float32)
        w1 = p["w1"].astype(jnp.float32)
        w2 = p["w2"].astype(jnp.float32)
        w3 = p["w3"].astype(jnp.float32)
        w4 = p["w4"].astype(jnp.float32)[:, :dim_out]
        h = jnp.maximum(h @ w1 + p["b1"], 0.0)
        h = jnp.maximum(h @ w2 + p["b2"], 0.0)
        h = jnp.maximum(h @ w3 + p["b3"], 0.0)
        logits = h @ w4 + p["b4"][:, :dim_out]
        return jax.nn.softmax(logits, axis=1)

    ref_out = ref(x, params)
    assert jnp.allclose(out, ref_out, atol=2e-2)
    print("KERNEL_OK")
</pallas_src>

<mosaic_0001>
module attributes {stable_mosaic.version = 11 : i64} {
  func.func @mlp_kernel(%arg0: i32, %arg1: memref<128x1024xf32, #tpu.memory_space<vmem>>, %arg2: memref<1024x512xbf16, #tpu.memory_space<vmem>>, %arg3: memref<1x512xf32, #tpu.memory_space<vmem>>, %arg4: memref<512x256xbf16, #tpu.memory_space<vmem>>, %arg5: memref<1x256xf32, #tpu.memory_space<vmem>>, %arg6: memref<256x64xbf16, #tpu.memory_space<vmem>>, %arg7: memref<1x64xf32, #tpu.memory_space<vmem>>, %arg8: memref<64x128xbf16, #tpu.memory_space<vmem>>, %arg9: memref<1x128xf32, #tpu.memory_space<vmem>>, %arg10: memref<128x128xf32, #tpu.memory_space<vmem>>) attributes {dimension_semantics = [#tpu.dimension_semantics<parallel>], iteration_bounds = array<i64: 1>, scalar_prefetch = 0 : i64, scratch_operands = 0 : i64, tpu.core_type = #tpu.core_type<tc>, window_params = [{transform_indices = @transform_0, window_bounds = array<i64: 128, 1024>}, {pipeline_mode = #tpu.pipeline_mode<synchronous>, transform_indices = @transform_1, window_bounds = array<i64: 1024, 512>}, {pipeline_mode = #tpu.pipeline_mode<synchronous>, transform_indices = @transform_2, window_bounds = array<i64: 1, 512>}, {pipeline_mode = #tpu.pipeline_mode<synchronous>, transform_indices = @transform_3, window_bounds = array<i64: 512, 256>}, {pipeline_mode = #tpu.pipeline_mode<synchronous>, transform_indices = @transform_4, window_bounds = array<i64: 1, 256>}, {pipeline_mode = #tpu.pipeline_mode<synchronous>, transform_indices = @transform_5, window_bounds = array<i64: 256, 64>}, {pipeline_mode = #tpu.pipeline_mode<synchronous>, transform_indices = @transform_6, window_bounds = array<i64: 1, 64>}, {pipeline_mode = #tpu.pipeline_mode<synchronous>, transform_indices = @transform_7, window_bounds = array<i64: 64, 128>}, {pipeline_mode = #tpu.pipeline_mode<synchronous>, transform_indices = @transform_8, window_bounds = array<i64: 1, 128>}, {transform_indices = @transform_9, window_bounds = array<i64: 128, 128>}]} {
    %c0 = arith.constant 0 : index
    %c0_0 = arith.constant 0 : index
    %0 = vector.load %arg1[%c0, %c0_0] : memref<128x1024xf32, #tpu.memory_space<vmem>>, vector<128x1024xf32>
    %1 = arith.truncf %0 : vector<128x1024xf32> to vector<128x1024xbf16>
    %c0_1 = arith.constant 0 : index
    %c0_2 = arith.constant 0 : index
    %2 = vector.load %arg2[%c0_1, %c0_2] : memref<1024x512xbf16, #tpu.memory_space<vmem>>, vector<1024x512xbf16>
    %cst = arith.constant dense<0.000000e+00> : vector<128x512xf32>
    %3 = tpu.matmul %1, %2, %cst {dimension_numbers = #tpu.dot_dimension_numbers<[1], [0], [0], [1], [0, 0, 1, 1], [], []>} : vector<128x1024xbf16>, vector<1024x512xbf16>, vector<128x512xf32> -> vector<128x512xf32>
    %c0_3 = arith.constant 0 : index
    %c0_4 = arith.constant 0 : index
    %4 = vector.load %arg3[%c0_3, %c0_4] : memref<1x512xf32, #tpu.memory_space<vmem>>, vector<1x512xf32>
    %5 = vector.broadcast %4 : vector<1x512xf32> to vector<128x512xf32>
    %6 = arith.addf %3, %5 : vector<128x512xf32>
    %cst_5 = arith.constant 0.000000e+00 : f32
    %7 = vector.broadcast %cst_5 : f32 to vector<128x512xf32>
    %8 = arith.maximumf %6, %7 : vector<128x512xf32>
    %9 = arith.truncf %8 : vector<128x512xf32> to vector<128x512xbf16>
    %c0_6 = arith.constant 0 : index
    %c0_7 = arith.constant 0 : index
    %10 = vector.load %arg4[%c0_6, %c0_7] : memref<512x256xbf16, #tpu.memory_space<vmem>>, vector<512x256xbf16>
    %cst_8 = arith.constant dense<0.000000e+00> : vector<128x256xf32>
    %11 = tpu.matmul %9, %10, %cst_8 {dimension_numbers = #tpu.dot_dimension_numbers<[1], [0], [0], [1], [0, 0, 1, 1], [], []>} : vector<128x512xbf16>, vector<512x256xbf16>, vector<128x256xf32> -> vector<128x256xf32>
    %c0_9 = arith.constant 0 : index
    %c0_10 = arith.constant 0 : index
    %12 = vector.load %arg5[%c0_9, %c0_10] : memref<1x256xf32, #tpu.memory_space<vmem>>, vector<1x256xf32>
    %13 = vector.broadcast %12 : vector<1x256xf32> to vector<128x256xf32>
    %14 = arith.addf %11, %13 : vector<128x256xf32>
    %cst_11 = arith.constant 0.000000e+00 : f32
    %15 = vector.broadcast %cst_11 : f32 to vector<128x256xf32>
    %16 = arith.maximumf %14, %15 : vector<128x256xf32>
    %17 = arith.truncf %16 : vector<128x256xf32> to vector<128x256xbf16>
    %c0_12 = arith.constant 0 : index
    %c0_13 = arith.constant 0 : index
    %18 = vector.load %arg6[%c0_12, %c0_13] : memref<256x64xbf16, #tpu.memory_space<vmem>>, vector<256x64xbf16>
    %cst_14 = arith.constant dense<0.000000e+00> : vector<128x64xf32>
    %19 = tpu.matmul %17, %18, %cst_14 {dimension_numbers = #tpu.dot_dimension_numbers<[1], [0], [0], [1], [0, 0, 1, 1], [], []>} : vector<128x256xbf16>, vector<256x64xbf16>, vector<128x64xf32> -> vector<128x64xf32>
    %c0_15 = arith.constant 0 : index
    %c0_16 = arith.constant 0 : index
    %20 = vector.load %arg7[%c0_15, %c0_16] : memref<1x64xf32, #tpu.memory_space<vmem>>, vector<1x64xf32>
    %21 = vector.broadcast %20 : vector<1x64xf32> to vector<128x64xf32>
    %22 = arith.addf %19, %21 : vector<128x64xf32>
    %cst_17 = arith.constant 0.000000e+00 : f32
    %23 = vector.broadcast %cst_17 : f32 to vector<128x64xf32>
    %24 = arith.maximumf %22, %23 : vector<128x64xf32>
    %25 = arith.truncf %24 : vector<128x64xf32> to vector<128x64xbf16>
    %c0_18 = arith.constant 0 : index
    %c0_19 = arith.constant 0 : index
    %26 = vector.load %arg8[%c0_18, %c0_19] : memref<64x128xbf16, #tpu.memory_space<vmem>>, vector<64x128xbf16>
    %cst_20 = arith.constant dense<0.000000e+00> : vector<128x128xf32>
    %27 = tpu.matmul %25, %26, %cst_20 {dimension_numbers = #tpu.dot_dimension_numbers<[1], [0], [0], [1], [0, 0, 1, 1], [], []>} : vector<128x64xbf16>, vector<64x128xbf16>, vector<128x128xf32> -> vector<128x128xf32>
    %c0_21 = arith.constant 0 : index
    %c0_22 = arith.constant 0 : index
    %28 = vector.load %arg9[%c0_21, %c0_22] : memref<1x128xf32, #tpu.memory_space<vmem>>, vector<1x128xf32>
    %29 = vector.broadcast %28 : vector<1x128xf32> to vector<128x128xf32>
    %30 = arith.addf %27, %29 : vector<128x128xf32>
    %cst_23 = arith.constant dense<0xFF800000> : vector<128xf32>
    %31 = vector.multi_reduction <maximumf>, %30, %cst_23 [1] : vector<128x128xf32> to vector<128xf32>
    %32 = vector.shape_cast %31 : vector<128xf32> to vector<128x1xf32>
    %33 = vector.broadcast %32 : vector<128x1xf32> to vector<128x128xf32>
    %34 = arith.subf %30, %33 : vector<128x128xf32>
    %35 = math.exp %34 : vector<128x128xf32>
    %cst_24 = arith.constant dense<0.000000e+00> : vector<128xf32>
    %36 = vector.multi_reduction <add>, %35, %cst_24 [1] : vector<128x128xf32> to vector<128xf32>
    %37 = vector.shape_cast %36 : vector<128xf32> to vector<128x1xf32>
    %38 = tpu.reciprocal %37 {approx = true} : vector<128x1xf32> -> vector<128x1xf32>
    %39 = vector.broadcast %38 : vector<128x1xf32> to vector<128x128xf32>
    %40 = arith.mulf %35, %39 : vector<128x128xf32>
    %c0_25 = arith.constant 0 : index
    %c0_26 = arith.constant 0 : index
    %41 = vector.load %arg10[%c0_25, %c0_26] : memref<128x128xf32, #tpu.memory_space<vmem>>, vector<128x128xf32>
    tpu.vector_store %arg10[%c0_25, %c0_26], %40 {strides = array<i32>} : memref<128x128xf32, #tpu.memory_space<vmem>>, vector<128x128xf32>,
    return
  }
  func.func @transform_0(%arg0: i32) -> (i32, i32) {
    %c0_i32 = arith.constant 0 : i32
    %c0_i32_0 = arith.constant 0 : i32
    return %arg0, %c0_i32 : i32, i32
  }
  func.func @transform_1(%arg0: i32) -> (i32, i32) {
    %c0_i32 = arith.constant 0 : i32
    %c0_i32_0 = arith.constant 0 : i32
    %c0_i32_1 = arith.constant 0 : i32
    return %c0_i32, %c0_i32_0 : i32, i32
  }
  func.func @transform_2(%arg0: i32) -> (i32, i32) {
    %c0_i32 = arith.constant 0 : i32
    %c0_i32_0 = arith.constant 0 : i32
    %c0_i32_1 = arith.constant 0 : i32
    return %c0_i32, %c0_i32_0 : i32, i32
  }
  func.func @transform_3(%arg0: i32) -> (i32, i32) {
    %c0_i32 = arith.constant 0 : i32
    %c0_i32_0 = arith.constant 0 : i32
    %c0_i32_1 = arith.constant 0 : i32
    return %c0_i32, %c0_i32_0 : i32, i32
  }
  func.func @transform_4(%arg0: i32) -> (i32, i32) {
    %c0_i32 = arith.constant 0 : i32
    %c0_i32_0 = arith.constant 0 : i32
    %c0_i32_1 = arith.constant 0 : i32
    return %c0_i32, %c0_i32_0 : i32, i32
  }
  func.func @transform_5(%arg0: i32) -> (i32, i32) {
    %c0_i32 = arith.constant 0 : i32
    %c0_i32_0 = arith.constant 0 : i32
    %c0_i32_1 = arith.constant 0 : i32
    return %c0_i32, %c0_i32_0 : i32, i32
  }
  func.func @transform_6(%arg0: i32) -> (i32, i32) {
    %c0_i32 = arith.constant 0 : i32
    %c0_i32_0 = arith.constant 0 : i32
    %c0_i32_1 = arith.constant 0 : i32
    return %c0_i32, %c0_i32_0 : i32, i32
  }
  func.func @transform_7(%arg0: i32) -> (i32, i32) {
    %c0_i32 = arith.constant 0 : i32
    %c0_i32_0 = arith.constant 0 : i32
    %c0_i32_1 = arith.constant 0 : i32
    return %c0_i32, %c0_i32_0 : i32, i32
  }
  func.func @transform_8(%arg0: i32) -> (i32, i32) {
    %c0_i32 = arith.constant 0 : i32
    %c0_i32_0 = arith.constant 0 : i32
    %c0_i32_1 = arith.constant 0 : i32
    return %c0_i32, %c0_i32_0 : i32, i32
  }
  func.func @transform_9(%arg0: i32) -> (i32, i32) {
    %c0_i32 = arith.constant 0 : i32
    %c0_i32_0 = arith.constant 0 : i32
    return %arg0, %c0_i32 : i32, i32
  }
}

</mosaic_0001>

<llo_original>
// kernel: tpu_custom_call.1
$region0: #{tpu_custom_call.1}
  #allocation0 [shape = 'u32[]', space=smem, size = 0x4, offset = 0x4, fixed_abs, tag = 'smem constant byte address 0x4 - core index']
  #allocation1 [shape = 'u32[144,128]{1,0:T(1,128)}', space=vmem, size = 0x12000, scoped, tag = 'internal scratch']
  %s0 = inlined_call_operand.hbm [shape: f32[128,1024], index: 0, kind: input, shape index: {}]
  %s1 = inlined_call_operand.hbm [shape: bf16[1024,512], index: 1, kind: input, shape index: {}]
  %s2 = inlined_call_operand.vmem [shape: f32[1,512], index: 2, kind: input, shape index: {}]
  %s3 = inlined_call_operand.hbm [shape: bf16[512,256], index: 3, kind: input, shape index: {}]
  %s4 = inlined_call_operand.vmem [shape: f32[1,256], index: 4, kind: input, shape index: {}]
  %s5 = inlined_call_operand.vmem [shape: bf16[256,64], index: 5, kind: input, shape index: {}]
  %s6 = inlined_call_operand.vmem [shape: f32[1,64], index: 6, kind: input, shape index: {}]
  %s7 = inlined_call_operand.vmem [shape: bf16[64,128], index: 7, kind: input, shape index: {}]
  %s8 = inlined_call_operand.vmem [shape: f32[1,128], index: 8, kind: input, shape index: {}]
  %s9 = inlined_call_operand.hbm [shape: f32[128,128], index: 9, kind: output, shape index: {}]
  %s10 = sld [smem:[#allocation0]]
  $region58: #{tpu_custom_call.1} parent=0
    _
  %s12 = ssub.s32 1, %s10
  %s13 = scalar_select 0, %s12, %s10
  $region1: #{tpu_custom_call.1} parent=0
    #allocation2 [shape = 'u8[524288]{0}', space=vmem, size = 0x80000, scoped, tag = 'input window, operand 0, single buffered']
    #allocation3 [shape = 's32[1]{0}', space=sflag, size = 0x4, scoped, tag = 'scoped memory for tpu_custom_call.1']
    #allocation4 [shape = 's32[1]{0}', space=sflag, size = 0x4, scoped, tag = 'scoped memory for tpu_custom_call.1']
    #allocation5 [shape = 'u8[1048576]{0}', space=vmem, size = 0x100000, scoped, tag = 'input window, operand 1, single buffered']
    #allocation6 [shape = 's32[1]{0}', space=sflag, size = 0x4, scoped, tag = 'scoped memory for tpu_custom_call.1']
    #allocation7 [shape = 'u8[262144]{0}', space=vmem, size = 0x40000, scoped, tag = 'input window, operand 3, single buffered']
    #allocation8 [shape = 'u8[65536]{0}', space=vmem, size = 0x10000, scoped, tag = 'output window, operand 0, single buffered']
    %14 = vsyncpa [#allocation3], 0
    %15 = vsyncpa [#allocation6], 0
    %16 = vsyncpa [#allocation4], 0
    // Predicated region
    $region2: #{tpu_custom_call.1} parent=1 // pred_check
      _
    $region3: #{tpu_custom_call.1} parent=1 // pred_check_branch
      %18 = sbr.rel (0) target = $region5
    $region4: #{tpu_custom_call.1} parent=1 // pred_region
      %s20 = ssub.s32 16384, 16384
      %21 = vsyncadd [#allocation3], %s20
      %s22 = sshll.u32 [#allocation2], 4
      %s23 = int_to_ptr.vmem [resolvable:$true] %s22
      %28 = dma.hbm_to_vmem [thread:$0]  %s0, 16384, %s23, [#allocation3], 1024, 1024, 64
    $region5: #{tpu_custom_call.1} parent=1 // pred_fallthru
      _
    // Predicated region
    $region6: #{tpu_custom_call.1} parent=1 // pred_check
      _
    $region7: #{tpu_custom_call.1} parent=1 // pred_check_branch
      %30 = sbr.rel (0) target = $region9
    $region8: #{tpu_custom_call.1} parent=1 // pred_region
      %s32 = ssub.s32 32768, 32768
      %33 = vsyncadd [#allocation6], %s32
      %s34 = sshll.u32 [#allocation5], 4
      %s35 = int_to_ptr.vmem [resolvable:$true] %s34
      %40 = dma.hbm_to_vmem [thread:$0]  %s1, 32768, %s35, [#allocation6], 256, 256, 16
    $region9: #{tpu_custom_call.1} parent=1 // pred_fallthru
      _
    // Predicated region
    $region10: #{tpu_custom_call.1} parent=1 // pred_check
      _
    $region11: #{tpu_custom_call.1} parent=1 // pred_check_branch
      %42 = sbr.rel (0) target = $region13
    $region12: #{tpu_custom_call.1} parent=1 // pred_region
      _
    $region13: #{tpu_custom_call.1} parent=1 // pred_fallthru
      _
    // Predicated region
    $region14: #{tpu_custom_call.1} parent=1 // pred_check
      _
    $region15: #{tpu_custom_call.1} parent=1 // pred_check_branch
      %44 = sbr.rel (0) target = $region17
    $region16: #{tpu_custom_call.1} parent=1 // pred_region
      %s46 = ssub.s32 8192, 8192
      %47 = vsyncadd [#allocation6], %s46
      %s48 = sshll.u32 [#allocation7], 4
      %s49 = int_to_ptr.vmem [resolvable:$true] %s48
      %54 = dma.hbm_to_vmem [thread:$0]  %s3, 8192, %s49, [#allocation6], 128, 128, 8
    $region17: #{tpu_custom_call.1} parent=1 // pred_fallthru
      _
    // Predicated region
    $region18: #{tpu_custom_call.1} parent=1 // pred_check
      _
    $region19: #{tpu_custom_call.1} parent=1 // pred_check_branch
      %56 = sbr.rel (0) target = $region21
    $region20: #{tpu_custom_call.1} parent=1 // pred_region
      _
    $region21: #{tpu_custom_call.1} parent=1 // pred_fallthru
      _
    // Predicated region
    $region22: #{tpu_custom_call.1} parent=1 // pred_check
      _
    $region23: #{tpu_custom_call.1} parent=1 // pred_check_branch
      %58 = sbr.rel (0) target = $region25
    $region24: #{tpu_custom_call.1} parent=1 // pred_region
      _
    $region25: #{tpu_custom_call.1} parent=1 // pred_fallthru
      _
    // Predicated region
    $region26: #{tpu_custom_call.1} parent=1 // pred_check
      _
    $region27: #{tpu_custom_call.1} parent=1 // pred_check_branch
      %60 = sbr.rel (0) target = $region29
    $region28: #{tpu_custom_call.1} parent=1 // pred_region
      _
    $region29: #{tpu_custom_call.1} parent=1 // pred_fallthru
      _
    // Predicated region
    $region30: #{tpu_custom_call.1} parent=1 // pred_check
      _
    $region31: #{tpu_custom_call.1} parent=1 // pred_check_branch
      %62 = sbr.rel (0) target = $region33
    $region32: #{tpu_custom_call.1} parent=1 // pred_region
      _
    $region33: #{tpu_custom_call.1} parent=1 // pred_fallthru
      _
    // Predicated region
    $region34: #{tpu_custom_call.1} parent=1 // pred_check
      _
    $region35: #{tpu_custom_call.1} parent=1 // pred_check_branch
      %64 = sbr.rel (0) target = $region37
    $region36: #{tpu_custom_call.1} parent=1 // pred_region
      _
    $region37: #{tpu_custom_call.1} parent=1 // pred_fallthru
      _
    // Predicated region
    $region38: #{tpu_custom_call.1} parent=1 // pred_check
      _
    $region39: #{tpu_custom_call.1} parent=1 // pred_check_branch
      %66 = sbr.rel (0) target = $region41
    $region40: #{tpu_custom_call.1} parent=1 // pred_region
      %67 = dma.done [#allocation3], 16384
    $region41: #{tpu_custom_call.1} parent=1 // pred_fallthru
      _
    // Predicated region
    $region42: #{tpu_custom_call.1} parent=1 // pred_check
      _
    $region43: #{tpu_custom_call.1} parent=1 // pred_check_branch
      %69 = sbr.rel (0) target = $region45
    $region44: #{tpu_custom_call.1} parent=1 // pred_region
      %70 = dma.done [#allocation6], 32768
    $region45: #{tpu_custom_call.1} parent=1 // pred_fallthru
      _
    // Predicated region
    $region46: #{tpu_custom_call.1} parent=1 // pred_check
      _
    $region47: #{tpu_custom_call.1} parent=1 // pred_check_branch
      %72 = sbr.rel (0) target = $region49
    $region48: #{tpu_custom_call.1} parent=1 // pred_region
      %73 = dma.done [#allocation6], 8192
    $region49: #{tpu_custom_call.1} parent=1 // pred_fallthru
      _
    %v75 = vld [vmem:[#allocation2] sm:$0xff]
    %v76 = vld [vmem:[#allocation2 + $0x8] sm:$0xff]
    %v77 = vld [vmem:[#allocation2 + $0x10] sm:$0xff]
    %v78 = vld [vmem:[#allocation2 + $0x18] sm:$0xff]
    %v79 = vld [vmem:[#allocation2 + $0x20] sm:$0xff]
    %v80 = vld [vmem:[#allocation2 + $0x28] sm:$0xff]
    %v81 = vld [vmem:[#allocation2 + $0x30] sm:$0xff]
    %v82 = vld [vmem:[#allocation2 + $0x38] sm:$0xff]
    %v83 = vld [vmem:[#allocation2 + $0x40] sm:$0xff]
    %v84 = vld [vmem:[#allocation2 + $0x48] sm:$0xff]
    %v85 = vld [vmem:[#allocation2 + $0x50] sm:$0xff]
    %v86 = vld [vmem:[#allocation2 + $0x58] sm:$0xff]
    %v87 = vld [vmem:[#allocation2 + $0x60] sm:$0xff]
    %v88 = vld [vmem:[#allocation2 + $0x68] sm:$0xff]
    %v89 = vld [vmem:[#allocation2 + $0x70] sm:$0xff]
    %v90 = vld [vmem:[#allocation2 + $0x78] sm:$0xff]
    %v91 = vld [vmem:[#allocation2 + $0x80] sm:$0xff]
    %v92 = vld [vmem:[#allocation2 + $0x88] sm:$0xff]
    %v93 = vld [vmem:[#allocation2 + $0x90] sm:$0xff]
    %v94 = vld [vmem:[#allocation2 + $0x98] sm:$0xff]
    %v95 = vld [vmem:[#allocation2 + $0xa0] sm:$0xff]
    %v96 = vld [vmem:[#allocation2 + $0xa8] sm:$0xff]
    %v97 = vld [vmem:[#allocation2 + $0xb0] sm:$0xff]
    %v98 = vld [vmem:[#allocation2 + $0xb8] sm:$0xff]
    %v99 = vld [vmem:[#allocation2 + $0xc0] sm:$0xff]
    %v100 = vld [vmem:[#allocation2 + $0xc8] sm:$0xff]
    %v101 = vld [vmem:[#allocation2 + $0xd0] sm:$0xff]
    %v102 = vld [vmem:[#allocation2 + $0xd8] sm:$0xff]
    %v103 = vld [vmem:[#allocation2 + $0xe0] sm:$0xff]
    %v104 = vld [vmem:[#allocation2 + $0xe8] sm:$0xff]
    %v105 = vld [vmem:[#allocation2 + $0xf0] sm:$0xff]
    %v106 = vld [vmem:[#allocation2 + $0xf8] sm:$0xff]
    %v107 = vld [vmem:[#allocation2 + $0x100] sm:$0xff]
    %v108 = vld [vmem:[#allocation2 + $0x108] sm:$0xff]
    %v109 = vld [vmem:[#allocation2 + $0x110] sm:$0xff]
    %v110 = vld [vmem:[#allocation2 + $0x118] sm:$0xff]
    %v111 = vld [vmem:[#allocation2 + $0x120] sm:$0xff]
    %v112 = vld [vmem:[#allocation2 + $0x128] sm:$0xff]
    %v113 = vld [vmem:[#allocation2 + $0x130] sm:$0xff]
    %v114 = vld [vmem:[#allocation2 + $0x138] sm:$0xff]
    %v115 = vld [vmem:[#allocation2 + $0x140] sm:$0xff]
    %v116 = vld [vmem:[#allocation2 + $0x148] sm:$0xff]
    %v117 = vld [vmem:[#allocation2 + $0x150] sm:$0xff]
    %v118 = vld [vmem:[#allocation2 + $0x158] sm:$0xff]
    %v119 = vld [vmem:[#allocation2 + $0x160] sm:$0xff]
    %v120 = vld [vmem:[#allocation2 + $0x168] sm:$0xff]
    %v121 = vld [vmem:[#allocation2 + $0x170] sm:$0xff]
    %v122 = vld [vmem:[#allocation2 + $0x178] sm:$0xff]
    %v123 = vld [vmem:[#allocation2 + $0x180] sm:$0xff]
    %v124 = vld [vmem:[#allocation2 + $0x188] sm:$0xff]
    %v125 = vld [vmem:[#allocation2 + $0x190] sm:$0xff]
    %v126 = vld [vmem:[#allocation2 + $0x198] sm:$0xff]
    %v127 = vld [vmem:[#allocation2 + $0x1a0] sm:$0xff]
    %v128 = vld [vmem:[#allocation2 + $0x1a8] sm:$0xff]
    %v129 = vld [vmem:[#allocation2 + $0x1b0] sm:$0xff]
    %v130 = vld [vmem:[#allocation2 + $0x1b8] sm:$0xff]
    %v131 = vld [vmem:[#allocation2 + $0x1c0] sm:$0xff]
    %v132 = vld [vmem:[#allocation2 + $0x1c8] sm:$0xff]
    %v133 = vld [vmem:[#allocation2 + $0x1d0] sm:$0xff]
    %v134 = vld [vmem:[#allocation2 + $0x1d8] sm:$0xff]
    %v135 = vld [vmem:[#allocation2 + $0x1e0] sm:$0xff]
    %v136 = vld [vmem:[#allocation2 + $0x1e8] sm:$0xff]
    %v137 = vld [vmem:[#allocation2 + $0x1f0] sm:$0xff]
    %v138 = vld [vmem:[#allocation2 + $0x1f8] sm:$0xff]
    %v139 = vld [vmem:[#allocation2 + $0x200] sm:$0xff]
    %v140 = vld [vmem:[#allocation2 + $0x208] sm:$0xff]
    %v141 = vld [vmem:[#allocation2 + $0x210] sm:$0xff]
    %v142 = vld [vmem:[#allocation2 + $0x218] sm:$0xff]
    %v143 = vld [vmem:[#allocation2 + $0x220] sm:$0xff]
    %v144 = vld [vmem:[#allocation2 + $0x228] sm:$0xff]
    %v145 = vld [vmem:[#allocation2 + $0x230] sm:$0xff]
    %v146 = vld [vmem:[#allocation2 + $0x238] sm:$0xff]
    %v147 = vld [vmem:[#allocation2 + $0x240] sm:$0xff]
    %v148 = vld [vmem:[#allocation2 + $0x248] sm:$0xff]
    %v149 = vld [vmem:[#allocation2 + $0x250] sm:$0xff]
    %v150 = vld [vmem:[#allocation2 + $0x258] sm:$0xff]
    %v151 = vld [vmem:[#allocation2 + $0x260] sm:$0xff]
    %v152 = vld [vmem:[#allocation2 + $0x268] sm:$0xff]
    %v153 = vld [vmem:[#allocation2 + $0x270] sm:$0xff]
    %v154 = vld [vmem:[#allocation2 + $0x278] sm:$0xff]
    %v155 = vld [vmem:[#allocation2 + $0x280] sm:$0xff]
    %v156 = vld [vmem:[#allocation2 + $0x288] sm:$0xff]
    %v157 = vld [vmem:[#allocation2 + $0x290] sm:$0xff]
    %v158 = vld [vmem:[#allocation2 + $0x298] sm:$0xff]
    %v159 = vld [vmem:[#allocation2 + $0x2a0] sm:$0xff]
    %v160 = vld [vmem:[#allocation2 + $0x2a8] sm:$0xff]
    %v161 = vld [vmem:[#allocation2 + $0x2b0] sm:$0xff]
    %v162 = vld [vmem:[#allocation2 + $0x2b8] sm:$0xff]
    %v163 = vld [vmem:[#allocation2 + $0x2c0] sm:$0xff]
    %v164 = vld [vmem:[#allocation2 + $0x2c8] sm:$0xff]
    %v165 = vld [vmem:[#allocation2 + $0x2d0] sm:$0xff]
    %v166 = vld [vmem:[#allocation2 + $0x2d8] sm:$0xff]
    %v167 = vld [vmem:[#allocation2 + $0x2e0] sm:$0xff]
    %v168 = vld [vmem:[#allocation2 + $0x2e8] sm:$0xff]
    %v169 = vld [vmem:[#allocation2 + $0x2f0] sm:$0xff]
    %v170 = vld [vmem:[#allocation2 + $0x2f8] sm:$0xff]
    %v171 = vld [vmem:[#allocation2 + $0x300] sm:$0xff]
    %v172 = vld [vmem:[#allocation2 + $0x308] sm:$0xff]
    %v173 = vld [vmem:[#allocation2 + $0x310] sm:$0xff]
    %v174 = vld [vmem:[#allocation2 + $0x318] sm:$0xff]
    %v175 = vld [vmem:[#allocation2 + $0x320] sm:$0xff]
    %v176 = vld [vmem:[#allocation2 + $0x328] sm:$0xff]
    %v177 = vld [vmem:[#allocation2 + $0x330] sm:$0xff]
    %v178 = vld [vmem:[#allocation2 + $0x338] sm:$0xff]
    %v179 = vld [vmem:[#allocation2 + $0x340] sm:$0xff]
    %v180 = vld [vmem:[#allocation2 + $0x348] sm:$0xff]
    %v181 = vld [vmem:[#allocation2 + $0x350] sm:$0xff]
    %v182 = vld [vmem:[#allocation2 + $0x358] sm:$0xff]
    %v183 = vld [vmem:[#allocation2 + $0x360] sm:$0xff]
    %v184 = vld [vmem:[#allocation2 + $0x368] sm:$0xff]
    %v185 = vld [vmem:[#allocation2 + $0x370] sm:$0xff]
    %v186 = vld [vmem:[#allocation2 + $0x378] sm:$0xff]
    %v187 = vld [vmem:[#allocation2 + $0x380] sm:$0xff]
    %v188 = vld [vmem:[#allocation2 + $0x388] sm:$0xff]
    %v189 = vld [vmem:[#allocation2 + $0x390] sm:$0xff]
    %v190 = vld [vmem:[#allocation2 + $0x398] sm:$0xff]
    %v191 = vld [vmem:[#allocation2 + $0x3a0] sm:$0xff]
    %v192 = vld [vmem:[#allocation2 + $0x3a8] sm:$0xff]
    %v193 = vld [vmem:[#allocation2 + $0x3b0] sm:$0xff]
    %v194 = vld [vmem:[#allocation2 + $0x3b8] sm:$0xff]
    %v195 = vld [vmem:[#allocation2 + $0x3c0] sm:$0xff]
    %v196 = vld [vmem:[#allocation2 + $0x3c8] sm:$0xff]
    %v197 = vld [vmem:[#allocation2 + $0x3d0] sm:$0xff]
    %v198 = vld [vmem:[#allocation2 + $0x3d8] sm:$0xff]
    %v199 = vld [vmem:[#allocation2 + $0x3e0] sm:$0xff]
    %v200 = vld [vmem:[#allocation2 + $0x3e8] sm:$0xff]
    %v201 = vld [vmem:[#allocation2 + $0x3f0] sm:$0xff]
    %v202 = vld [vmem:[#allocation2 + $0x3f8] sm:$0xff]
    %v203 = vpack.c.bf16 %v83, %v75
    %v204 = vpack.c.bf16 %v84, %v76
    %v205 = vpack.c.bf16 %v85, %v77
    %v206 = vpack.c.bf16 %v86, %v78
    %v207 = vpack.c.bf16 %v87, %v79
    %v208 = vpack.c.bf16 %v88, %v80
    %v209 = vpack.c.bf16 %v89, %v81
    %v210 = vpack.c.bf16 %v90, %v82
    %v211 = vpack.c.bf16 %v99, %v91
    %v212 = vpack.c.bf16 %v100, %v92
    %v213 = vpack.c.bf16 %v101, %v93
    %v214 = vpack.c.bf16 %v102, %v94
    %v215 = vpack.c.bf16 %v103, %v95
    %v216 = vpack.c.bf16 %v104, %v96
    %v217 = vpack.c.bf16 %v105, %v97
    %v218 = vpack.c.bf16 %v106, %v98
    %v219 = vpack.c.bf16 %v115, %v107
    %v220 = vpack.c.bf16 %v116, %v108
    %v221 = vpack.c.bf16 %v117, %v109
    %v222 = vpack.c.bf16 %v118, %v110
    %v223 = vpack.c.bf16 %v119, %v111
    %v224 = vpack.c.bf16 %v120, %v112
    %v225 = vpack.c.bf16 %v121, %v113
    %v226 = vpack.c.bf16 %v122, %v114
    %v227 = vpack.c.bf16 %v131, %v123
    %v228 = vpack.c.bf16 %v132, %v124
    %v229 = vpack.c.bf16 %v133, %v125
    %v230 = vpack.c.bf16 %v134, %v126
    %v231 = vpack.c.bf16 %v135, %v127
    %v232 = vpack.c.bf16 %v136, %v128
    %v233 = vpack.c.bf16 %v137, %v129
    %v234 = vpack.c.bf16 %v138, %v130
    %v235 = vpack.c.bf16 %v147, %v139
    %v236 = vpack.c.bf16 %v148, %v140
    %v237 = vpack.c.bf16 %v149, %v141
    %v238 = vpack.c.bf16 %v150, %v142
    %v239 = vpack.c.bf16 %v151, %v143
    %v240 = vpack.c.bf16 %v152, %v144
    %v241 = vpack.c.bf16 %v153, %v145
    %v242 = vpack.c.bf16 %v154, %v146
    %v243 = vpack.c.bf16 %v163, %v155
    %v244 = vpack.c.bf16 %v164, %v156
    %v245 = vpack.c.bf16 %v165, %v157
    %v246 = vpack.c.bf16 %v166, %v158
    %v247 = vpack.c.bf16 %v167, %v159
    %v248 = vpack.c.bf16 %v168, %v160
    %v249 = vpack.c.bf16 %v169, %v161
    %v250 = vpack.c.bf16 %v170, %v162
    %v251 = vpack.c.bf16 %v179, %v171
    %v252 = vpack.c.bf16 %v180, %v172
    %v253 = vpack.c.bf16 %v181, %v173
    %v254 = vpack.c.bf16 %v182, %v174
    %v255 = vpack.c.bf16 %v183, %v175
    %v256 = vpack.c.bf16 %v184, %v176
    %v257 = vpack.c.bf16 %v185, %v177
    %v258 = vpack.c.bf16 %v186, %v178
    %v259 = vpack.c.bf16 %v195, %v187
    %v260 = vpack.c.bf16 %v196, %v188
    %v261 = vpack.c.bf16 %v197, %v189
    %v262 = vpack.c.bf16 %v198, %v190
    %v263 = vpack.c.bf16 %v199, %v191
    %v264 = vpack.c.bf16 %v200, %v192
    %v265 = vpack.c.bf16 %v201, %v193
    %v266 = vpack.c.bf16 %v202, %v194
    %v267 = vld [vmem:[#allocation5] sm:$0xff]
    %v268 = vld [vmem:[#allocation5 + $0x8] sm:$0xff]
    %v269 = vld [vmem:[#allocation5 + $0x10] sm:$0xff]
    %v270 = vld [vmem:[#allocation5 + $0x18] sm:$0xff]
    %v271 = vld [vmem:[#allocation5 + $0x20] sm:$0xff]
    %v272 = vld [vmem:[#allocation5 + $0x28] sm:$0xff]
    %v273 = vld [vmem:[#allocation5 + $0x30] sm:$0xff]
    %v274 = vld [vmem:[#allocation5 + $0x38] sm:$0xff]
    %v275 = vld [vmem:[#allocation5 + $0x40] sm:$0xff]
    %v276 = vld [vmem:[#allocation5 + $0x48] sm:$0xff]
    %v277 = vld [vmem:[#allocation5 + $0x50] sm:$0xff]
    %v278 = vld [vmem:[#allocation5 + $0x58] sm:$0xff]
    %v279 = vld [vmem:[#allocation5 + $0x60] sm:$0xff]
    %v280 = vld [vmem:[#allocation5 + $0x68] sm:$0xff]
    %v281 = vld [vmem:[#allocation5 + $0x70] sm:$0xff]
    %v282 = vld [vmem:[#allocation5 + $0x78] sm:$0xff]
    %v283 = vld [vmem:[#allocation5 + $0x80] sm:$0xff]
    %v284 = vld [vmem:[#allocation5 + $0x88] sm:$0xff]
    %v285 = vld [vmem:[#allocation5 + $0x90] sm:$0xff]
    %v286 = vld [vmem:[#allocation5 + $0x98] sm:$0xff]
    %v287 = vld [vmem:[#allocation5 + $0xa0] sm:$0xff]
    %v288 = vld [vmem:[#allocation5 + $0xa8] sm:$0xff]
    %v289 = vld [vmem:[#allocation5 + $0xb0] sm:$0xff]
    %v290 = vld [vmem:[#allocation5 + $0xb8] sm:$0xff]
    %v291 = vld [vmem:[#allocation5 + $0xc0] sm:$0xff]
    %v292 = vld [vmem:[#allocation5 + $0xc8] sm:$0xff]
    %v293 = vld [vmem:[#allocation5 + $0xd0] sm:$0xff]
    %v294 = vld [vmem:[#allocation5 + $0xd8] sm:$0xff]
    %v295 = vld [vmem:[#allocation5 + $0xe0] sm:$0xff]
    %v296 = vld [vmem:[#allocation5 + $0xe8] sm:$0xff]
    %v297 = vld [vmem:[#allocation5 + $0xf0] sm:$0xff]
    %v298 = vld [vmem:[#allocation5 + $0xf8] sm:$0xff]
    %v299 = vld [vmem:[#allocation5 + $0x100] sm:$0xff]
    %v300 = vld [vmem:[#allocation5 + $0x108] sm:$0xff]
    %v301 = vld [vmem:[#allocation5 + $0x110] sm:$0xff]
    %v302 = vld [vmem:[#allocation5 + $0x118] sm:$0xff]
    %v303 = vld [vmem:[#allocation5 + $0x120] sm:$0xff]
    %v304 = vld [vmem:[#allocation5 + $0x128] sm:$0xff]
    %v305 = vld [vmem:[#allocation5 + $0x130] sm:$0xff]
    %v306 = vld [vmem:[#allocation5 + $0x138] sm:$0xff]
    %v307 = vld [vmem:[#allocation5 + $0x140] sm:$0xff]
    %v308 = vld [vmem:[#allocation5 + $0x148] sm:$0xff]
    %v309 = vld [vmem:[#allocation5 + $0x150] sm:$0xff]
    %v310 = vld [vmem:[#allocation5 + $0x158] sm:$0xff]
    %v311 = vld [vmem:[#allocation5 + $0x160] sm:$0xff]
    %v312 = vld [vmem:[#allocation5 + $0x168] sm:$0xff]
    %v313 = vld [vmem:[#allocation5 + $0x170] sm:$0xff]
    %v314 = vld [vmem:[#allocation5 + $0x178] sm:$0xff]
    %v315 = vld [vmem:[#allocation5 + $0x180] sm:$0xff]
    %v316 = vld [vmem:[#allocation5 + $0x188] sm:$0xff]
    %v317 = vld [vmem:[#allocation5 + $0x190] sm:$0xff]
    %v318 = vld [vmem:[#allocation5 + $0x198] sm:$0xff]
    %v319 = vld [vmem:[#allocation5 + $0x1a0] sm:$0xff]
    %v320 = vld [vmem:[#allocation5 + $0x1a8] sm:$0xff]
    %v321 = vld [vmem:[#allocation5 + $0x1b0] sm:$0xff]
    %v322 = vld [vmem:[#allocation5 + $0x1b8] sm:$0xff]
    %v323 = vld [vmem:[#allocation5 + $0x1c0] sm:$0xff]
    %v324 = vld [vmem:[#allocation5 + $0x1c8] sm:$0xff]
    %v325 = vld [vmem:[#allocation5 + $0x1d0] sm:$0xff]
    %v326 = vld [vmem:[#allocation5 + $0x1d8] sm:$0xff]
    %v327 = vld [vmem:[#allocation5 + $0x1e0] sm:$0xff]
    %v328 = vld [vmem:[#allocation5 + $0x1e8] sm:$0xff]
    %v329 = vld [vmem:[#allocation5 + $0x1f0] sm:$0xff]
    %v330 = vld [vmem:[#allocation5 + $0x1f8] sm:$0xff]
    %v331 = vld [vmem:[#allocation5 + $0x200] sm:$0xff]
    %v332 = vld [vmem:[#allocation5 + $0x208] sm:$0xff]
    %v333 = vld [vmem:[#allocation5 + $0x210] sm:$0xff]
    %v334 = vld [vmem:[#allocation5 + $0x218] sm:$0xff]
    %v335 = vld [vmem:[#allocation5 + $0x220] sm:$0xff]
    %v336 = vld [vmem:[#allocation5 + $0x228] sm:$0xff]
    %v337 = vld [vmem:[#allocation5 + $0x230] sm:$0xff]
    %v338 = vld [vmem:[#allocation5 + $0x238] sm:$0xff]
    %v339 = vld [vmem:[#allocation5 + $0x240] sm:$0xff]
    %v340 = vld [vmem:[#allocation5 + $0x248] sm:$0xff]
    %v341 = vld [vmem:[#allocation5 + $0x250] sm:$0xff]
    %v342 = vld [vmem:[#allocation5 + $0x258] sm:$0xff]
    %v343 = vld [vmem:[#allocation5 + $0x260] sm:$0xff]
    %v344 = vld [vmem:[#allocation5 + $0x268] sm:$0xff]
    %v345 = vld [vmem:[#allocation5 + $0x270] sm:$0xff]
    %v346 = vld [vmem:[#allocation5 + $0x278] sm:$0xff]
    %v347 = vld [vmem:[#allocation5 + $0x280] sm:$0xff]
    %v348 = vld [vmem:[#allocation5 + $0x288] sm:$0xff]
    %v349 = vld [vmem:[#allocation5 + $0x290] sm:$0xff]
    %v350 = vld [vmem:[#allocation5 + $0x298] sm:$0xff]
    %v351 = vld [vmem:[#allocation5 + $0x2a0] sm:$0xff]
    %v352 = vld [vmem:[#allocation5 + $0x2a8] sm:$0xff]
    %v353 = vld [vmem:[#allocation5 + $0x2b0] sm:$0xff]
    %v354 = vld [vmem:[#allocation5 + $0x2b8] sm:$0xff]
    %v355 = vld [vmem:[#allocation5 + $0x2c0] sm:$0xff]
    %v356 = vld [vmem:[#allocation5 + $0x2c8] sm:$0xff]
    %v357 = vld [vmem:[#allocation5 + $0x2d0] sm:$0xff]
    %v358 = vld [vmem:[#allocation5 + $0x2d8] sm:$0xff]
    %v359 = vld [vmem:[#allocation5 + $0x2e0] sm:$0xff]
    %v360 = vld [vmem:[#allocation5 + $0x2e8] sm:$0xff]
    %v361 = vld [vmem:[#allocation5 + $0x2f0] sm:$0xff]
    %v362 = vld [vmem:[#allocation5 + $0x2f8] sm:$0xff]
    %v363 = vld [vmem:[#allocation5 + $0x300] sm:$0xff]
    %v364 = vld [vmem:[#allocation5 + $0x308] sm:$0xff]
    %v365 = vld [vmem:[#allocation5 + $0x310] sm:$0xff]
    %v366 = vld [vmem:[#allocation5 + $0x318] sm:$0xff]
    %v367 = vld [vmem:[#allocation5 + $0x320] sm:$0xff]
    %v368 = vld [vmem:[#allocation5 + $0x328] sm:$0xff]
    %v369 = vld [vmem:[#allocation5 + $0x330] sm:$0xff]
    %v370 = vld [vmem:[#allocation5 + $0x338] sm:$0xff]
    %v371 = vld [vmem:[#allocation5 + $0x340] sm:$0xff]
    %v372 = vld [vmem:[#allocation5 + $0x348] sm:$0xff]
    %v373 = vld [vmem:[#allocation5 + $0x350] sm:$0xff]
    %v374 = vld [vmem:[#allocation5 + $0x358] sm:$0xff]
    %v375 = vld [vmem:[#allocation5 + $0x360] sm:$0xff]
    %v376 = vld [vmem:[#allocation5 + $0x368] sm:$0xff]
    %v377 = vld [vmem:[#allocation5 + $0x370] sm:$0xff]
    %v378 = vld [vmem:[#allocation5 + $0x378] sm:$0xff]
    %v379 = vld [vmem:[#allocation5 + $0x380] sm:$0xff]
    %v380 = vld [vmem:[#allocation5 + $0x388] sm:$0xff]
    %v381 = vld [vmem:[#allocation5 + $0x390] sm:$0xff]
    %v382 = vld [vmem:[#allocation5 + $0x398] sm:$0xff]
    %v383 = vld [vmem:[#allocation5 + $0x3a0] sm:$0xff]
    %v384 = vld [vmem:[#allocation5 + $0x3a8] sm:$0xff]
    %v385 = vld [vmem:[#allocation5 + $0x3b0] sm:$0xff]
    %v386 = vld [vmem:[#allocation5 + $0x3b8] sm:$0xff]
    %v387 = vld [vmem:[#allocation5 + $0x3c0] sm:$0xff]
    %v388 = vld [vmem:[#allocation5 + $0x3c8] sm:$0xff]
    %v389 = vld [vmem:[#allocation5 + $0x3d0] sm:$0xff]
    %v390 = vld [vmem:[#allocation5 + $0x3d8] sm:$0xff]
    %v391 = vld [vmem:[#allocation5 + $0x3e0] sm:$0xff]
    %v392 = vld [vmem:[#allocation5 + $0x3e8] sm:$0xff]
    %v393 = vld [vmem:[#allocation5 + $0x3f0] sm:$0xff]
    %v394 = vld [vmem:[#allocation5 + $0x3f8] sm:$0xff]
    %v395 = vld [vmem:[#allocation5 + $0x400] sm:$0xff]
    %v396 = vld [vmem:[#allocation5 + $0x408] sm:$0xff]
    %v397 = vld [vmem:[#allocation5 + $0x410] sm:$0xff]
    %v398 = vld [vmem:[#allocation5 + $0x418] sm:$0xff]
    %v399 = vld [vmem:[#allocation5 + $0x420] sm:$0xff]
    %v400 = vld [vmem:[#allocation5 + $0x428] sm:$0xff]
    %v401 = vld [vmem:[#allocation5 + $0x430] sm:$0xff]
    %v402 = vld [vmem:[#allocation5 + $0x438] sm:$0xff]
    %v403 = vld [vmem:[#allocation5 + $0x440] sm:$0xff]
    %v404 = vld [vmem:[#allocation5 + $0x448] sm:$0xff]
    %v405 = vld [vmem:[#allocation5 + $0x450] sm:$0xff]
    %v406 = vld [vmem:[#allocation5 + $0x458] sm:$0xff]
    %v407 = vld [vmem:[#allocation5 + $0x460] sm:$0xff]
    %v408 = vld [vmem:[#allocation5 + $0x468] sm:$0xff]
    %v409 = vld [vmem:[#allocation5 + $0x470] sm:$0xff]
    %v410 = vld [vmem:[#allocation5 + $0x478] sm:$0xff]
    %v411 = vld [vmem:[#allocation5 + $0x480] sm:$0xff]
    %v412 = vld [vmem:[#allocation5 + $0x488] sm:$0xff]
    %v413 = vld [vmem:[#allocation5 + $0x490] sm:$0xff]
    %v414 = vld [vmem:[#allocation5 + $0x498] sm:$0xff]
    %v415 = vld [vmem:[#allocation5 + $0x4a0] sm:$0xff]
    %v416 = vld [vmem:[#allocation5 + $0x4a8] sm:$0xff]
    %v417 = vld [vmem:[#allocation5 + $0x4b0] sm:$0xff]
    %v418 = vld [vmem:[#allocation5 + $0x4b8] sm:$0xff]
    %v419 = vld [vmem:[#allocation5 + $0x4c0] sm:$0xff]
    %v420 = vld [vmem:[#allocation5 + $0x4c8] sm:$0xff]
    %v421 = vld [vmem:[#allocation5 + $0x4d0] sm:$0xff]
    %v422 = vld [vmem:[#allocation5 + $0x4d8] sm:$0xff]
    %v423 = vld [vmem:[#allocation5 + $0x4e0] sm:$0xff]
    %v424 = vld [vmem:[#allocation5 + $0x4e8] sm:$0xff]
    %v425 = vld [vmem:[#allocation5 + $0x4f0] sm:$0xff]
    %v426 = vld [vmem:[#allocation5 + $0x4f8] sm:$0xff]
    %v427 = vld [vmem:[#allocation5 + $0x500] sm:$0xff]
    %v428 = vld [vmem:[#allocation5 + $0x508] sm:$0xff]
    %v429 = vld [vmem:[#allocation5 + $0x510] sm:$0xff]
    %v430 = vld [vmem:[#allocation5 + $0x518] sm:$0xff]
    %v431 = vld [vmem:[#allocation5 + $0x520] sm:$0xff]
    %v432 = vld [vmem:[#allocation5 + $0x528] sm:$0xff]
    %v433 = vld [vmem:[#allocation5 + $0x530] sm:$0xff]
    %v434 = vld [vmem:[#allocation5 + $0x538] sm:$0xff]
    %v435 = vld [vmem:[#allocation5 + $0x540] sm:$0xff]
    %v436 = vld [vmem:[#allocation5 + $0x548] sm:$0xff]
    %v437 = vld [vmem:[#allocation5 + $0x550] sm:$0xff]
    %v438 = vld [vmem:[#allocation5 + $0x558] sm:$0xff]
    %v439 = vld [vmem:[#allocation5 + $0x560] sm:$0xff]
    %v440 = vld [vmem:[#allocation5 + $0x568] sm:$0xff]
    %v441 = vld [vmem:[#allocation5 + $0x570] sm:$0xff]
    %v442 = vld [vmem:[#allocation5 + $0x578] sm:$0xff]
    %v443 = vld [vmem:[#allocation5 + $0x580] sm:$0xff]
    %v444 = vld [vmem:[#allocation5 + $0x588] sm:$0xff]
    %v445 = vld [vmem:[#allocation5 + $0x590] sm:$0xff]
    %v446 = vld [vmem:[#allocation5 + $0x598] sm:$0xff]
    %v447 = vld [vmem:[#allocation5 + $0x5a0] sm:$0xff]
    %v448 = vld [vmem:[#allocation5 + $0x5a8] sm:$0xff]
    %v449 = vld [vmem:[#allocation5 + $0x5b0] sm:$0xff]
    %v450 = vld [vmem:[#allocation5 + $0x5b8] sm:$0xff]
    %v451 = vld [vmem:[#allocation5 + $0x5c0] sm:$0xff]
    %v452 = vld [vmem:[#allocation5 + $0x5c8] sm:$0xff]
    %v453 = vld [vmem:[#allocation5 + $0x5d0] sm:$0xff]
    %v454 = vld [vmem:[#allocation5 + $0x5d8] sm:$0xff]
    %v455 = vld [vmem:[#allocation5 + $0x5e0] sm:$0xff]
    %v456 = vld [vmem:[#allocation5 + $0x5e8] sm:$0xff]
    %v457 = vld [vmem:[#allocation5 + $0x5f0] sm:$0xff]
    %v458 = vld [vmem:[#allocation5 + $0x5f8] sm:$0xff]
    %v459 = vld [vmem:[#allocation5 + $0x600] sm:$0xff]
    %v460 = vld [vmem:[#allocation5 + $0x608] sm:$0xff]
    %v461 = vld [vmem:[#allocation5 + $0x610] sm:$0xff]
    %v462 = vld [vmem:[#allocation5 + $0x618] sm:$0xff]
    %v463 = vld [vmem:[#allocation5 + $0x620] sm:$0xff]
    %v464 = vld [vmem:[#allocation5 + $0x628] sm:$0xff]
    %v465 = vld [vmem:[#allocation5 + $0x630] sm:$0xff]
    %v466 = vld [vmem:[#allocation5 + $0x638] sm:$0xff]
    %v467 = vld [vmem:[#allocation5 + $0x640] sm:$0xff]
    %v468 = vld [vmem:[#allocation5 + $0x648] sm:$0xff]
    %v469 = vld [vmem:[#allocation5 + $0x650] sm:$0xff]
    %v470 = vld [vmem:[#allocation5 + $0x658] sm:$0xff]
    %v471 = vld [vmem:[#allocation5 + $0x660] sm:$0xff]
    %v472 = vld [vmem:[#allocation5 + $0x668] sm:$0xff]
    %v473 = vld [vmem:[#allocation5 + $0x670] sm:$0xff]
    %v474 = vld [vmem:[#allocation5 + $0x678] sm:$0xff]
    %v475 = vld [vmem:[#allocation5 + $0x680] sm:$0xff]
    %v476 = vld [vmem:[#allocation5 + $0x688] sm:$0xff]
    %v477 = vld [vmem:[#allocation5 + $0x690] sm:$0xff]
    %v478 = vld [vmem:[#allocation5 + $0x698] sm:$0xff]
    %v479 = vld [vmem:[#allocation5 + $0x6a0] sm:$0xff]
    %v480 = vld [vmem:[#allocation5 + $0x6a8] sm:$0xff]
    %v481 = vld [vmem:[#allocation5 + $0x6b0] sm:$0xff]
    %v482 = vld [vmem:[#allocation5 + $0x6b8] sm:$0xff]
    %v483 = vld [vmem:[#allocation5 + $0x6c0] sm:$0xff]
    %v484 = vld [vmem:[#allocation5 + $0x6c8] sm:$0xff]
    %v485 = vld [vmem:[#allocation5 + $0x6d0] sm:$0xff]
    %v486 = vld [vmem:[#allocation5 + $0x6d8] sm:$0xff]
    %v487 = vld [vmem:[#allocation5 + $0x6e0] sm:$0xff]
    %v488 = vld [vmem:[#allocation5 + $0x6e8] sm:$0xff]
    %v489 = vld [vmem:[#allocation5 + $0x6f0] sm:$0xff]
    %v490 = vld [vmem:[#allocation5 + $0x6f8] sm:$0xff]
    %v491 = vld [vmem:[#allocation5 + $0x700] sm:$0xff]
    %v492 = vld [vmem:[#allocation5 + $0x708] sm:$0xff]
    %v493 = vld [vmem:[#allocation5 + $0x710] sm:$0xff]
    %v494 = vld [vmem:[#allocation5 + $0x718] sm:$0xff]
    %v495 = vld [vmem:[#allocation5 + $0x720] sm:$0xff]
    %v496 = vld [vmem:[#allocation5 + $0x728] sm:$0xff]
    %v497 = vld [vmem:[#allocation5 + $0x730] sm:$0xff]
    %v498 = vld [vmem:[#allocation5 + $0x738] sm:$0xff]
    %v499 = vld [vmem:[#allocation5 + $0x740] sm:$0xff]
    %v500 = vld [vmem:[#allocation5 + $0x748] sm:$0xff]
    %v501 = vld [vmem:[#allocation5 + $0x750] sm:$0xff]
    %v502 = vld [vmem:[#allocation5 + $0x758] sm:$0xff]
    %v503 = vld [vmem:[#allocation5 + $0x760] sm:$0xff]
    %v504 = vld [vmem:[#allocation5 + $0x768] sm:$0xff]
    %v505 = vld [vmem:[#allocation5 + $0x770] sm:$0xff]
    %v506 = vld [vmem:[#allocation5 + $0x778] sm:$0xff]
    %v507 = vld [vmem:[#allocation5 + $0x780] sm:$0xff]
    %v508 = vld [vmem:[#allocation5 + $0x788] sm:$0xff]
    %v509 = vld [vmem:[#allocation5 + $0x790] sm:$0xff]
    %v510 = vld [vmem:[#allocation5 + $0x798] sm:$0xff]
    %v511 = vld [vmem:[#allocation5 + $0x7a0] sm:$0xff]
    %v512 = vld [vmem:[#allocation5 + $0x7a8] sm:$0xff]
    %v513 = vld [vmem:[#allocation5 + $0x7b0] sm:$0xff]
    %v514 = vld [vmem:[#allocation5 + $0x7b8] sm:$0xff]
    %v515 = vld [vmem:[#allocation5 + $0x7c0] sm:$0xff]
    %v516 = vld [vmem:[#allocation5 + $0x7c8] sm:$0xff]
    %v517 = vld [vmem:[#allocation5 + $0x7d0] sm:$0xff]
    %v518 = vld [vmem:[#allocation5 + $0x7d8] sm:$0xff]
    %v519 = vld [vmem:[#allocation5 + $0x7e0] sm:$0xff]
    %v520 = vld [vmem:[#allocation5 + $0x7e8] sm:$0xff]
    %v521 = vld [vmem:[#allocation5 + $0x7f0] sm:$0xff]
    %v522 = vld [vmem:[#allocation5 + $0x7f8] sm:$0xff]
    %v523 = vld [vmem:[%s2] sm:$0xf]
    %v525 = vlaneseq
    %v526 = vshrl.u32 %v525, 7
    %v527 = vsub.s32 0, %v526
    %v528 = vrot.slane %v523, %v527
    %v529 = vlaneseq
    %v530 = vshrl.u32 %v529, 7
    %v531 = vsub.s32 1, %v530
    %v532 = vrot.slane %v523, %v531
    %v533 = vlaneseq
    %v534 = vshrl.u32 %v533, 7
    %v535 = vsub.s32 2, %v534
    %v536 = vrot.slane %v523, %v535
    %v537 = vlaneseq
    %v538 = vshrl.u32 %v537, 7
    %v539 = vsub.s32 3, %v538
    %v540 = vrot.slane %v523, %v539
    %v801 = vunpack.c.l.b16 %v267
    %v802 = vunpack.c.h.b16 %v267
    %v803 = vunpack.c.l.b16 %v268
    %v804 = vunpack.c.h.b16 %v268
    %v805 = vunpack.c.l.b16 %v269
    %v806 = vunpack.c.h.b16 %v269
    %v807 = vunpack.c.l.b16 %v270
    %v808 = vunpack.c.h.b16 %v270
    %v809 = vunpack.c.l.b16 %v271
    %v810 = vunpack.c.h.b16 %v271
    %v811 = vunpack.c.l.b16 %v272
    %v812 = vunpack.c.h.b16 %v272
    %v813 = vunpack.c.l.b16 %v273
    %v814 = vunpack.c.h.b16 %v273
    %v815 = vunpack.c.l.b16 %v274
    %v816 = vunpack.c.h.b16 %v274
    %v817 = vunpack.c.l.b16 %v275
    %v818 = vunpack.c.h.b16 %v275
    %v819 = vunpack.c.l.b16 %v276
    %v820 = vunpack.c.h.b16 %v276
    %v821 = vunpack.c.l.b16 %v277
    %v822 = vunpack.c.h.b16 %v277
    %v823 = vunpack.c.l.b16 %v278
    %v824 = vunpack.c.h.b16 %v278
    %v825 = vunpack.c.l.b16 %v279
    %v826 = vunpack.c.h.b16 %v279
    %v827 = vunpack.c.l.b16 %v280
    %v828 = vunpack.c.h.b16 %v280
    %v829 = vunpack.c.l.b16 %v281
    %v830 = vunpack.c.h.b16 %v281
    %v831 = vunpack.c.l.b16 %v282
    %v832 = vunpack.c.h.b16 %v282
    %v833 = vunpack.c.l.b16 %v283
    %v834 = vunpack.c.h.b16 %v283
    %v835 = vunpack.c.l.b16 %v284
    %v836 = vunpack.c.h.b16 %v284
    %v837 = vunpack.c.l.b16 %v285
    %v838 = vunpack.c.h.b16 %v285
    %v839 = vunpack.c.l.b16 %v286
    %v840 = vunpack.c.h.b16 %v286
    %v841 = vunpack.c.l.b16 %v287
    %v842 = vunpack.c.h.b16 %v287
    %v843 = vunpack.c.l.b16 %v288
    %v844 = vunpack.c.h.b16 %v288
    %v845 = vunpack.c.l.b16 %v289
    %v846 = vunpack.c.h.b16 %v289
    %v847 = vunpack.c.l.b16 %v290
    %v848 = vunpack.c.h.b16 %v290
    %v849 = vunpack.c.l.b16 %v291
    %v850 = vunpack.c.h.b16 %v291
    %v851 = vunpack.c.l.b16 %v292
    %v852 = vunpack.c.h.b16 %v292
    %v853 = vunpack.c.l.b16 %v293
    %v854 = vunpack.c.h.b16 %v293
    %v855 = vunpack.c.l.b16 %v294
    %v856 = vunpack.c.h.b16 %v294
    %v857 = vunpack.c.l.b16 %v295
    %v858 = vunpack.c.h.b16 %v295
    %v859 = vunpack.c.l.b16 %v296
    %v860 = vunpack.c.h.b16 %v296
    %v861 = vunpack.c.l.b16 %v297
    %v862 = vunpack.c.h.b16 %v297
    %v863 = vunpack.c.l.b16 %v298
    %v864 = vunpack.c.h.b16 %v298
    %v865 = vunpack.c.l.b16 %v299
    %v866 = vunpack.c.h.b16 %v299
    %v867 = vunpack.c.l.b16 %v300
    %v868 = vunpack.c.h.b16 %v300
    %v869 = vunpack.c.l.b16 %v301
    %v870 = vunpack.c.h.b16 %v301
    %v871 = vunpack.c.l.b16 %v302
    %v872 = vunpack.c.h.b16 %v302
    %v873 = vunpack.c.l.b16 %v303
    %v874 = vunpack.c.h.b16 %v303
    %v875 = vunpack.c.l.b16 %v304
    %v876 = vunpack.c.h.b16 %v304
    %v877 = vunpack.c.l.b16 %v305
    %v878 = vunpack.c.h.b16 %v305
    %v879 = vunpack.c.l.b16 %v306
    %v880 = vunpack.c.h.b16 %v306
    %v881 = vunpack.c.l.b16 %v307
    %v882 = vunpack.c.h.b16 %v307
    %v883 = vunpack.c.l.b16 %v308
    %v884 = vunpack.c.h.b16 %v308
    %v885 = vunpack.c.l.b16 %v309
    %v886 = vunpack.c.h.b16 %v309
    %v887 = vunpack.c.l.b16 %v310
    %v888 = vunpack.c.h.b16 %v310
    %v889 = vunpack.c.l.b16 %v311
    %v890 = vunpack.c.h.b16 %v311
    %v891 = vunpack.c.l.b16 %v312
    %v892 = vunpack.c.h.b16 %v312
    %v893 = vunpack.c.l.b16 %v313
    %v894 = vunpack.c.h.b16 %v313
    %v895 = vunpack.c.l.b16 %v314
    %v896 = vunpack.c.h.b16 %v314
    %v897 = vunpack.c.l.b16 %v315
    %v898 = vunpack.c.h.b16 %v315
    %v899 = vunpack.c.l.b16 %v316
    %v900 = vunpack.c.h.b16 %v316
    %v901 = vunpack.c.l.b16 %v317
    %v902 = vunpack.c.h.b16 %v317
    %v903 = vunpack.c.l.b16 %v318
    %v904 = vunpack.c.h.b16 %v318
    %v905 = vunpack.c.l.b16 %v319
    %v906 = vunpack.c.h.b16 %v319
    %v907 = vunpack.c.l.b16 %v320
    %v908 = vunpack.c.h.b16 %v320
    %v909 = vunpack.c.l.b16 %v321
    %v910 = vunpack.c.h.b16 %v321
    %v911 = vunpack.c.l.b16 %v322
    %v912 = vunpack.c.h.b16 %v322
    %v913 = vunpack.c.l.b16 %v323
    %v914 = vunpack.c.h.b16 %v323
    %v915 = vunpack.c.l.b16 %v324
    %v916 = vunpack.c.h.b16 %v324
    %v917 = vunpack.c.l.b16 %v325
    %v918 = vunpack.c.h.b16 %v325
    %v919 = vunpack.c.l.b16 %v326
    %v920 = vunpack.c.h.b16 %v326
    %v921 = vunpack.c.l.b16 %v327
    %v922 = vunpack.c.h.b16 %v327
    %v923 = vunpack.c.l.b16 %v328
    %v924 = vunpack.c.h.b16 %v328
    %v925 = vunpack.c.l.b16 %v329
    %v926 = vunpack.c.h.b16 %v329
    %v927 = vunpack.c.l.b16 %v330
    %v928 = vunpack.c.h.b16 %v330
    %v929 = vunpack.c.l.b16 %v331
    %v930 = vunpack.c.h.b16 %v331
    %v931 = vunpack.c.l.b16 %v332
    %v932 = vunpack.c.h.b16 %v332
    %v933 = vunpack.c.l.b16 %v333
    %v934 = vunpack.c.h.b16 %v333
    %v935 = vunpack.c.l.b16 %v334
    %v936 = vunpack.c.h.b16 %v334
    %v937 = vunpack.c.l.b16 %v335
    %v938 = vunpack.c.h.b16 %v335
    %v939 = vunpack.c.l.b16 %v336
    %v940 = vunpack.c.h.b16 %v336
    %v941 = vunpack.c.l.b16 %v337
    %v942 = vunpack.c.h.b16 %v337
    %v943 = vunpack.c.l.b16 %v338
    %v944 = vunpack.c.h.b16 %v338
    %v945 = vunpack.c.l.b16 %v339
    %v946 = vunpack.c.h.b16 %v339
    %v947 = vunpack.c.l.b16 %v340
    %v948 = vunpack.c.h.b16 %v340
    %v949 = vunpack.c.l.b16 %v341
    %v950 = vunpack.c.h.b16 %v341
    %v951 = vunpack.c.l.b16 %v342
    %v952 = vunpack.c.h.b16 %v342
    %v953 = vunpack.c.l.b16 %v343
    %v954 = vunpack.c.h.b16 %v343
    %v955 = vunpack.c.l.b16 %v344
    %v956 = vunpack.c.h.b16 %v344
    %v957 = vunpack.c.l.b16 %v345
    %v958 = vunpack.c.h.b16 %v345
    %v959 = vunpack.c.l.b16 %v346
    %v960 = vunpack.c.h.b16 %v346
    %v961 = vunpack.c.l.b16 %v347
    %v962 = vunpack.c.h.b16 %v347
    %v963 = vunpack.c.l.b16 %v348
    %v964 = vunpack.c.h.b16 %v348
    %v965 = vunpack.c.l.b16 %v349
    %v966 = vunpack.c.h.b16 %v349
    %v967 = vunpack.c.l.b16 %v350
    %v968 = vunpack.c.h.b16 %v350
    %v969 = vunpack.c.l.b16 %v351
    %v970 = vunpack.c.h.b16 %v351
    %v971 = vunpack.c.l.b16 %v352
    %v972 = vunpack.c.h.b16 %v352
    %v973 = vunpack.c.l.b16 %v353
    %v974 = vunpack.c.h.b16 %v353
    %v975 = vunpack.c.l.b16 %v354
    %v976 = vunpack.c.h.b16 %v354
    %v977 = vunpack.c.l.b16 %v355
    %v978 = vunpack.c.h.b16 %v355
    %v979 = vunpack.c.l.b16 %v356
    %v980 = vunpack.c.h.b16 %v356
    %v981 = vunpack.c.l.b16 %v357
    %v982 = vunpack.c.h.b16 %v357
    %v983 = vunpack.c.l.b16 %v358
    %v984 = vunpack.c.h.b16 %v358
    %v985 = vunpack.c.l.b16 %v359
    %v986 = vunpack.c.h.b16 %v359
    %v987 = vunpack.c.l.b16 %v360
    %v988 = vunpack.c.h.b16 %v360
    %v989 = vunpack.c.l.b16 %v361
    %v990 = vunpack.c.h.b16 %v361
    %v991 = vunpack.c.l.b16 %v362
    %v992 = vunpack.c.h.b16 %v362
    %v993 = vunpack.c.l.b16 %v363
    %v994 = vunpack.c.h.b16 %v363
    %v995 = vunpack.c.l.b16 %v364
    %v996 = vunpack.c.h.b16 %v364
    %v997 = vunpack.c.l.b16 %v365
    %v998 = vunpack.c.h.b16 %v365
    %v999 = vunpack.c.l.b16 %v366
    %v1000 = vunpack.c.h.b16 %v366
    %v1001 = vunpack.c.l.b16 %v367
    %v1002 = vunpack.c.h.b16 %v367
    %v1003 = vunpack.c.l.b16 %v368
    %v1004 = vunpack.c.h.b16 %v368
    %v1005 = vunpack.c.l.b16 %v369
    %v1006 = vunpack.c.h.b16 %v369
    %v1007 = vunpack.c.l.b16 %v370
    %v1008 = vunpack.c.h.b16 %v370
    %v1009 = vunpack.c.l.b16 %v371
    %v1010 = vunpack.c.h.b16 %v371
    %v1011 = vunpack.c.l.b16 %v372
    %v1012 = vunpack.c.h.b16 %v372
    %v1013 = vunpack.c.l.b16 %v373
    %v1014 = vunpack.c.h.b16 %v373
    %v1015 = vunpack.c.l.b16 %v374
    %v1016 = vunpack.c.h.b16 %v374
    %v1017 = vunpack.c.l.b16 %v375
    %v1018 = vunpack.c.h.b16 %v375
    %v1019 = vunpack.c.l.b16 %v376
    %v1020 = vunpack.c.h.b16 %v376
    %v1021 = vunpack.c.l.b16 %v377
    %v1022 = vunpack.c.h.b16 %v377
    %v1023 = vunpack.c.l.b16 %v378
    %v1024 = vunpack.c.h.b16 %v378
    %v1025 = vunpack.c.l.b16 %v379
    %v1026 = vunpack.c.h.b16 %v379
    %v1027 = vunpack.c.l.b16 %v380
    %v1028 = vunpack.c.h.b16 %v380
    %v1029 = vunpack.c.l.b16 %v381
    %v1030 = vunpack.c.h.b16 %v381
    %v1031 = vunpack.c.l.b16 %v382
    %v1032 = vunpack.c.h.b16 %v382
    %v1033 = vunpack.c.l.b16 %v383
    %v1034 = vunpack.c.h.b16 %v383
    %v1035 = vunpack.c.l.b16 %v384
    %v1036 = vunpack.c.h.b16 %v384
    %v1037 = vunpack.c.l.b16 %v385
    %v1038 = vunpack.c.h.b16 %v385
    %v1039 = vunpack.c.l.b16 %v386
    %v1040 = vunpack.c.h.b16 %v386
    %v1041 = vunpack.c.l.b16 %v387
    %v1042 = vunpack.c.h.b16 %v387
    %v1043 = vunpack.c.l.b16 %v388
    %v1044 = vunpack.c.h.b16 %v388
    %v1045 = vunpack.c.l.b16 %v389
    %v1046 = vunpack.c.h.b16 %v389
    %v1047 = vunpack.c.l.b16 %v390
    %v1048 = vunpack.c.h.b16 %v390
    %v1049 = vunpack.c.l.b16 %v391
    %v1050 = vunpack.c.h.b16 %v391
    %v1051 = vunpack.c.l.b16 %v392
    %v1052 = vunpack.c.h.b16 %v392
    %v1053 = vunpack.c.l.b16 %v393
    %v1054 = vunpack.c.h.b16 %v393
    %v1055 = vunpack.c.l.b16 %v394
    %v1056 = vunpack.c.h.b16 %v394
    %v1057 = vunpack.c.l.b16 %v395
    %v1058 = vunpack.c.h.b16 %v395
    %v1059 = vunpack.c.l.b16 %v396
    %v1060 = vunpack.c.h.b16 %v396
    %v1061 = vunpack.c.l.b16 %v397
    %v1062 = vunpack.c.h.b16 %v397
    %v1063 = vunpack.c.l.b16 %v398
    %v1064 = vunpack.c.h.b16 %v398
    %v1065 = vunpack.c.l.b16 %v399
    %v1066 = vunpack.c.h.b16 %v399
    %v1067 = vunpack.c.l.b16 %v400
    %v1068 = vunpack.c.h.b16 %v400
    %v1069 = vunpack.c.l.b16 %v401
    %v1070 = vunpack.c.h.b16 %v401
    %v1071 = vunpack.c.l.b16 %v402
    %v1072 = vunpack.c.h.b16 %v402
    %v1073 = vunpack.c.l.b16 %v403
    %v1074 = vunpack.c.h.b16 %v403
    %v1075 = vunpack.c.l.b16 %v404
    %v1076 = vunpack.c.h.b16 %v404
    %v1077 = vunpack.c.l.b16 %v405
    %v1078 = vunpack.c.h.b16 %v405
    %v1079 = vunpack.c.l.b16 %v406
    %v1080 = vunpack.c.h.b16 %v406
    %v1081 = vunpack.c.l.b16 %v407
    %v1082 = vunpack.c.h.b16 %v407
    %v1083 = vunpack.c.l.b16 %v408
    %v1084 = vunpack.c.h.b16 %v408
    %v1085 = vunpack.c.l.b16 %v409
    %v1086 = vunpack.c.h.b16 %v409
    %v1087 = vunpack.c.l.b16 %v410
    %v1088 = vunpack.c.h.b16 %v410
    %v1089 = vunpack.c.l.b16 %v411
    %v1090 = vunpack.c.h.b16 %v411
    %v1091 = vunpack.c.l.b16 %v412
    %v1092 = vunpack.c.h.b16 %v412
    %v1093 = vunpack.c.l.b16 %v413
    %v1094 = vunpack.c.h.b16 %v413
    %v1095 = vunpack.c.l.b16 %v414
    %v1096 = vunpack.c.h.b16 %v414
    %v1097 = vunpack.c.l.b16 %v415
    %v1098 = vunpack.c.h.b16 %v415
    %v1099 = vunpack.c.l.b16 %v416
    %v1100 = vunpack.c.h.b16 %v416
    %v1101 = vunpack.c.l.b16 %v417
    %v1102 = vunpack.c.h.b16 %v417
    %v1103 = vunpack.c.l.b16 %v418
    %v1104 = vunpack.c.h.b16 %v418
    %v1105 = vunpack.c.l.b16 %v419
    %v1106 = vunpack.c.h.b16 %v419
    %v1107 = vunpack.c.l.b16 %v420
    %v1108 = vunpack.c.h.b16 %v420
    %v1109 = vunpack.c.l.b16 %v421
    %v1110 = vunpack.c.h.b16 %v421
    %v1111 = vunpack.c.l.b16 %v422
    %v1112 = vunpack.c.h.b16 %v422
    %v1113 = vunpack.c.l.b16 %v423
    %v1114 = vunpack.c.h.b16 %v423
    %v1115 = vunpack.c.l.b16 %v424
    %v1116 = vunpack.c.h.b16 %v424
    %v1117 = vunpack.c.l.b16 %v425
    %v1118 = vunpack.c.h.b16 %v425
    %v1119 = vunpack.c.l.b16 %v426
    %v1120 = vunpack.c.h.b16 %v426
    %v1121 = vunpack.c.l.b16 %v427
    %v1122 = vunpack.c.h.b16 %v427
    %v1123 = vunpack.c.l.b16 %v428
    %v1124 = vunpack.c.h.b16 %v428
    %v1125 = vunpack.c.l.b16 %v429
    %v1126 = vunpack.c.h.b16 %v429
    %v1127 = vunpack.c.l.b16 %v430
    %v1128 = vunpack.c.h.b16 %v430
    %v1129 = vunpack.c.l.b16 %v431
    %v1130 = vunpack.c.h.b16 %v431
    %v1131 = vunpack.c.l.b16 %v432
    %v1132 = vunpack.c.h.b16 %v432
    %v1133 = vunpack.c.l.b16 %v433
    %v1134 = vunpack.c.h.b16 %v433
    %v1135 = vunpack.c.l.b16 %v434
    %v1136 = vunpack.c.h.b16 %v434
    %v1137 = vunpack.c.l.b16 %v435
    %v1138 = vunpack.c.h.b16 %v435
    %v1139 = vunpack.c.l.b16 %v436
    %v1140 = vunpack.c.h.b16 %v436
    %v1141 = vunpack.c.l.b16 %v437
    %v1142 = vunpack.c.h.b16 %v437
    %v1143 = vunpack.c.l.b16 %v438
    %v1144 = vunpack.c.h.b16 %v438
    %v1145 = vunpack.c.l.b16 %v439
    %v1146 = vunpack.c.h.b16 %v439
    %v1147 = vunpack.c.l.b16 %v440
    %v1148 = vunpack.c.h.b16 %v440
    %v1149 = vunpack.c.l.b16 %v441
    %v1150 = vunpack.c.h.b16 %v441
    %v1151 = vunpack.c.l.b16 %v442
    %v1152 = vunpack.c.h.b16 %v442
    %v1153 = vunpack.c.l.b16 %v443
    %v1154 = vunpack.c.h.b16 %v443
    %v1155 = vunpack.c.l.b16 %v444
    %v1156 = vunpack.c.h.b16 %v444
    %v1157 = vunpack.c.l.b16 %v445
    %v1158 = vunpack.c.h.b16 %v445
    %v1159 = vunpack.c.l.b16 %v446
    %v1160 = vunpack.c.h.b16 %v446
    %v1161 = vunpack.c.l.b16 %v447
    %v1162 = vunpack.c.h.b16 %v447
    %v1163 = vunpack.c.l.b16 %v448
    %v1164 = vunpack.c.h.b16 %v448
    %v1165 = vunpack.c.l.b16 %v449
    %v1166 = vunpack.c.h.b16 %v449
    %v1167 = vunpack.c.l.b16 %v450
    %v1168 = vunpack.c.h.b16 %v450
    %v1169 = vunpack.c.l.b16 %v451
    %v1170 = vunpack.c.h.b16 %v451
    %v1171 = vunpack.c.l.b16 %v452
    %v1172 = vunpack.c.h.b16 %v452
    %v1173 = vunpack.c.l.b16 %v453
    %v1174 = vunpack.c.h.b16 %v453
    %v1175 = vunpack.c.l.b16 %v454
    %v1176 = vunpack.c.h.b16 %v454
    %v1177 = vunpack.c.l.b16 %v455
    %v1178 = vunpack.c.h.b16 %v455
    %v1179 = vunpack.c.l.b16 %v456
    %v1180 = vunpack.c.h.b16 %v456
    %v1181 = vunpack.c.l.b16 %v457
    %v1182 = vunpack.c.h.b16 %v457
    %v1183 = vunpack.c.l.b16 %v458
    %v1184 = vunpack.c.h.b16 %v458
    %v1185 = vunpack.c.l.b16 %v459
    %v1186 = vunpack.c.h.b16 %v459
    %v1187 = vunpack.c.l.b16 %v460
    %v1188 = vunpack.c.h.b16 %v460
    %v1189 = vunpack.c.l.b16 %v461
    %v1190 = vunpack.c.h.b16 %v461
    %v1191 = vunpack.c.l.b16 %v462
    %v1192 = vunpack.c.h.b16 %v462
    %v1193 = vunpack.c.l.b16 %v463
    %v1194 = vunpack.c.h.b16 %v463
    %v1195 = vunpack.c.l.b16 %v464
    %v1196 = vunpack.c.h.b16 %v464
    %v1197 = vunpack.c.l.b16 %v465
    %v1198 = vunpack.c.h.b16 %v465
    %v1199 = vunpack.c.l.b16 %v466
    %v1200 = vunpack.c.h.b16 %v466
    %v1201 = vunpack.c.l.b16 %v467
    %v1202 = vunpack.c.h.b16 %v467
    %v1203 = vunpack.c.l.b16 %v468
    %v1204 = vunpack.c.h.b16 %v468
    %v1205 = vunpack.c.l.b16 %v469
    %v1206 = vunpack.c.h.b16 %v469
    %v1207 = vunpack.c.l.b16 %v470
    %v1208 = vunpack.c.h.b16 %v470
    %v1209 = vunpack.c.l.b16 %v471
    %v1210 = vunpack.c.h.b16 %v471
    %v1211 = vunpack.c.l.b16 %v472
    %v1212 = vunpack.c.h.b16 %v472
    %v1213 = vunpack.c.l.b16 %v473
    %v1214 = vunpack.c.h.b16 %v473
    %v1215 = vunpack.c.l.b16 %v474
    %v1216 = vunpack.c.h.b16 %v474
    %v1217 = vunpack.c.l.b16 %v475
    %v1218 = vunpack.c.h.b16 %v475
    %v1219 = vunpack.c.l.b16 %v476
    %v1220 = vunpack.c.h.b16 %v476
    %v1221 = vunpack.c.l.b16 %v477
    %v1222 = vunpack.c.h.b16 %v477
    %v1223 = vunpack.c.l.b16 %v478
    %v1224 = vunpack.c.h.b16 %v478
    %v1225 = vunpack.c.l.b16 %v479
    %v1226 = vunpack.c.h.b16 %v479
    %v1227 = vunpack.c.l.b16 %v480
    %v1228 = vunpack.c.h.b16 %v480
    %v1229 = vunpack.c.l.b16 %v481
    %v1230 = vunpack.c.h.b16 %v481
    %v1231 = vunpack.c.l.b16 %v482
    %v1232 = vunpack.c.h.b16 %v482
    %v1233 = vunpack.c.l.b16 %v483
    %v1234 = vunpack.c.h.b16 %v483
    %v1235 = vunpack.c.l.b16 %v484
    %v1236 = vunpack.c.h.b16 %v484
    %v1237 = vunpack.c.l.b16 %v485
    %v1238 = vunpack.c.h.b16 %v485
    %v1239 = vunpack.c.l.b16 %v486
    %v1240 = vunpack.c.h.b16 %v486
    %v1241 = vunpack.c.l.b16 %v487
    %v1242 = vunpack.c.h.b16 %v487
    %v1243 = vunpack.c.l.b16 %v488
    %v1244 = vunpack.c.h.b16 %v488
    %v1245 = vunpack.c.l.b16 %v489
    %v1246 = vunpack.c.h.b16 %v489
    %v1247 = vunpack.c.l.b16 %v490
    %v1248 = vunpack.c.h.b16 %v490
    %v1249 = vunpack.c.l.b16 %v491
    %v1250 = vunpack.c.h.b16 %v491
    %v1251 = vunpack.c.l.b16 %v492
    %v1252 = vunpack.c.h.b16 %v492
    %v1253 = vunpack.c.l.b16 %v493
    %v1254 = vunpack.c.h.b16 %v493
    %v1255 = vunpack.c.l.b16 %v494
    %v1256 = vunpack.c.h.b16 %v494
    %v1257 = vunpack.c.l.b16 %v495
    %v1258 = vunpack.c.h.b16 %v495
    %v1259 = vunpack.c.l.b16 %v496
    %v1260 = vunpack.c.h.b16 %v496
    %v1261 = vunpack.c.l.b16 %v497
    %v1262 = vunpack.c.h.b16 %v497
    %v1263 = vunpack.c.l.b16 %v498
    %v1264 = vunpack.c.h.b16 %v498
    %v1265 = vunpack.c.l.b16 %v499
    %v1266 = vunpack.c.h.b16 %v499
    %v1267 = vunpack.c.l.b16 %v500
    %v1268 = vunpack.c.h.b16 %v500
    %v1269 = vunpack.c.l.b16 %v501
    %v1270 = vunpack.c.h.b16 %v501
    %v1271 = vunpack.c.l.b16 %v502
    %v1272 = vunpack.c.h.b16 %v502
    %v1273 = vunpack.c.l.b16 %v503
    %v1274 = vunpack.c.h.b16 %v503
    %v1275 = vunpack.c.l.b16 %v504
    %v1276 = vunpack.c.h.b16 %v504
    %v1277 = vunpack.c.l.b16 %v505
    %v1278 = vunpack.c.h.b16 %v505
    %v1279 = vunpack.c.l.b16 %v506
    %v1280 = vunpack.c.h.b16 %v506
    %v1281 = vunpack.c.l.b16 %v507
    %v1282 = vunpack.c.h.b16 %v507
    %v1283 = vunpack.c.l.b16 %v508
    %v1284 = vunpack.c.h.b16 %v508
    %v1285 = vunpack.c.l.b16 %v509
    %v1286 = vunpack.c.h.b16 %v509
    %v1287 = vunpack.c.l.b16 %v510
    %v1288 = vunpack.c.h.b16 %v510
    %v1289 = vunpack.c.l.b16 %v511
    %v1290 = vunpack.c.h.b16 %v511
    %v1291 = vunpack.c.l.b16 %v512
    %v1292 = vunpack.c.h.b16 %v512
    %v1293 = vunpack.c.l.b16 %v513
    %v1294 = vunpack.c.h.b16 %v513
    %v1295 = vunpack.c.l.b16 %v514
    %v1296 = vunpack.c.h.b16 %v514
    %v1297 = vunpack.c.l.b16 %v515
    %v1298 = vunpack.c.h.b16 %v515
    %v1299 = vunpack.c.l.b16 %v516
    %v1300 = vunpack.c.h.b16 %v516
    %v1301 = vunpack.c.l.b16 %v517
    %v1302 = vunpack.c.h.b16 %v517
    %v1303 = vunpack.c.l.b16 %v518
    %v1304 = vunpack.c.h.b16 %v518
    %v1305 = vunpack.c.l.b16 %v519
    %v1306 = vunpack.c.h.b16 %v519
    %v1307 = vunpack.c.l.b16 %v520
    %v1308 = vunpack.c.h.b16 %v520
    %v1309 = vunpack.c.l.b16 %v521
    %v1310 = vunpack.c.h.b16 %v521
    %v1311 = vunpack.c.l.b16 %v522
    %v1312 = vunpack.c.h.b16 %v522
    %v1313 = vpack.c.b16 %v805, %v801
    %v1314 = vpack.c.b16 %v806, %v802
    %v1315 = vpack.c.b16 %v807, %v803
    %v1316 = vpack.c.b16 %v808, %v804
    %v1317 = vpack.c.b16 %v813, %v809
    %v1318 = vpack.c.b16 %v814, %v810
    %v1319 = vpack.c.b16 %v815, %v811
    %v1320 = vpack.c.b16 %v816, %v812
    %v1321 = vpack.c.b16 %v821, %v817
    %v1322 = vpack.c.b16 %v822, %v818
    %v1323 = vpack.c.b16 %v823, %v819
    %v1324 = vpack.c.b16 %v824, %v820
    %v1325 = vpack.c.b16 %v829, %v825
    %v1326 = vpack.c.b16 %v830, %v826
    %v1327 = vpack.c.b16 %v831, %v827
    %v1328 = vpack.c.b16 %v832, %v828
    %v1329 = vpack.c.b16 %v837, %v833
    %v1330 = vpack.c.b16 %v838, %v834
    %v1331 = vpack.c.b16 %v839, %v835
    %v1332 = vpack.c.b16 %v840, %v836
    %v1333 = vpack.c.b16 %v845, %v841
    %v1334 = vpack.c.b16 %v846, %v842
    %v1335 = vpack.c.b16 %v847, %v843
    %v1336 = vpack.c.b16 %v848, %v844
    %v1337 = vpack.c.b16 %v853, %v849
    %v1338 = vpack.c.b16 %v854, %v850
    %v1339 = vpack.c.b16 %v855, %v851
    %v1340 = vpack.c.b16 %v856, %v852
    %v1341 = vpack.c.b16 %v861, %v857
    %v1342 = vpack.c.b16 %v862, %v858
    %v1343 = vpack.c.b16 %v863, %v859
    %v1344 = vpack.c.b16 %v864, %v860
    %v1345 = vpack.c.b16 %v869, %v865
    %v1346 = vpack.c.b16 %v870, %v866
    %v1347 = vpack.c.b16 %v871, %v867
    %v1348 = vpack.c.b16 %v872, %v868
    %v1349 = vpack.c.b16 %v877, %v873
    %v1350 = vpack.c.b16 %v878, %v874
    %v1351 = vpack.c.b16 %v879, %v875
    %v1352 = vpack.c.b16 %v880, %v876
    %v1353 = vpack.c.b16 %v885, %v881
    %v1354 = vpack.c.b16 %v886, %v882
    %v1355 = vpack.c.b16 %v887, %v883
    %v1356 = vpack.c.b16 %v888, %v884
    %v1357 = vpack.c.b16 %v893, %v889
    %v1358 = vpack.c.b16 %v894, %v890
    %v1359 = vpack.c.b16 %v895, %v891
    %v1360 = vpack.c.b16 %v896, %v892
    %v1361 = vpack.c.b16 %v901, %v897
    %v1362 = vpack.c.b16 %v902, %v898
    %v1363 = vpack.c.b16 %v903, %v899
    %v1364 = vpack.c.b16 %v904, %v900
    %v1365 = vpack.c.b16 %v909, %v905
    %v1366 = vpack.c.b16 %v910, %v906
    %v1367 = vpack.c.b16 %v911, %v907
    %v1368 = vpack.c.b16 %v912, %v908
    %v1369 = vpack.c.b16 %v917, %v913
    %v1370 = vpack.c.b16 %v918, %v914
    %v1371 = vpack.c.b16 %v919, %v915
    %v1372 = vpack.c.b16 %v920, %v916
    %v1373 = vpack.c.b16 %v925, %v921
    %v1374 = vpack.c.b16 %v926, %v922
    %v1375 = vpack.c.b16 %v927, %v923
    %v1376 = vpack.c.b16 %v928, %v924
    %v1377 = vpack.c.b16 %v933, %v929
    %v1378 = vpack.c.b16 %v934, %v930
    %v1379 = vpack.c.b16 %v935, %v931
    %v1380 = vpack.c.b16 %v936, %v932
    %v1381 = vpack.c.b16 %v941, %v937
    %v1382 = vpack.c.b16 %v942, %v938
    %v1383 = vpack.c.b16 %v943, %v939
    %v1384 = vpack.c.b16 %v944, %v940
    %v1385 = vpack.c.b16 %v949, %v945
    %v1386 = vpack.c.b16 %v950, %v946
    %v1387 = vpack.c.b16 %v951, %v947
    %v1388 = vpack.c.b16 %v952, %v948
    %v1389 = vpack.c.b16 %v957, %v953
    %v1390 = vpack.c.b16 %v958, %v954
    %v1391 = vpack.c.b16 %v959, %v955
    %v1392 = vpack.c.b16 %v960, %v956
    %v1393 = vpack.c.b16 %v965, %v961
    %v1394 = vpack.c.b16 %v966, %v962
    %v1395 = vpack.c.b16 %v967, %v963
    %v1396 = vpack.c.b16 %v968, %v964
    %v1397 = vpack.c.b16 %v973, %v969
    %v1398 = vpack.c.b16 %v974, %v970
    %v1399 = vpack.c.b16 %v975, %v971
    %v1400 = vpack.c.b16 %v976, %v972
    %v1401 = vpack.c.b16 %v981, %v977
    %v1402 = vpack.c.b16 %v982, %v978
    %v1403 = vpack.c.b16 %v983, %v979
    %v1404 = vpack.c.b16 %v984, %v980
    %v1405 = vpack.c.b16 %v989, %v985
    %v1406 = vpack.c.b16 %v990, %v986
    %v1407 = vpack.c.b16 %v991, %v987
    %v1408 = vpack.c.b16 %v992, %v988
    %v1409 = vpack.c.b16 %v997, %v993
    %v1410 = vpack.c.b16 %v998, %v994
    %v1411 = vpack.c.b16 %v999, %v995
    %v1412 = vpack.c.b16 %v1000, %v996
    %v1413 = vpack.c.b16 %v1005, %v1001
    %v1414 = vpack.c.b16 %v1006, %v1002
    %v1415 = vpack.c.b16 %v1007, %v1003
    %v1416 = vpack.c.b16 %v1008, %v1004
    %v1417 = vpack.c.b16 %v1013, %v1009
    %v1418 = vpack.c.b16 %v1014, %v1010
    %v1419 = vpack.c.b16 %v1015, %v1011
    %v1420 = vpack.c.b16 %v1016, %v1012
    %v1421 = vpack.c.b16 %v1021, %v1017
    %v1422 = vpack.c.b16 %v1022, %v1018
    %v1423 = vpack.c.b16 %v1023, %v1019
    %v1424 = vpack.c.b16 %v1024, %v1020
    %v1425 = vpack.c.b16 %v1029, %v1025
    %v1426 = vpack.c.b16 %v1030, %v1026
    %v1427 = vpack.c.b16 %v1031, %v1027
    %v1428 = vpack.c.b16 %v1032, %v1028
    %v1429 = vpack.c.b16 %v1037, %v1033
    %v1430 = vpack.c.b16 %v1038, %v1034
    %v1431 = vpack.c.b16 %v1039, %v1035
    %v1432 = vpack.c.b16 %v1040, %v1036
    %v1433 = vpack.c.b16 %v1045, %v1041
    %v1434 = vpack.c.b16 %v1046, %v1042
    %v1435 = vpack.c.b16 %v1047, %v1043
    %v1436 = vpack.c.b16 %v1048, %v1044
    %v1437 = vpack.c.b16 %v1053, %v1049
    %v1438 = vpack.c.b16 %v1054, %v1050
    %v1439 = vpack.c.b16 %v1055, %v1051
    %v1440 = vpack.c.b16 %v1056, %v1052
    %v1441 = vpack.c.b16 %v1061, %v1057
    %v1442 = vpack.c.b16 %v1062, %v1058
    %v1443 = vpack.c.b16 %v1063, %v1059
    %v1444 = vpack.c.b16 %v1064, %v1060
    %v1445 = vpack.c.b16 %v1069, %v1065
    %v1446 = vpack.c.b16 %v1070, %v1066
    %v1447 = vpack.c.b16 %v1071, %v1067
    %v1448 = vpack.c.b16 %v1072, %v1068
    %v1449 = vpack.c.b16 %v1077, %v1073
    %v1450 = vpack.c.b16 %v1078, %v1074
    %v1451 = vpack.c.b16 %v1079, %v1075
    %v1452 = vpack.c.b16 %v1080, %v1076
    %v1453 = vpack.c.b16 %v1085, %v1081
    %v1454 = vpack.c.b16 %v1086, %v1082
    %v1455 = vpack.c.b16 %v1087, %v1083
    %v1456 = vpack.c.b16 %v1088, %v1084
    %v1457 = vpack.c.b16 %v1093, %v1089
    %v1458 = vpack.c.b16 %v1094, %v1090
    %v1459 = vpack.c.b16 %v1095, %v1091
    %v1460 = vpack.c.b16 %v1096, %v1092
    %v1461 = vpack.c.b16 %v1101, %v1097
    %v1462 = vpack.c.b16 %v1102, %v1098
    %v1463 = vpack.c.b16 %v1103, %v1099
    %v1464 = vpack.c.b16 %v1104, %v1100
    %v1465 = vpack.c.b16 %v1109, %v1105
    %v1466 = vpack.c.b16 %v1110, %v1106
    %v1467 = vpack.c.b16 %v1111, %v1107
    %v1468 = vpack.c.b16 %v1112, %v1108
    %v1469 = vpack.c.b16 %v1117, %v1113
    %v1470 = vpack.c.b16 %v1118, %v1114
    %v1471 = vpack.c.b16 %v1119, %v1115
    %v1472 = vpack.c.b16 %v1120, %v1116
    %v1473 = vpack.c.b16 %v1125, %v1121
    %v1474 = vpack.c.b16 %v1126, %v1122
    %v1475 = vpack.c.b16 %v1127, %v1123
    %v1476 = vpack.c.b16 %v1128, %v1124
    %v1477 = vpack.c.b16 %v1133, %v1129
    %v1478 = vpack.c.b16 %v1134, %v1130
    %v1479 = vpack.c.b16 %v1135, %v1131
    %v1480 = vpack.c.b16 %v1136, %v1132
    %v1481 = vpack.c.b16 %v1141, %v1137
    %v1482 = vpack.c.b16 %v1142, %v1138
    %v1483 = vpack.c.b16 %v1143, %v1139
    %v1484 = vpack.c.b16 %v1144, %v1140
    %v1485 = vpack.c.b16 %v1149, %v1145
    %v1486 = vpack.c.b16 %v1150, %v1146
    %v1487 = vpack.c.b16 %v1151, %v1147
    %v1488 = vpack.c.b16 %v1152, %v1148
    %v1489 = vpack.c.b16 %v1157, %v1153
    %v1490 = vpack.c.b16 %v1158, %v1154
    %v1491 = vpack.c.b16 %v1159, %v1155
    %v1492 = vpack.c.b16 %v1160, %v1156
    %v1493 = vpack.c.b16 %v1165, %v1161
    %v1494 = vpack.c.b16 %v1166, %v1162
    %v1495 = vpack.c.b16 %v1167, %v1163
    %v1496 = vpack.c.b16 %v1168, %v1164
    %v1497 = vpack.c.b16 %v1173, %v1169
    %v1498 = vpack.c.b16 %v1174, %v1170
    %v1499 = vpack.c.b16 %v1175, %v1171
    %v1500 = vpack.c.b16 %v1176, %v1172
    %v1501 = vpack.c.b16 %v1181, %v1177
    %v1502 = vpack.c.b16 %v1182, %v1178
    %v1503 = vpack.c.b16 %v1183, %v1179
    %v1504 = vpack.c.b16 %v1184, %v1180
    %v1505 = vpack.c.b16 %v1189, %v1185
    %v1506 = vpack.c.b16 %v1190, %v1186
    %v1507 = vpack.c.b16 %v1191, %v1187
    %v1508 = vpack.c.b16 %v1192, %v1188
    %v1509 = vpack.c.b16 %v1197, %v1193
    %v1510 = vpack.c.b16 %v1198, %v1194
    %v1511 = vpack.c.b16 %v1199, %v1195
    %v1512 = vpack.c.b16 %v1200, %v1196
    %v1513 = vpack.c.b16 %v1205, %v1201
    %v1514 = vpack.c.b16 %v1206, %v1202
    %v1515 = vpack.c.b16 %v1207, %v1203
    %v1516 = vpack.c.b16 %v1208, %v1204
    %v1517 = vpack.c.b16 %v1213, %v1209
    %v1518 = vpack.c.b16 %v1214, %v1210
    %v1519 = vpack.c.b16 %v1215, %v1211
    %v1520 = vpack.c.b16 %v1216, %v1212
    %v1521 = vpack.c.b16 %v1221, %v1217
    %v1522 = vpack.c.b16 %v1222, %v1218
    %v1523 = vpack.c.b16 %v1223, %v1219
    %v1524 = vpack.c.b16 %v1224, %v1220
    %v1525 = vpack.c.b16 %v1229, %v1225
    %v1526 = vpack.c.b16 %v1230, %v1226
    %v1527 = vpack.c.b16 %v1231, %v1227
    %v1528 = vpack.c.b16 %v1232, %v1228
    %v1529 = vpack.c.b16 %v1237, %v1233
    %v1530 = vpack.c.b16 %v1238, %v1234
    %v1531 = vpack.c.b16 %v1239, %v1235
    %v1532 = vpack.c.b16 %v1240, %v1236
    %v1533 = vpack.c.b16 %v1245, %v1241
    %v1534 = vpack.c.b16 %v1246, %v1242
    %v1535 = vpack.c.b16 %v1247, %v1243
    %v1536 = vpack.c.b16 %v1248, %v1244
    %v1537 = vpack.c.b16 %v1253, %v1249
    %v1538 = vpack.c.b16 %v1254, %v1250
    %v1539 = vpack.c.b16 %v1255, %v1251
    %v1540 = vpack.c.b16 %v1256, %v1252
    %v1541 = vpack.c.b16 %v1261, %v1257
    %v1542 = vpack.c.b16 %v1262, %v1258
    %v1543 = vpack.c.b16 %v1263, %v1259
    %v1544 = vpack.c.b16 %v1264, %v1260
    %v1545 = vpack.c.b16 %v1269, %v1265
    %v1546 = vpack.c.b16 %v1270, %v1266
    %v1547 = vpack.c.b16 %v1271, %v1267
    %v1548 = vpack.c.b16 %v1272, %v1268
    %v1549 = vpack.c.b16 %v1277, %v1273
    %v1550 = vpack.c.b16 %v1278, %v1274
    %v1551 = vpack.c.b16 %v1279, %v1275
    %v1552 = vpack.c.b16 %v1280, %v1276
    %v1553 = vpack.c.b16 %v1285, %v1281
    %v1554 = vpack.c.b16 %v1286, %v1282
    %v1555 = vpack.c.b16 %v1287, %v1283
    %v1556 = vpack.c.b16 %v1288, %v1284
    %v1557 = vpack.c.b16 %v1293, %v1289
    %v1558 = vpack.c.b16 %v1294, %v1290
    %v1559 = vpack.c.b16 %v1295, %v1291
    %v1560 = vpack.c.b16 %v1296, %v1292
    %v1561 = vpack.c.b16 %v1301, %v1297
    %v1562 = vpack.c.b16 %v1302, %v1298
    %v1563 = vpack.c.b16 %v1303, %v1299
    %v1564 = vpack.c.b16 %v1304, %v1300
    %v1565 = vpack.c.b16 %v1309, %v1305
    %v1566 = vpack.c.b16 %v1310, %v1306
    %v1567 = vpack.c.b16 %v1311, %v1307
    %v1568 = vpack.c.b16 %v1312, %v1308
    %1825 = vmatprep.subr.bf16.mxu0 %v1314
    %1826 = vmatpush1.bf16.msra.mxu0 %v1313
    %1827 = vmatprep.subr.bf16.mxu0 %v1318
    %1828 = vmatpush1.bf16.msra.mxu0 %v1317
    %1829 = vmatprep.subr.bf16.mxu0 %v1322
    %1830 = vmatpush1.bf16.msra.mxu0 %v1321
    %1831 = vmatprep.subr.bf16.mxu0 %v1326
    %1832 = vmatpush1.bf16.msra.mxu0 %v1325
    %1833 = vmatprep.subr.bf16.mxu0 %v1330
    %1834 = vmatpush1.bf16.msra.mxu0 %v1329
    %1835 = vmatprep.subr.bf16.mxu0 %v1334
    %1836 = vmatpush1.bf16.msra.mxu0 %v1333
    %1837 = vmatprep.subr.bf16.mxu0 %v1338
    %1838 = vmatpush1.bf16.msra.mxu0 %v1337
    %1839 = vmatprep.subr.bf16.mxu0 %v1342
    %1840 = vmatpush1.bf16.msra.mxu0 %v1341
    %1841 = vmatprep.subr.bf16.mxu0 %v1346
    %1842 = vmatpush1.bf16.msra.mxu0 %v1345
    %1843 = vmatprep.subr.bf16.mxu0 %v1350
    %1844 = vmatpush1.bf16.msra.mxu0 %v1349
    %1845 = vmatprep.subr.bf16.mxu0 %v1354
    %1846 = vmatpush1.bf16.msra.mxu0 %v1353
    %1847 = vmatprep.subr.bf16.mxu0 %v1358
    %1848 = vmatpush1.bf16.msra.mxu0 %v1357
    %1849 = vmatprep.subr.bf16.mxu0 %v1362
    %1850 = vmatpush1.bf16.msra.mxu0 %v1361
    %1851 = vmatprep.subr.bf16.mxu0 %v1366
    %1852 = vmatpush1.bf16.msra.mxu0 %v1365
    %1853 = vmatprep.subr.bf16.mxu0 %v1370
    %1854 = vmatpush1.bf16.msra.mxu0 %v1369
    %1855 = vmatprep.subr.bf16.mxu0 %v1374
    %1856 = vmatpush1.bf16.msra.mxu0 %v1373
    %1857 = vmatprep.mubr.bf16.mxu0 %v204
    %1858 = vmatmul.mubr.bf16.gmra.mrb[0].mxu0 %v203
    %v1859 = vpop.f32.mrb[0].mxu0
    %v1860 = vadd.f32 %v528, %v1859
    %v1861 = vpop.f32.mrb[0].mxu0
    %v1862 = vadd.f32 %v532, %v1861
    %v1863 = vpop.f32.mrb[0].mxu0
    %v1864 = vadd.f32 %v528, %v1863
    %v1865 = vpop.f32.mrb[0].mxu0
    %v1866 = vadd.f32 %v532, %v1865
    %1867 = vmatprep.mubr.bf16.mxu0 %v212
    %1868 = vmatmul.mubr.bf16.gmra.mrb[0].mxu0 %v211
    %v1869 = vpop.f32.mrb[0].mxu0
    %v1870 = vadd.f32 %v528, %v1869
    %v1871 = vpop.f32.mrb[0].mxu0
    %v1872 = vadd.f32 %v532, %v1871
    %v1873 = vpop.f32.mrb[0].mxu0
    %v1874 = vadd.f32 %v528, %v1873
    %v1875 = vpop.f32.mrb[0].mxu0
    %v1876 = vadd.f32 %v532, %v1875
    %1877 = vmatprep.mubr.bf16.mxu0 %v220
    %1878 = vmatmul.mubr.bf16.gmra.mrb[0].mxu0 %v219
    %v1879 = vpop.f32.mrb[0].mxu0
    %v1880 = vadd.f32 %v528, %v1879
    %v1881 = vpop.f32.mrb[0].mxu0
    %v1882 = vadd.f32 %v532, %v1881
    %v1883 = vpop.f32.mrb[0].mxu0
    %v1884 = vadd.f32 %v528, %v1883
    %v1885 = vpop.f32.mrb[0].mxu0
    %v1886 = vadd.f32 %v532, %v1885
    %1887 = vmatprep.mubr.bf16.mxu0 %v228
    %1888 = vmatmul.mubr.bf16.gmra.mrb[0].mxu0 %v227
    %v1889 = vpop.f32.mrb[0].mxu0
    %v1890 = vadd.f32 %v528, %v1889
    %v1891 = vpop.f32.mrb[0].mxu0
    %v1892 = vadd.f32 %v532, %v1891
    %v1893 = vpop.f32.mrb[0].mxu0
    %v1894 = vadd.f32 %v528, %v1893
    %v1895 = vpop.f32.mrb[0].mxu0
    %v1896 = vadd.f32 %v532, %v1895
    %1897 = vmatprep.mubr.bf16.mxu0 %v236
    %1898 = vmatmul.mubr.bf16.gmra.mrb[0].mxu0 %v235
    %v1899 = vpop.f32.mrb[0].mxu0
    %v1900 = vadd.f32 %v528, %v1899
    %v1901 = vpop.f32.mrb[0].mxu0
    %v1902 = vadd.f32 %v532, %v1901
    %v1903 = vpop.f32.mrb[0].mxu0
    %v1904 = vadd.f32 %v528, %v1903
    %v1905 = vpop.f32.mrb[0].mxu0
    %v1906 = vadd.f32 %v532, %v1905
    %1907 = vmatprep.mubr.bf16.mxu0 %v244
    %1908 = vmatmul.mubr.bf16.gmra.mrb[0].mxu0 %v243
    %v1909 = vpop.f32.mrb[0].mxu0
    %v1910 = vadd.f32 %v528, %v1909
    %v1911 = vpop.f32.mrb[0].mxu0
    %v1912 = vadd.f32 %v532, %v1911
    %v1913 = vpop.f32.mrb[0].mxu0
    %v1914 = vadd.f32 %v528, %v1913
    %v1915 = vpop.f32.mrb[0].mxu0
    %v1916 = vadd.f32 %v532, %v1915
    %1917 = vmatprep.mubr.bf16.mxu0 %v252
    %1918 = vmatmul.mubr.bf16.gmra.mrb[0].mxu0 %v251
    %v1919 = vpop.f32.mrb[0].mxu0
    %v1920 = vadd.f32 %v528, %v1919
    %v1921 = vpop.f32.mrb[0].mxu0
    %v1922 = vadd.f32 %v532, %v1921
    %v1923 = vpop.f32.mrb[0].mxu0
    %v1924 = vadd.f32 %v528, %v1923
    %v1925 = vpop.f32.mrb[0].mxu0
    %v1926 = vadd.f32 %v532, %v1925
    %1927 = vmatprep.mubr.bf16.mxu0 %v260
    %1928 = vmatmul.mubr.bf16.gmra.mrb[0].mxu0 %v259
    %v1929 = vpop.f32.mrb[0].mxu0
    %v1930 = vadd.f32 %v528, %v1929
    %v1931 = vpop.f32.mrb[0].mxu0
    %v1932 = vadd.f32 %v532, %v1931
    %v1933 = vpop.f32.mrb[0].mxu0
    %v1934 = vadd.f32 %v528, %v1933
    %v1935 = vpop.f32.mrb[0].mxu0
    %v1936 = vadd.f32 %v532, %v1935
    %1937 = vdwg.mxu0
    %1938 = vmatprep.subr.bf16.mxu0 %v1378
    %1939 = vmatpush1.bf16.msra.mxu0 %v1377
    %1940 = vmatprep.subr.bf16.mxu0 %v1382
    %1941 = vmatpush1.bf16.msra.mxu0 %v1381
    %1942 = vmatprep.subr.bf16.mxu0 %v1386
    %1943 = vmatpush1.bf16.msra.mxu0 %v1385
    %1944 = vmatprep.subr.bf16.mxu0 %v1390
    %1945 = vmatpush1.bf16.msra.mxu0 %v1389
    %1946 = vmatprep.subr.bf16.mxu0 %v1394
    %1947 = vmatpush1.bf16.msra.mxu0 %v1393
    %1948 = vmatprep.subr.bf16.mxu0 %v1398
    %1949 = vmatpush1.bf16.msra.mxu0 %v1397
    %1950 = vmatprep.subr.bf16.mxu0 %v1402
    %1951 = vmatpush1.bf16.msra.mxu0 %v1401
    %1952 = vmatprep.subr.bf16.mxu0 %v1406
    %1953 = vmatpush1.bf16.msra.mxu0 %v1405
    %1954 = vmatprep.subr.bf16.mxu0 %v1410
    %1955 = vmatpush1.bf16.msra.mxu0 %v1409
    %1956 = vmatprep.subr.bf16.mxu0 %v1414
    %1957 = vmatpush1.bf16.msra.mxu0 %v1413
    %1958 = vmatprep.subr.bf16.mxu0 %v1418
    %1959 = vmatpush1.bf16.msra.mxu0 %v1417
    %1960 = vmatprep.subr.bf16.mxu0 %v1422
    %1961 = vmatpush1.bf16.msra.mxu0 %v1421
    %1962 = vmatprep.subr.bf16.mxu0 %v1426
    %1963 = vmatpush1.bf16.msra.mxu0 %v1425
    %1964 = vmatprep.subr.bf16.mxu0 %v1430
    %1965 = vmatpush1.bf16.msra.mxu0 %v1429
    %1966 = vmatprep.subr.bf16.mxu0 %v1434
    %1967 = vmatpush1.bf16.msra.mxu0 %v1433
    %1968 = vmatprep.subr.bf16.mxu0 %v1438
    %1969 = vmatpush1.bf16.msra.mxu0 %v1437
    %1970 = vmatprep.mubr.bf16.mxu0 %v206
    %1971 = vmatmul.mubr.bf16.gmra.mrb[0].mxu0 %v205
    %v1972 = vpop.f32.mrb[0].mxu0
    %v1973 = vadd.f32 %v1860, %v1972
    %v1974 = vpop.f32.mrb[0].mxu0
    %v1975 = vadd.f32 %v1862, %v1974
    %v1976 = vpop.f32.mrb[0].mxu0
    %v1977 = vadd.f32 %v1864, %v1976
    %v1978 = vpop.f32.mrb[0].mxu0
    %v1979 = vadd.f32 %v1866, %v1978
    %1980 = vmatprep.mubr.bf16.mxu0 %v214
    %1981 = vmatmul.mubr.bf16.gmra.mrb[0].mxu0 %v213
    %v1982 = vpop.f32.mrb[0].mxu0
    %v1983 = vadd.f32 %v1870, %v1982
    %v1984 = vpop.f32.mrb[0].mxu0
    %v1985 = vadd.f32 %v1872, %v1984
    %v1986 = vpop.f32.mrb[0].mxu0
    %v1987 = vadd.f32 %v1874, %v1986
    %v1988 = vpop.f32.mrb[0].mxu0
    %v1989 = vadd.f32 %v1876, %v1988
    %1990 = vmatprep.mubr.bf16.mxu0 %v222
    %1991 = vmatmul.mubr.bf16.gmra.mrb[0].mxu0 %v221
    %v1992 = vpop.f32.mrb[0].mxu0
    %v1993 = vadd.f32 %v1880, %v1992
    %v1994 = vpop.f32.mrb[0].mxu0
    %v1995 = vadd.f32 %v1882, %v1994
    %v1996 = vpop.f32.mrb[0].mxu0
    %v1997 = vadd.f32 %v1884, %v1996
    %v1998 = vpop.f32.mrb[0].mxu0
    %v1999 = vadd.f32 %v1886, %v1998
    %2000 = vmatprep.mubr.bf16.mxu0 %v230
    %2001 = vmatmul.mubr.bf16.gmra.mrb[0].mxu0 %v229
    %v2002 = vpop.f32.mrb[0].mxu0
    %v2003 = vadd.f32 %v1890, %v2002
    %v2004 = vpop.f32.mrb[0].mxu0
    %v2005 = vadd.f32 %v1892, %v2004
    %v2006 = vpop.f32.mrb[0].mxu0
    %v2007 = vadd.f32 %v1894, %v2006
    %v2008 = vpop.f32.mrb[0].mxu0
    %v2009 = vadd.f32 %v1896, %v2008
    %2010 = vmatprep.mubr.bf16.mxu0 %v238
    %2011 = vmatmul.mubr.bf16.gmra.mrb[0].mxu0 %v237
    %v2012 = vpop.f32.mrb[0].mxu0
    %v2013 = vadd.f32 %v1900, %v2012
    %v2014 = vpop.f32.mrb[0].mxu0
    %v2015 = vadd.f32 %v1902, %v2014
    %v2016 = vpop.f32.mrb[0].mxu0
    %v2017 = vadd.f32 %v1904, %v2016
    %v2018 = vpop.f32.mrb[0].mxu0
    %v2019 = vadd.f32 %v1906, %v2018
    %2020 = vmatprep.mubr.bf16.mxu0 %v246
    %2021 = vmatmul.mubr.bf16.gmra.mrb[0].mxu0 %v245
    %v2022 = vpop.f32.mrb[0].mxu0
    %v2023 = vadd.f32 %v1910, %v2022
    %v2024 = vpop.f32.mrb[0].mxu0
    %v2025 = vadd.f32 %v1912, %v2024
    %v2026 = vpop.f32.mrb[0].mxu0
    %v2027 = vadd.f32 %v1914, %v2026
    %v2028 = vpop.f32.mrb[0].mxu0
    %v2029 = vadd.f32 %v1916, %v2028
    %2030 = vmatprep.mubr.bf16.mxu0 %v254
    %2031 = vmatmul.mubr.bf16.gmra.mrb[0].mxu0 %v253
    %v2032 = vpop.f32.mrb[0].mxu0
    %v2033 = vadd.f32 %v1920, %v2032
    %v2034 = vpop.f32.mrb[0].mxu0
    %v2035 = vadd.f32 %v1922, %v2034
    %v2036 = vpop.f32.mrb[0].mxu0
    %v2037 = vadd.f32 %v1924, %v2036
    %v2038 = vpop.f32.mrb[0].mxu0
    %v2039 = vadd.f32 %v1926, %v2038
    %2040 = vmatprep.mubr.bf16.mxu0 %v262
    %2041 = vmatmul.mubr.bf16.gmra.mrb[0].mxu0 %v261
    %v2042 = vpop.f32.mrb[0].mxu0
    %v2043 = vadd.f32 %v1930, %v2042
    %v2044 = vpop.f32.mrb[0].mxu0
    %v2045 = vadd.f32 %v1932, %v2044
    %v2046 = vpop.f32.mrb[0].mxu0
    %v2047 = vadd.f32 %v1934, %v2046
    %v2048 = vpop.f32.mrb[0].mxu0
    %v2049 = vadd.f32 %v1936, %v2048
    %2050 = vdwg.mxu0
    %2051 = vmatprep.subr.bf16.mxu0 %v1442
    %2052 = vmatpush1.bf16.msra.mxu0 %v1441
    %2053 = vmatprep.subr.bf16.mxu0 %v1446
    %2054 = vmatpush1.bf16.msra.mxu0 %v1445
    %2055 = vmatprep.subr.bf16.mxu0 %v1450
    %2056 = vmatpush1.bf16.msra.mxu0 %v1449
    %2057 = vmatprep.subr.bf16.mxu0 %v1454
    %2058 = vmatpush1.bf16.msra.mxu0 %v1453
    %2059 = vmatprep.subr.bf16.mxu0 %v1458
    %2060 = vmatpush1.bf16.msra.mxu0 %v1457
    %2061 = vmatprep.subr.bf16.mxu0 %v1462
    %2062 = vmatpush1.bf16.msra.mxu0 %v1461
    %2063 = vmatprep.subr.bf16.mxu0 %v1466
    %2064 = vmatpush1.bf16.msra.mxu0 %v1465
    %2065 = vmatprep.subr.bf16.mxu0 %v1470
    %2066 = vmatpush1.bf16.msra.mxu0 %v1469
    %2067 = vmatprep.subr.bf16.mxu0 %v1474
    %2068 = vmatpush1.bf16.msra.mxu0 %v1473
    %2069 = vmatprep.subr.bf16.mxu0 %v1478
    %2070 = vmatpush1.bf16.msra.mxu0 %v1477
    %2071 = vmatprep.subr.bf16.mxu0 %v1482
    %2072 = vmatpush1.bf16.msra.mxu0 %v1481
    %2073 = vmatprep.subr.bf16.mxu0 %v1486
    %2074 = vmatpush1.bf16.msra.mxu0 %v1485
    %2075 = vmatprep.subr.bf16.mxu0 %v1490
    %2076 = vmatpush1.bf16.msra.mxu0 %v1489
    %2077 = vmatprep.subr.bf16.mxu0 %v1494
    %2078 = vmatpush1.bf16.msra.mxu0 %v1493
    %2079 = vmatprep.subr.bf16.mxu0 %v1498
    %2080 = vmatpush1.bf16.msra.mxu0 %v1497
    %2081 = vmatprep.subr.bf16.mxu0 %v1502
    %2082 = vmatpush1.bf16.msra.mxu0 %v1501
    %2083 = vmatprep.mubr.bf16.mxu0 %v208
    %2084 = vmatmul.mubr.bf16.gmra.mrb[0].mxu0 %v207
    %v2085 = vpop.f32.mrb[0].mxu0
    %v2086 = vadd.f32 %v1973, %v2085
    %v2087 = vpop.f32.mrb[0].mxu0
    %v2088 = vadd.f32 %v1975, %v2087
    %v2089 = vpop.f32.mrb[0].mxu0
    %v2090 = vadd.f32 %v1977, %v2089
    %v2091 = vpop.f32.mrb[0].mxu0
    %v2092 = vadd.f32 %v1979, %v2091
    %2093 = vmatprep.mubr.bf16.mxu0 %v216
    %2094 = vmatmul.mubr.bf16.gmra.mrb[0].mxu0 %v215
    %v2095 = vpop.f32.mrb[0].mxu0
    %v2096 = vadd.f32 %v1983, %v2095
    %v2097 = vpop.f32.mrb[0].mxu0
    %v2098 = vadd.f32 %v1985, %v2097
    %v2099 = vpop.f32.mrb[0].mxu0
    %v2100 = vadd.f32 %v1987, %v2099
    %v2101 = vpop.f32.mrb[0].mxu0
    %v2102 = vadd.f32 %v1989, %v2101
    %2103 = vmatprep.mubr.bf16.mxu0 %v224
    %2104 = vmatmul.mubr.bf16.gmra.mrb[0].mxu0 %v223
    %v2105 = vpop.f32.mrb[0].mxu0
    %v2106 = vadd.f32 %v1993, %v2105
    %v2107 = vpop.f32.mrb[0].mxu0
    %v2108 = vadd.f32 %v1995, %v2107
    %v2109 = vpop.f32.mrb[0].mxu0
    %v2110 = vadd.f32 %v1997, %v2109
    %v2111 = vpop.f32.mrb[0].mxu0
    %v2112 = vadd.f32 %v1999, %v2111
    %2113 = vmatprep.mubr.bf16.mxu0 %v232
    %2114 = vmatmul.mubr.bf16.gmra.mrb[0].mxu0 %v231
    %v2115 = vpop.f32.mrb[0].mxu0
    %v2116 = vadd.f32 %v2003, %v2115
    %v2117 = vpop.f32.mrb[0].mxu0
    %v2118 = vadd.f32 %v2005, %v2117
    %v2119 = vpop.f32.mrb[0].mxu0
    %v2120 = vadd.f32 %v2007, %v2119
    %v2121 = vpop.f32.mrb[0].mxu0
    %v2122 = vadd.f32 %v2009, %v2121
    %2123 = vmatprep.mubr.bf16.mxu0 %v240
    %2124 = vmatmul.mubr.bf16.gmra.mrb[0].mxu0 %v239
    %v2125 = vpop.f32.mrb[0].mxu0
    %v2126 = vadd.f32 %v2013, %v2125
    %v2127 = vpop.f32.mrb[0].mxu0
    %v2128 = vadd.f32 %v2015, %v2127
    %v2129 = vpop.f32.mrb[0].mxu0
    %v2130 = vadd.f32 %v2017, %v2129
    %v2131 = vpop.f32.mrb[0].mxu0
    %v2132 = vadd.f32 %v2019, %v2131
    %2133 = vmatprep.mubr.bf16.mxu0 %v248
    %2134 = vmatmul.mubr.bf16.gmra.mrb[0].mxu0 %v247
    %v2135 = vpop.f32.mrb[0].mxu0
    %v2136 = vadd.f32 %v2023, %v2135
    %v2137 = vpop.f32.mrb[0].mxu0
    %v2138 = vadd.f32 %v2025, %v2137
    %v2139 = vpop.f32.mrb[0].mxu0
    %v2140 = vadd.f32 %v2027, %v2139
    %v2141 = vpop.f32.mrb[0].mxu0
    %v2142 = vadd.f32 %v2029, %v2141
    %2143 = vmatprep.mubr.bf16.mxu0 %v256
    %2144 = vmatmul.mubr.bf16.gmra.mrb[0].mxu0 %v255
    %v2145 = vpop.f32.mrb[0].mxu0
    %v2146 = vadd.f32 %v2033, %v2145
    %v2147 = vpop.f32.mrb[0].mxu0
    %v2148 = vadd.f32 %v2035, %v2147
    %v2149 = vpop.f32.mrb[0].mxu0
    %v2150 = vadd.f32 %v2037, %v2149
    %v2151 = vpop.f32.mrb[0].mxu0
    %v2152 = vadd.f32 %v2039, %v2151
    %2153 = vmatprep.mubr.bf16.mxu0 %v264
    %2154 = vmatmul.mubr.bf16.gmra.mrb[0].mxu0 %v263
    %v2155 = vpop.f32.mrb[0].mxu0
    %v2156 = vadd.f32 %v2043, %v2155
    %v2157 = vpop.f32.mrb[0].mxu0
    %v2158 = vadd.f32 %v2045, %v2157
    %v2159 = vpop.f32.mrb[0].mxu0
    %v2160 = vadd.f32 %v2047, %v2159
    %v2161 = vpop.f32.mrb[0].mxu0
    %v2162 = vadd.f32 %v2049, %v2161
    %2163 = vdwg.mxu0
    %2164 = vmatprep.subr.bf16.mxu0 %v1506
    %2165 = vmatpush1.bf16.msra.mxu0 %v1505
    %2166 = vmatprep.subr.bf16.mxu0 %v1510
    %2167 = vmatpush1.bf16.msra.mxu0 %v1509
    %2168 = vmatprep.subr.bf16.mxu0 %v1514
    %2169 = vmatpush1.bf16.msra.mxu0 %v1513
    %2170 = vmatprep.subr.bf16.mxu0 %v1518
    %2171 = vmatpush1.bf16.msra.mxu0 %v1517
    %2172 = vmatprep.subr.bf16.mxu0 %v1522
    %2173 = vmatpush1.bf16.msra.mxu0 %v1521
    %2174 = vmatprep.subr.bf16.mxu0 %v1526
    %2175 = vmatpush1.bf16.msra.mxu0 %v1525
    %2176 = vmatprep.subr.bf16.mxu0 %v1530
    %2177 = vmatpush1.bf16.msra.mxu0 %v1529
    %2178 = vmatprep.subr.bf16.mxu0 %v1534
    %2179 = vmatpush1.bf16.msra.mxu0 %v1533
    %2180 = vmatprep.subr.bf16.mxu0 %v1538
    %2181 = vmatpush1.bf16.msra.mxu0 %v1537
    %2182 = vmatprep.subr.bf16.mxu0 %v1542
    %2183 = vmatpush1.bf16.msra.mxu0 %v1541
    %2184 = vmatprep.subr.bf16.mxu0 %v1546
    %2185 = vmatpush1.bf16.msra.mxu0 %v1545
    %2186 = vmatprep.subr.bf16.mxu0 %v1550
    %2187 = vmatpush1.bf16.msra.mxu0 %v1549
    %2188 = vmatprep.subr.bf16.mxu0 %v1554
    %2189 = vmatpush1.bf16.msra.mxu0 %v1553
    %2190 = vmatprep.subr.bf16.mxu0 %v1558
    %2191 = vmatpush1.bf16.msra.mxu0 %v1557
    %2192 = vmatprep.subr.bf16.mxu0 %v1562
    %2193 = vmatpush1.bf16.msra.mxu0 %v1561
    %2194 = vmatprep.subr.bf16.mxu0 %v1566
    %2195 = vmatpush1.bf16.msra.mxu0 %v1565
    %2196 = vmatprep.mubr.bf16.mxu0 %v210
    %2197 = vmatmul.mubr.bf16.gmra.mrb[0].mxu0 %v209
    %v2198 = vpop.f32.mrb[0].mxu0
    %v2199 = vadd.f32 %v2086, %v2198
    %v2200 = vpop.f32.mrb[0].mxu0
    %v2201 = vadd.f32 %v2088, %v2200
    %v2202 = vpop.f32.mrb[0].mxu0
    %v2203 = vadd.f32 %v2090, %v2202
    %v2204 = vpop.f32.mrb[0].mxu0
    %v2205 = vadd.f32 %v2092, %v2204
    %2206 = vmatprep.mubr.bf16.mxu0 %v218
    %2207 = vmatmul.mubr.bf16.gmra.mrb[0].mxu0 %v217
    %v2208 = vpop.f32.mrb[0].mxu0
    %v2209 = vadd.f32 %v2096, %v2208
    %v2210 = vpop.f32.mrb[0].mxu0
    %v2211 = vadd.f32 %v2098, %v2210
    %v2212 = vpop.f32.mrb[0].mxu0
    %v2213 = vadd.f32 %v2100, %v2212
    %v2214 = vpop.f32.mrb[0].mxu0
    %v2215 = vadd.f32 %v2102, %v2214
    %2216 = vmatprep.mubr.bf16.mxu0 %v226
    %2217 = vmatmul.mubr.bf16.gmra.mrb[0].mxu0 %v225
    %v2218 = vpop.f32.mrb[0].mxu0
    %v2219 = vadd.f32 %v2106, %v2218
    %v2220 = vpop.f32.mrb[0].mxu0
    %v2221 = vadd.f32 %v2108, %v2220
    %v2222 = vpop.f32.mrb[0].mxu0
    %v2223 = vadd.f32 %v2110, %v2222
    %v2224 = vpop.f32.mrb[0].mxu0
    %v2225 = vadd.f32 %v2112, %v2224
    %2226 = vmatprep.mubr.bf16.mxu0 %v234
    %2227 = vmatmul.mubr.bf16.gmra.mrb[0].mxu0 %v233
    %v2228 = vpop.f32.mrb[0].mxu0
    %v2229 = vadd.f32 %v2116, %v2228
    %v2230 = vpop.f32.mrb[0].mxu0
    %v2231 = vadd.f32 %v2118, %v2230
    %v2232 = vpop.f32.mrb[0].mxu0
    %v2233 = vadd.f32 %v2120, %v2232
    %v2234 = vpop.f32.mrb[0].mxu0
    %v2235 = vadd.f32 %v2122, %v2234
    %2236 = vmatprep.mubr.bf16.mxu0 %v242
    %2237 = vmatmul.mubr.bf16.gmra.mrb[0].mxu0 %v241
    %v2238 = vpop.f32.mrb[0].mxu0
    %v2239 = vadd.f32 %v2126, %v2238
    %v2240 = vpop.f32.mrb[0].mxu0
    %v2241 = vadd.f32 %v2128, %v2240
    %v2242 = vpop.f32.mrb[0].mxu0
    %v2243 = vadd.f32 %v2130, %v2242
    %v2244 = vpop.f32.mrb[0].mxu0
    %v2245 = vadd.f32 %v2132, %v2244
    %2246 = vmatprep.mubr.bf16.mxu0 %v250
    %2247 = vmatmul.mubr.bf16.gmra.mrb[0].mxu0 %v249
    %v2248 = vpop.f32.mrb[0].mxu0
    %v2249 = vadd.f32 %v2136, %v2248
    %v2250 = vpop.f32.mrb[0].mxu0
    %v2251 = vadd.f32 %v2138, %v2250
    %v2252 = vpop.f32.mrb[0].mxu0
    %v2253 = vadd.f32 %v2140, %v2252
    %v2254 = vpop.f32.mrb[0].mxu0
    %v2255 = vadd.f32 %v2142, %v2254
    %2256 = vmatprep.mubr.bf16.mxu0 %v258
    %2257 = vmatmul.mubr.bf16.gmra.mrb[0].mxu0 %v257
    %v2258 = vpop.f32.mrb[0].mxu0
    %v2259 = vadd.f32 %v2146, %v2258
    %v2260 = vpop.f32.mrb[0].mxu0
    %v2261 = vadd.f32 %v2148, %v2260
    %v2262 = vpop.f32.mrb[0].mxu0
    %v2263 = vadd.f32 %v2150, %v2262
    %v2264 = vpop.f32.mrb[0].mxu0
    %v2265 = vadd.f32 %v2152, %v2264
    %2266 = vmatprep.mubr.bf16.mxu0 %v266
    %2267 = vmatmul.mubr.bf16.gmra.mrb[0].mxu0 %v265
    %v2268 = vpop.f32.mrb[0].mxu0
    %v2269 = vadd.f32 %v2156, %v2268
    %v2270 = vpop.f32.mrb[0].mxu0
    %v2271 = vadd.f32 %v2158, %v2270
    %v2272 = vpop.f32.mrb[0].mxu0
    %v2273 = vadd.f32 %v2160, %v2272
    %v2274 = vpop.f32.mrb[0].mxu0
    %v2275 = vadd.f32 %v2162, %v2274
    %2276 = vdwg.mxu0
    %2277 = vmatprep.subr.bf16.mxu0 %v1316
    %2278 = vmatpush1.bf16.msra.mxu0 %v1315
    %2279 = vmatprep.subr.bf16.mxu0 %v1320
    %2280 = vmatpush1.bf16.msra.mxu0 %v1319
    %2281 = vmatprep.subr.bf16.mxu0 %v1324
    %2282 = vmatpush1.bf16.msra.mxu0 %v1323
    %2283 = vmatprep.subr.bf16.mxu0 %v1328
    %2284 = vmatpush1.bf16.msra.mxu0 %v1327
    %2285 = vmatprep.subr.bf16.mxu0 %v1332
    %2286 = vmatpush1.bf16.msra.mxu0 %v1331
    %2287 = vmatprep.subr.bf16.mxu0 %v1336
    %2288 = vmatpush1.bf16.msra.mxu0 %v1335
    %2289 = vmatprep.subr.bf16.mxu0 %v1340
    %2290 = vmatpush1.bf16.msra.mxu0 %v1339
    %2291 = vmatprep.subr.bf16.mxu0 %v1344
    %2292 = vmatpush1.bf16.msra.mxu0 %v1343
    %2293 = vmatprep.subr.bf16.mxu0 %v1348
    %2294 = vmatpush1.bf16.msra.mxu0 %v1347
    %2295 = vmatprep.subr.bf16.mxu0 %v1352
    %2296 = vmatpush1.bf16.msra.mxu0 %v1351
    %2297 = vmatprep.subr.bf16.mxu0 %v1356
    %2298 = vmatpush1.bf16.msra.mxu0 %v1355
    %2299 = vmatprep.subr.bf16.mxu0 %v1360
    %2300 = vmatpush1.bf16.msra.mxu0 %v1359
    %2301 = vmatprep.subr.bf16.mxu0 %v1364
    %2302 = vmatpush1.bf16.msra.mxu0 %v1363
    %2303 = vmatprep.subr.bf16.mxu0 %v1368
    %2304 = vmatpush1.bf16.msra.mxu0 %v1367
    %2305 = vmatprep.subr.bf16.mxu0 %v1372
    %2306 = vmatpush1.bf16.msra.mxu0 %v1371
    %2307 = vmatprep.subr.bf16.mxu0 %v1376
    %2308 = vmatpush1.bf16.msra.mxu0 %v1375
    %2309 = vmatprep.mubr.bf16.mxu0 %v204
    %2310 = vmatmul.mubr.bf16.gmra.mrb[0].mxu0 %v203
    %v2311 = vpop.f32.mrb[0].mxu0
    %v2312 = vadd.f32 %v536, %v2311
    %v2313 = vpop.f32.mrb[0].mxu0
    %v2314 = vadd.f32 %v540, %v2313
    %v2315 = vpop.f32.mrb[0].mxu0
    %v2316 = vadd.f32 %v536, %v2315
    %v2317 = vpop.f32.mrb[0].mxu0
    %v2318 = vadd.f32 %v540, %v2317
    %2319 = vmatprep.mubr.bf16.mxu0 %v212
    %2320 = vmatmul.mubr.bf16.gmra.mrb[0].mxu0 %v211
    %v2321 = vpop.f32.mrb[0].mxu0
    %v2322 = vadd.f32 %v536, %v2321
    %v2323 = vpop.f32.mrb[0].mxu0
    %v2324 = vadd.f32 %v540, %v2323
    %v2325 = vpop.f32.mrb[0].mxu0
    %v2326 = vadd.f32 %v536, %v2325
    %v2327 = vpop.f32.mrb[0].mxu0
    %v2328 = vadd.f32 %v540, %v2327
    %2329 = vmatprep.mubr.bf16.mxu0 %v220
    %2330 = vmatmul.mubr.bf16.gmra.mrb[0].mxu0 %v219
    %v2331 = vpop.f32.mrb[0].mxu0
    %v2332 = vadd.f32 %v536, %v2331
    %v2333 = vpop.f32.mrb[0].mxu0
    %v2334 = vadd.f32 %v540, %v2333
    %v2335 = vpop.f32.mrb[0].mxu0
    %v2336 = vadd.f32 %v536, %v2335
    %v2337 = vpop.f32.mrb[0].mxu0
    %v2338 = vadd.f32 %v540, %v2337
    %2339 = vmatprep.mubr.bf16.mxu0 %v228
    %2340 = vmatmul.mubr.bf16.gmra.mrb[0].mxu0 %v227
    %v2341 = vpop.f32.mrb[0].mxu0
    %v2342 = vadd.f32 %v536, %v2341
    %v2343 = vpop.f32.mrb[0].mxu0
    %v2344 = vadd.f32 %v540, %v2343
    %v2345 = vpop.f32.mrb[0].mxu0
    %v2346 = vadd.f32 %v536, %v2345
    %v2347 = vpop.f32.mrb[0].mxu0
    %v2348 = vadd.f32 %v540, %v2347
    %2349 = vmatprep.mubr.bf16.mxu0 %v236
    %2350 = vmatmul.mubr.bf16.gmra.mrb[0].mxu0 %v235
    %v2351 = vpop.f32.mrb[0].mxu0
    %v2352 = vadd.f32 %v536, %v2351
    %v2353 = vpop.f32.mrb[0].mxu0
    %v2354 = vadd.f32 %v540, %v2353
    %v2355 = vpop.f32.mrb[0].mxu0
    %v2356 = vadd.f32 %v536, %v2355
    %v2357 = vpop.f32.mrb[0].mxu0
    %v2358 = vadd.f32 %v540, %v2357
    %2359 = vmatprep.mubr.bf16.mxu0 %v244
    %2360 = vmatmul.mubr.bf16.gmra.mrb[0].mxu0 %v243
    %v2361 = vpop.f32.mrb[0].mxu0
    %v2362 = vadd.f32 %v536, %v2361
    %v2363 = vpop.f32.mrb[0].mxu0
    %v2364 = vadd.f32 %v540, %v2363
    %v2365 = vpop.f32.mrb[0].mxu0
    %v2366 = vadd.f32 %v536, %v2365
    %v2367 = vpop.f32.mrb[0].mxu0
    %v2368 = vadd.f32 %v540, %v2367
    %2369 = vmatprep.mubr.bf16.mxu0 %v252
    %2370 = vmatmul.mubr.bf16.gmra.mrb[0].mxu0 %v251
    %v2371 = vpop.f32.mrb[0].mxu0
    %v2372 = vadd.f32 %v536, %v2371
    %v2373 = vpop.f32.mrb[0].mxu0
    %v2374 = vadd.f32 %v540, %v2373
    %v2375 = vpop.f32.mrb[0].mxu0
    %v2376 = vadd.f32 %v536, %v2375
    %v2377 = vpop.f32.mrb[0].mxu0
    %v2378 = vadd.f32 %v540, %v2377
    %2379 = vmatprep.mubr.bf16.mxu0 %v260
    %2380 = vmatmul.mubr.bf16.gmra.mrb[0].mxu0 %v259
    %v2381 = vpop.f32.mrb[0].mxu0
    %v2382 = vadd.f32 %v536, %v2381
    %v2383 = vpop.f32.mrb[0].mxu0
    %v2384 = vadd.f32 %v540, %v2383
    %v2385 = vpop.f32.mrb[0].mxu0
    %v2386 = vadd.f32 %v536, %v2385
    %v2387 = vpop.f32.mrb[0].mxu0
    %v2388 = vadd.f32 %v540, %v2387
    %2389 = vdwg.mxu0
    %2390 = vmatprep.subr.bf16.mxu0 %v1380
    %2391 = vmatpush1.bf16.msra.mxu0 %v1379
    %2392 = vmatprep.subr.bf16.mxu0 %v1384
    %2393 = vmatpush1.bf16.msra.mxu0 %v1383
    %2394 = vmatprep.subr.bf16.mxu0 %v1388
    %2395 = vmatpush1.bf16.msra.mxu0 %v1387
    %2396 = vmatprep.subr.bf16.mxu0 %v1392
    %2397 = vmatpush1.bf16.msra.mxu0 %v1391
    %2398 = vmatprep.subr.bf16.mxu0 %v1396
    %2399 = vmatpush1.bf16.msra.mxu0 %v1395
    %2400 = vmatprep.subr.bf16.mxu0 %v1400
    %2401 = vmatpush1.bf16.msra.mxu0 %v1399
    %2402 = vmatprep.subr.bf16.mxu0 %v1404
    %2403 = vmatpush1.bf16.msra.mxu0 %v1403
    %2404 = vmatprep.subr.bf16.mxu0 %v1408
    %2405 = vmatpush1.bf16.msra.mxu0 %v1407
    %2406 = vmatprep.subr.bf16.mxu0 %v1412
    %2407 = vmatpush1.bf16.msra.mxu0 %v1411
    %2408 = vmatprep.subr.bf16.mxu0 %v1416
    %2409 = vmatpush1.bf16.msra.mxu0 %v1415
    %2410 = vmatprep.subr.bf16.mxu0 %v1420
    %2411 = vmatpush1.bf16.msra.mxu0 %v1419
    %2412 = vmatprep.subr.bf16.mxu0 %v1424
    %2413 = vmatpush1.bf16.msra.mxu0 %v1423
    %2414 = vmatprep.subr.bf16.mxu0 %v1428
    %2415 = vmatpush1.bf16.msra.mxu0 %v1427
    %2416 = vmatprep.subr.bf16.mxu0 %v1432
    %2417 = vmatpush1.bf16.msra.mxu0 %v1431
    %2418 = vmatprep.subr.bf16.mxu0 %v1436
    %2419 = vmatpush1.bf16.msra.mxu0 %v1435
    %2420 = vmatprep.subr.bf16.mxu0 %v1440
    %2421 = vmatpush1.bf16.msra.mxu0 %v1439
    %2422 = vmatprep.mubr.bf16.mxu0 %v206
    %2423 = vmatmul.mubr.bf16.gmra.mrb[0].mxu0 %v205
    %v2424 = vpop.f32.mrb[0].mxu0
    %v2425 = vadd.f32 %v2312, %v2424
    %v2426 = vpop.f32.mrb[0].mxu0
    %v2427 = vadd.f32 %v2314, %v2426
    %v2428 = vpop.f32.mrb[0].mxu0
    %v2429 = vadd.f32 %v2316, %v2428
    %v2430 = vpop.f32.mrb[0].mxu0
    %v2431 = vadd.f32 %v2318, %v2430
    %2432 = vmatprep.mubr.bf16.mxu0 %v214
    %2433 = vmatmul.mubr.bf16.gmra.mrb[0].mxu0 %v213
    %v2434 = vpop.f32.mrb[0].mxu0
    %v2435 = vadd.f32 %v2322, %v2434
    %v2436 = vpop.f32.mrb[0].mxu0
    %v2437 = vadd.f32 %v2324, %v2436
    %v2438 = vpop.f32.mrb[0].mxu0
    %v2439 = vadd.f32 %v2326, %v2438
    %v2440 = vpop.f32.mrb[0].mxu0
    %v2441 = vadd.f32 %v2328, %v2440
    %2442 = vmatprep.mubr.bf16.mxu0 %v222
    %2443 = vmatmul.mubr.bf16.gmra.mrb[0].mxu0 %v221
    %v2444 = vpop.f32.mrb[0].mxu0
    %v2445 = vadd.f32 %v2332, %v2444
    %v2446 = vpop.f32.mrb[0].mxu0
    %v2447 = vadd.f32 %v2334, %v2446
    %v2448 = vpop.f32.mrb[0].mxu0
    %v2449 = vadd.f32 %v2336, %v2448
    %v2450 = vpop.f32.mrb[0].mxu0
    %v2451 = vadd.f32 %v2338, %v2450
    %2452 = vmatprep.mubr.bf16.mxu0 %v230
    %2453 = vmatmul.mubr.bf16.gmra.mrb[0].mxu0 %v229
    %v2454 = vpop.f32.mrb[0].mxu0
    %v2455 = vadd.f32 %v2342, %v2454
    %v2456 = vpop.f32.mrb[0].mxu0
    %v2457 = vadd.f32 %v2344, %v2456
    %v2458 = vpop.f32.mrb[0].mxu0
    %v2459 = vadd.f32 %v2346, %v2458
    %v2460 = vpop.f32.mrb[0].mxu0
    %v2461 = vadd.f32 %v2348, %v2460
    %2462 = vmatprep.mubr.bf16.mxu0 %v238
    %2463 = vmatmul.mubr.bf16.gmra.mrb[0].mxu0 %v237
    %v2464 = vpop.f32.mrb[0].mxu0
    %v2465 = vadd.f32 %v2352, %v2464
    %v2466 = vpop.f32.mrb[0].mxu0
    %v2467 = vadd.f32 %v2354, %v2466
    %v2468 = vpop.f32.mrb[0].mxu0
    %v2469 = vadd.f32 %v2356, %v2468
    %v2470 = vpop.f32.mrb[0].mxu0
    %v2471 = vadd.f32 %v2358, %v2470
    %2472 = vmatprep.mubr.bf16.mxu0 %v246
    %2473 = vmatmul.mubr.bf16.gmra.mrb[0].mxu0 %v245
    %v2474 = vpop.f32.mrb[0].mxu0
    %v2475 = vadd.f32 %v2362, %v2474
    %v2476 = vpop.f32.mrb[0].mxu0
    %v2477 = vadd.f32 %v2364, %v2476
    %v2478 = vpop.f32.mrb[0].mxu0
    %v2479 = vadd.f32 %v2366, %v2478
    %v2480 = vpop.f32.mrb[0].mxu0
    %v2481 = vadd.f32 %v2368, %v2480
    %2482 = vmatprep.mubr.bf16.mxu0 %v254
    %2483 = vmatmul.mubr.bf16.gmra.mrb[0].mxu0 %v253
    %v2484 = vpop.f32.mrb[0].mxu0
    %v2485 = vadd.f32 %v2372, %v2484
    %v2486 = vpop.f32.mrb[0].mxu0
    %v2487 = vadd.f32 %v2374, %v2486
    %v2488 = vpop.f32.mrb[0].mxu0
    %v2489 = vadd.f32 %v2376, %v2488
    %v2490 = vpop.f32.mrb[0].mxu0
    %v2491 = vadd.f32 %v2378, %v2490
    %2492 = vmatprep.mubr.bf16.mxu0 %v262
    %2493 = vmatmul.mubr.bf16.gmra.mrb[0].mxu0 %v261
    %v2494 = vpop.f32.mrb[0].mxu0
    %v2495 = vadd.f32 %v2382, %v2494
    %v2496 = vpop.f32.mrb[0].mxu0
    %v2497 = vadd.f32 %v2384, %v2496
    %v2498 = vpop.f32.mrb[0].mxu0
    %v2499 = vadd.f32 %v2386, %v2498
    %v2500 = vpop.f32.mrb[0].mxu0
    %v2501 = vadd.f32 %v2388, %v2500
    %2502 = vdwg.mxu0
    %2503 = vmatprep.subr.bf16.mxu0 %v1444
    %2504 = vmatpush1.bf16.msra.mxu0 %v1443
    %2505 = vmatprep.subr.bf16.mxu0 %v1448
    %2506 = vmatpush1.bf16.msra.mxu0 %v1447
    %2507 = vmatprep.subr.bf16.mxu0 %v1452
    %2508 = vmatpush1.bf16.msra.mxu0 %v1451
    %2509 = vmatprep.subr.bf16.mxu0 %v1456
    %2510 = vmatpush1.bf16.msra.mxu0 %v1455
    %2511 = vmatprep.subr.bf16.mxu0 %v1460
    %2512 = vmatpush1.bf16.msra.mxu0 %v1459
    %2513 = vmatprep.subr.bf16.mxu0 %v1464
    %2514 = vmatpush1.bf16.msra.mxu0 %v1463
    %2515 = vmatprep.subr.bf16.mxu0 %v1468
    %2516 = vmatpush1.bf16.msra.mxu0 %v1467
    %2517 = vmatprep.subr.bf16.mxu0 %v1472
    %2518 = vmatpush1.bf16.msra.mxu0 %v1471
    %2519 = vmatprep.subr.bf16.mxu0 %v1476
    %2520 = vmatpush1.bf16.msra.mxu0 %v1475
    %2521 = vmatprep.subr.bf16.mxu0 %v1480
    %2522 = vmatpush1.bf16.msra.mxu0 %v1479
    %2523 = vmatprep.subr.bf16.mxu0 %v1484
    %2524 = vmatpush1.bf16.msra.mxu0 %v1483
    %2525 = vmatprep.subr.bf16.mxu0 %v1488
    %2526 = vmatpush1.bf16.msra.mxu0 %v1487
    %2527 = vmatprep.subr.bf16.mxu0 %v1492
    %2528 = vmatpush1.bf16.msra.mxu0 %v1491
    %2529 = vmatprep.subr.bf16.mxu0 %v1496
    %2530 = vmatpush1.bf16.msra.mxu0 %v1495
    %2531 = vmatprep.subr.bf16.mxu0 %v1500
    %2532 = vmatpush1.bf16.msra.mxu0 %v1499
    %2533 = vmatprep.subr.bf16.mxu0 %v1504
    %2534 = vmatpush1.bf16.msra.mxu0 %v1503
    %2535 = vmatprep.mubr.bf16.mxu0 %v208
    %2536 = vmatmul.mubr.bf16.gmra.mrb[0].mxu0 %v207
    %v2537 = vpop.f32.mrb[0].mxu0
    %v2538 = vadd.f32 %v2425, %v2537
    %v2539 = vpop.f32.mrb[0].mxu0
    %v2540 = vadd.f32 %v2427, %v2539
    %v2541 = vpop.f32.mrb[0].mxu0
    %v2542 = vadd.f32 %v2429, %v2541
    %v2543 = vpop.f32.mrb[0].mxu0
    %v2544 = vadd.f32 %v2431, %v2543
    %2545 = vmatprep.mubr.bf16.mxu0 %v216
    %2546 = vmatmul.mubr.bf16.gmra.mrb[0].mxu0 %v215
    %v2547 = vpop.f32.mrb[0].mxu0
    %v2548 = vadd.f32 %v2435, %v2547
    %v2549 = vpop.f32.mrb[0].mxu0
    %v2550 = vadd.f32 %v2437, %v2549
    %v2551 = vpop.f32.mrb[0].mxu0
    %v2552 = vadd.f32 %v2439, %v2551
    %v2553 = vpop.f32.mrb[0].mxu0
    %v2554 = vadd.f32 %v2441, %v2553
    %2555 = vmatprep.mubr.bf16.mxu0 %v224
    %2556 = vmatmul.mubr.bf16.gmra.mrb[0].mxu0 %v223
    %v2557 = vpop.f32.mrb[0].mxu0
    %v2558 = vadd.f32 %v2445, %v2557
    %v2559 = vpop.f32.mrb[0].mxu0
    %v2560 = vadd.f32 %v2447, %v2559
    %v2561 = vpop.f32.mrb[0].mxu0
    %v2562 = vadd.f32 %v2449, %v2561
    %v2563 = vpop.f32.mrb[0].mxu0
    %v2564 = vadd.f32 %v2451, %v2563
    %2565 = vmatprep.mubr.bf16.mxu0 %v232
    %2566 = vmatmul.mubr.bf16.gmra.mrb[0].mxu0 %v231
    %v2567 = vpop.f32.mrb[0].mxu0
    %v2568 = vadd.f32 %v2455, %v2567
    %v2569 = vpop.f32.mrb[0].mxu0
    %v2570 = vadd.f32 %v2457, %v2569
    %v2571 = vpop.f32.mrb[0].mxu0
    %v2572 = vadd.f32 %v2459, %v2571
    %v2573 = vpop.f32.mrb[0].mxu0
    %v2574 = vadd.f32 %v2461, %v2573
    %2575 = vmatprep.mubr.bf16.mxu0 %v240
    %2576 = vmatmul.mubr.bf16.gmra.mrb[0].mxu0 %v239
    %v2577 = vpop.f32.mrb[0].mxu0
    %v2578 = vadd.f32 %v2465, %v2577
    %v2579 = vpop.f32.mrb[0].mxu0
    %v2580 = vadd.f32 %v2467, %v2579
    %v2581 = vpop.f32.mrb[0].mxu0
    %v2582 = vadd.f32 %v2469, %v2581
    %v2583 = vpop.f32.mrb[0].mxu0
    %v2584 = vadd.f32 %v2471, %v2583
    %2585 = vmatprep.mubr.bf16.mxu0 %v248
    %2586 = vmatmul.mubr.bf16.gmra.mrb[0].mxu0 %v247
    %v2587 = vpop.f32.mrb[0].mxu0
    %v2588 = vadd.f32 %v2475, %v2587
    %v2589 = vpop.f32.mrb[0].mxu0
    %v2590 = vadd.f32 %v2477, %v2589
    %v2591 = vpop.f32.mrb[0].mxu0
    %v2592 = vadd.f32 %v2479, %v2591
    %v2593 = vpop.f32.mrb[0].mxu0
    %v2594 = vadd.f32 %v2481, %v2593
    %2595 = vmatprep.mubr.bf16.mxu0 %v256
    %2596 = vmatmul.mubr.bf16.gmra.mrb[0].mxu0 %v255
    %v2597 = vpop.f32.mrb[0].mxu0
    %v2598 = vadd.f32 %v2485, %v2597
    %v2599 = vpop.f32.mrb[0].mxu0
    %v2600 = vadd.f32 %v2487, %v2599
    %v2601 = vpop.f32.mrb[0].mxu0
    %v2602 = vadd.f32 %v2489, %v2601
    %v2603 = vpop.f32.mrb[0].mxu0
    %v2604 = vadd.f32 %v2491, %v2603
    %2605 = vmatprep.mubr.bf16.mxu0 %v264
    %2606 = vmatmul.mubr.bf16.gmra.mrb[0].mxu0 %v263
    %v2607 = vpop.f32.mrb[0].mxu0
    %v2608 = vadd.f32 %v2495, %v2607
    %v2609 = vpop.f32.mrb[0].mxu0
    %v2610 = vadd.f32 %v2497, %v2609
    %v2611 = vpop.f32.mrb[0].mxu0
    %v2612 = vadd.f32 %v2499, %v2611
    %v2613 = vpop.f32.mrb[0].mxu0
    %v2614 = vadd.f32 %v2501, %v2613
    %2615 = vdwg.mxu0
    %2616 = vmatprep.subr.bf16.mxu0 %v1508
    %2617 = vmatpush1.bf16.msra.mxu0 %v1507
    %2618 = vmatprep.subr.bf16.mxu0 %v1512
    %2619 = vmatpush1.bf16.msra.mxu0 %v1511
    %2620 = vmatprep.subr.bf16.mxu0 %v1516
    %2621 = vmatpush1.bf16.msra.mxu0 %v1515
    %2622 = vmatprep.subr.bf16.mxu0 %v1520
    %2623 = vmatpush1.bf16.msra.mxu0 %v1519
    %2624 = vmatprep.subr.bf16.mxu0 %v1524
    %2625 = vmatpush1.bf16.msra.mxu0 %v1523
    %2626 = vmatprep.subr.bf16.mxu0 %v1528
    %2627 = vmatpush1.bf16.msra.mxu0 %v1527
    %2628 = vmatprep.subr.bf16.mxu0 %v1532
    %2629 = vmatpush1.bf16.msra.mxu0 %v1531
    %2630 = vmatprep.subr.bf16.mxu0 %v1536
    %2631 = vmatpush1.bf16.msra.mxu0 %v1535
    %2632 = vmatprep.subr.bf16.mxu0 %v1540
    %2633 = vmatpush1.bf16.msra.mxu0 %v1539
    %2634 = vmatprep.subr.bf16.mxu0 %v1544
    %2635 = vmatpush1.bf16.msra.mxu0 %v1543
    %2636 = vmatprep.subr.bf16.mxu0 %v1548
    %2637 = vmatpush1.bf16.msra.mxu0 %v1547
    %2638 = vmatprep.subr.bf16.mxu0 %v1552
    %2639 = vmatpush1.bf16.msra.mxu0 %v1551
    %2640 = vmatprep.subr.bf16.mxu0 %v1556
    %2641 = vmatpush1.bf16.msra.mxu0 %v1555
    %2642 = vmatprep.subr.bf16.mxu0 %v1560
    %2643 = vmatpush1.bf16.msra.mxu0 %v1559
    %2644 = vmatprep.subr.bf16.mxu0 %v1564
    %2645 = vmatpush1.bf16.msra.mxu0 %v1563
    %2646 = vmatprep.subr.bf16.mxu0 %v1568
    %2647 = vmatpush1.bf16.msra.mxu0 %v1567
    %2648 = vmatprep.mubr.bf16.mxu0 %v210
    %2649 = vmatmul.mubr.bf16.gmra.mrb[0].mxu0 %v209
    %v2650 = vpop.f32.mrb[0].mxu0
    %v2651 = vadd.f32 %v2538, %v2650
    %v2652 = vpop.f32.mrb[0].mxu0
    %v2653 = vadd.f32 %v2540, %v2652
    %v2654 = vpop.f32.mrb[0].mxu0
    %v2655 = vadd.f32 %v2542, %v2654
    %v2656 = vpop.f32.mrb[0].mxu0
    %v2657 = vadd.f32 %v2544, %v2656
    %2658 = vmatprep.mubr.bf16.mxu0 %v218
    %2659 = vmatmul.mubr.bf16.gmra.mrb[0].mxu0 %v217
    %v2660 = vpop.f32.mrb[0].mxu0
    %v2661 = vadd.f32 %v2548, %v2660
    %v2662 = vpop.f32.mrb[0].mxu0
    %v2663 = vadd.f32 %v2550, %v2662
    %v2664 = vpop.f32.mrb[0].mxu0
    %v2665 = vadd.f32 %v2552, %v2664
    %v2666 = vpop.f32.mrb[0].mxu0
    %v2667 = vadd.f32 %v2554, %v2666
    %2668 = vmatprep.mubr.bf16.mxu0 %v226
    %2669 = vmatmul.mubr.bf16.gmra.mrb[0].mxu0 %v225
    %v2670 = vpop.f32.mrb[0].mxu0
    %v2671 = vadd.f32 %v2558, %v2670
    %v2672 = vpop.f32.mrb[0].mxu0
    %v2673 = vadd.f32 %v2560, %v2672
    %v2674 = vpop.f32.mrb[0].mxu0
    %v2675 = vadd.f32 %v2562, %v2674
    %v2676 = vpop.f32.mrb[0].mxu0
    %v2677 = vadd.f32 %v2564, %v2676
    %2678 = vmatprep.mubr.bf16.mxu0 %v234
    %2679 = vmatmul.mubr.bf16.gmra.mrb[0].mxu0 %v233
    %v2680 = vpop.f32.mrb[0].mxu0
    %v2681 = vadd.f32 %v2568, %v2680
    %v2682 = vpop.f32.mrb[0].mxu0
    %v2683 = vadd.f32 %v2570, %v2682
    %v2684 = vpop.f32.mrb[0].mxu0
    %v2685 = vadd.f32 %v2572, %v2684
    %v2686 = vpop.f32.mrb[0].mxu0
    %v2687 = vadd.f32 %v2574, %v2686
    %2688 = vmatprep.mubr.bf16.mxu0 %v242
    %2689 = vmatmul.mubr.bf16.gmra.mrb[0].mxu0 %v241
    %v2690 = vpop.f32.mrb[0].mxu0
    %v2691 = vadd.f32 %v2578, %v2690
    %v2692 = vpop.f32.mrb[0].mxu0
    %v2693 = vadd.f32 %v2580, %v2692
    %v2694 = vpop.f32.mrb[0].mxu0
    %v2695 = vadd.f32 %v2582, %v2694
    %v2696 = vpop.f32.mrb[0].mxu0
    %v2697 = vadd.f32 %v2584, %v2696
    %2698 = vmatprep.mubr.bf16.mxu0 %v250
    %2699 = vmatmul.mubr.bf16.gmra.mrb[0].mxu0 %v249
    %v2700 = vpop.f32.mrb[0].mxu0
    %v2701 = vadd.f32 %v2588, %v2700
    %v2702 = vpop.f32.mrb[0].mxu0
    %v2703 = vadd.f32 %v2590, %v2702
    %v2704 = vpop.f32.mrb[0].mxu0
    %v2705 = vadd.f32 %v2592, %v2704
    %v2706 = vpop.f32.mrb[0].mxu0
    %v2707 = vadd.f32 %v2594, %v2706
    %2708 = vmatprep.mubr.bf16.mxu0 %v258
    %2709 = vmatmul.mubr.bf16.gmra.mrb[0].mxu0 %v257
    %v2710 = vpop.f32.mrb[0].mxu0
    %v2711 = vadd.f32 %v2598, %v2710
    %v2712 = vpop.f32.mrb[0].mxu0
    %v2713 = vadd.f32 %v2600, %v2712
    %v2714 = vpop.f32.mrb[0].mxu0
    %v2715 = vadd.f32 %v2602, %v2714
    %v2716 = vpop.f32.mrb[0].mxu0
    %v2717 = vadd.f32 %v2604, %v2716
    %2718 = vmatprep.mubr.bf16.mxu0 %v266
    %2719 = vmatmul.mubr.bf16.gmra.mrb[0].mxu0 %v265
    %v2720 = vpop.f32.mrb[0].mxu0
    %v2721 = vadd.f32 %v2608, %v2720
    %v2722 = vpop.f32.mrb[0].mxu0
    %v2723 = vadd.f32 %v2610, %v2722
    %v2724 = vpop.f32.mrb[0].mxu0
    %v2725 = vadd.f32 %v2612, %v2724
    %v2726 = vpop.f32.mrb[0].mxu0
    %v2727 = vadd.f32 %v2614, %v2726
    %2728 = vdwg.mxu0
    %v2729 = vmax.f32 %v2199, 0.0
    %v2730 = vmax.f32 %v2201, 0.0
    %v2731 = vmax.f32 %v2651, 0.0
    %v2732 = vmax.f32 %v2653, 0.0
    %v2733 = vmax.f32 %v2203, 0.0
    %v2734 = vmax.f32 %v2205, 0.0
    %v2735 = vmax.f32 %v2655, 0.0
    %v2736 = vmax.f32 %v2657, 0.0
    %v2737 = vmax.f32 %v2209, 0.0
    %v2738 = vmax.f32 %v2211, 0.0
    %v2739 = vmax.f32 %v2661, 0.0
    %v2740 = vmax.f32 %v2663, 0.0
    %v2741 = vmax.f32 %v2213, 0.0
    %v2742 = vmax.f32 %v2215, 0.0
    %v2743 = vmax.f32 %v2665, 0.0
    %v2744 = vmax.f32 %v2667, 0.0
    %v2745 = vmax.f32 %v2219, 0.0
    %v2746 = vmax.f32 %v2221, 0.0
    %v2747 = vmax.f32 %v2671, 0.0
    %v2748 = vmax.f32 %v2673, 0.0
    %v2749 = vmax.f32 %v2223, 0.0
    %v2750 = vmax.f32 %v2225, 0.0
    %v2751 = vmax.f32 %v2675, 0.0
    %v2752 = vmax.f32 %v2677, 0.0
    %v2753 = vmax.f32 %v2229, 0.0
    %v2754 = vmax.f32 %v2231, 0.0
    %v2755 = vmax.f32 %v2681, 0.0
    %v2756 = vmax.f32 %v2683, 0.0
    %v2757 = vmax.f32 %v2233, 0.0
    %v2758 = vmax.f32 %v2235, 0.0
    %v2759 = vmax.f32 %v2685, 0.0
    %v2760 = vmax.f32 %v2687, 0.0
    %v2761 = vmax.f32 %v2239, 0.0
    %v2762 = vmax.f32 %v2241, 0.0
    %v2763 = vmax.f32 %v2691, 0.0
    %v2764 = vmax.f32 %v2693, 0.0
    %v2765 = vmax.f32 %v2243, 0.0
    %v2766 = vmax.f32 %v2245, 0.0
    %v2767 = vmax.f32 %v2695, 0.0
    %v2768 = vmax.f32 %v2697, 0.0
    %v2769 = vmax.f32 %v2249, 0.0
    %v2770 = vmax.f32 %v2251, 0.0
    %v2771 = vmax.f32 %v2701, 0.0
    %v2772 = vmax.f32 %v2703, 0.0
    %v2773 = vmax.f32 %v2253, 0.0
    %v2774 = vmax.f32 %v2255, 0.0
    %v2775 = vmax.f32 %v2705, 0.0
    %v2776 = vmax.f32 %v2707, 0.0
    %v2777 = vmax.f32 %v2259, 0.0
    %v2778 = vmax.f32 %v2261, 0.0
    %v2779 = vmax.f32 %v2711, 0.0
    %v2780 = vmax.f32 %v2713, 0.0
    %v2781 = vmax.f32 %v2263, 0.0
    %v2782 = vmax.f32 %v2265, 0.0
    %v2783 = vmax.f32 %v2715, 0.0
    %v2784 = vmax.f32 %v2717, 0.0
    %v2785 = vmax.f32 %v2269, 0.0
    %v2786 = vmax.f32 %v2271, 0.0
    %v2787 = vmax.f32 %v2721, 0.0
    %v2788 = vmax.f32 %v2723, 0.0
    %v2789 = vmax.f32 %v2273, 0.0
    %v2790 = vmax.f32 %v2275, 0.0
    %v2791 = vmax.f32 %v2725, 0.0
    %v2792 = vmax.f32 %v2727, 0.0
    %v2793 = vpack.c.bf16 %v2733, %v2729
    %v2794 = vpack.c.bf16 %v2734, %v2730
    %v2795 = vpack.c.bf16 %v2735, %v2731
    %v2796 = vpack.c.bf16 %v2736, %v2732
    %v2797 = vpack.c.bf16 %v2741, %v2737
    %v2798 = vpack.c.bf16 %v2742, %v2738
    %v2799 = vpack.c.bf16 %v2743, %v2739
    %v2800 = vpack.c.bf16 %v2744, %v2740
    %v2801 = vpack.c.bf16 %v2749, %v2745
    %v2802 = vpack.c.bf16 %v2750, %v2746
    %v2803 = vpack.c.bf16 %v2751, %v2747
    %v2804 = vpack.c.bf16 %v2752, %v2748
    %v2805 = vpack.c.bf16 %v2757, %v2753
    %v2806 = vpack.c.bf16 %v2758, %v2754
    %v2807 = vpack.c.bf16 %v2759, %v2755
    %v2808 = vpack.c.bf16 %v2760, %v2756
    %v2809 = vpack.c.bf16 %v2765, %v2761
    %v2810 = vpack.c.bf16 %v2766, %v2762
    %v2811 = vpack.c.bf16 %v2767, %v2763
    %v2812 = vpack.c.bf16 %v2768, %v2764
    %v2813 = vpack.c.bf16 %v2773, %v2769
    %v2814 = vpack.c.bf16 %v2774, %v2770
    %v2815 = vpack.c.bf16 %v2775, %v2771
    %v2816 = vpack.c.bf16 %v2776, %v2772
    %v2817 = vpack.c.bf16 %v2781, %v2777
    %v2818 = vpack.c.bf16 %v2782, %v2778
    %v2819 = vpack.c.bf16 %v2783, %v2779
    %v2820 = vpack.c.bf16 %v2784, %v2780
    %v2821 = vpack.c.bf16 %v2789, %v2785
    %v2822 = vpack.c.bf16 %v2790, %v2786
    %v2823 = vpack.c.bf16 %v2791, %v2787
    %v2824 = vpack.c.bf16 %v2792, %v2788
    %v2825 = vld [vmem:[#allocation7] sm:$0xff]
    %v2826 = vld [vmem:[#allocation7 + $0x8] sm:$0xff]
    %v2827 = vld [vmem:[#allocation7 + $0x10] sm:$0xff]
    %v2828 = vld [vmem:[#allocation7 + $0x18] sm:$0xff]
    %v2829 = vld [vmem:[#allocation7 + $0x20] sm:$0xff]
    %v2830 = vld [vmem:[#allocation7 + $0x28] sm:$0xff]
    %v2831 = vld [vmem:[#allocation7 + $0x30] sm:$0xff]
    %v2832 = vld [vmem:[#allocation7 + $0x38] sm:$0xff]
    %v2833 = vld [vmem:[#allocation7 + $0x40] sm:$0xff]
    %v2834 = vld [vmem:[#allocation7 + $0x48] sm:$0xff]
    %v2835 = vld [vmem:[#allocation7 + $0x50] sm:$0xff]
    %v2836 = vld [vmem:[#allocation7 + $0x58] sm:$0xff]
    %v2837 = vld [vmem:[#allocation7 + $0x60] sm:$0xff]
    %v2838 = vld [vmem:[#allocation7 + $0x68] sm:$0xff]
    %v2839 = vld [vmem:[#allocation7 + $0x70] sm:$0xff]
    %v2840 = vld [vmem:[#allocation7 + $0x78] sm:$0xff]
    %v2841 = vld [vmem:[#allocation7 + $0x80] sm:$0xff]
    %v2842 = vld [vmem:[#allocation7 + $0x88] sm:$0xff]
    %v2843 = vld [vmem:[#allocation7 + $0x90] sm:$0xff]
    %v2844 = vld [vmem:[#allocation7 + $0x98] sm:$0xff]
    %v2845 = vld [vmem:[#allocation7 + $0xa0] sm:$0xff]
    %v2846 = vld [vmem:[#allocation7 + $0xa8] sm:$0xff]
    %v2847 = vld [vmem:[#allocation7 + $0xb0] sm:$0xff]
    %v2848 = vld [vmem:[#allocation7 + $0xb8] sm:$0xff]
    %v2849 = vld [vmem:[#allocation7 + $0xc0] sm:$0xff]
    %v2850 = vld [vmem:[#allocation7 + $0xc8] sm:$0xff]
    %v2851 = vld [vmem:[#allocation7 + $0xd0] sm:$0xff]
    %v2852 = vld [vmem:[#allocation7 + $0xd8] sm:$0xff]
    %v2853 = vld [vmem:[#allocation7 + $0xe0] sm:$0xff]
    %v2854 = vld [vmem:[#allocation7 + $0xe8] sm:$0xff]
    %v2855 = vld [vmem:[#allocation7 + $0xf0] sm:$0xff]
    %v2856 = vld [vmem:[#allocation7 + $0xf8] sm:$0xff]
    %v2857 = vld [vmem:[#allocation7 + $0x100] sm:$0xff]
    %v2858 = vld [vmem:[#allocation7 + $0x108] sm:$0xff]
    %v2859 = vld [vmem:[#allocation7 + $0x110] sm:$0xff]
    %v2860 = vld [vmem:[#allocation7 + $0x118] sm:$0xff]
    %v2861 = vld [vmem:[#allocation7 + $0x120] sm:$0xff]
    %v2862 = vld [vmem:[#allocation7 + $0x128] sm:$0xff]
    %v2863 = vld [vmem:[#allocation7 + $0x130] sm:$0xff]
    %v2864 = vld [vmem:[#allocation7 + $0x138] sm:$0xff]
    %v2865 = vld [vmem:[#allocation7 + $0x140] sm:$0xff]
    %v2866 = vld [vmem:[#allocation7 + $0x148] sm:$0xff]
    %v2867 = vld [vmem:[#allocation7 + $0x150] sm:$0xff]
    %v2868 = vld [vmem:[#allocation7 + $0x158] sm:$0xff]
    %v2869 = vld [vmem:[#allocation7 + $0x160] sm:$0xff]
    %v2870 = vld [vmem:[#allocation7 + $0x168] sm:$0xff]
    %v2871 = vld [vmem:[#allocation7 + $0x170] sm:$0xff]
    %v2872 = vld [vmem:[#allocation7 + $0x178] sm:$0xff]
    %v2873 = vld [vmem:[#allocation7 + $0x180] sm:$0xff]
    %v2874 = vld [vmem:[#allocation7 + $0x188] sm:$0xff]
    %v2875 = vld [vmem:[#allocation7 + $0x190] sm:$0xff]
    %v2876 = vld [vmem:[#allocation7 + $0x198] sm:$0xff]
    %v2877 = vld [vmem:[#allocation7 + $0x1a0] sm:$0xff]
    %v2878 = vld [vmem:[#allocation7 + $0x1a8] sm:$0xff]
    %v2879 = vld [vmem:[#allocation7 + $0x1b0] sm:$0xff]
    %v2880 = vld [vmem:[#allocation7 + $0x1b8] sm:$0xff]
    %v2881 = vld [vmem:[#allocation7 + $0x1c0] sm:$0xff]
    %v2882 = vld [vmem:[#allocation7 + $0x1c8] sm:$0xff]
    %v2883 = vld [vmem:[#allocation7 + $0x1d0] sm:$0xff]
    %v2884 = vld [vmem:[#allocation7 + $0x1d8] sm:$0xff]
    %v2885 = vld [vmem:[#allocation7 + $0x1e0] sm:$0xff]
    %v2886 = vld [vmem:[#allocation7 + $0x1e8] sm:$0xff]
    %v2887 = vld [vmem:[#allocation7 + $0x1f0] sm:$0xff]
    %v2888 = vld [vmem:[#allocation7 + $0x1f8] sm:$0xff]
    %v2889 = vld [vmem:[%s4] sm:$0x3]
    %v2891 = vlaneseq
    %v2892 = vshrl.u32 %v2891, 7
    %v2893 = vsub.s32 0, %v2892
    %v2894 = vrot.slane %v2889, %v2893
    %v2895 = vlaneseq
    %v2896 = vshrl.u32 %v2895, 7
    %v2897 = vsub.s32 1, %v2896
    %v2898 = vrot.slane %v2889, %v2897
    %v2965 = vunpack.c.l.b16 %v2825
    %v2966 = vunpack.c.h.b16 %v2825
    %v2967 = vunpack.c.l.b16 %v2826
    %v2968 = vunpack.c.h.b16 %v2826
    %v2969 = vunpack.c.l.b16 %v2827
    %v2970 = vunpack.c.h.b16 %v2827
    %v2971 = vunpack.c.l.b16 %v2828
    %v2972 = vunpack.c.h.b16 %v2828
    %v2973 = vunpack.c.l.b16 %v2829
    %v2974 = vunpack.c.h.b16 %v2829
    %v2975 = vunpack.c.l.b16 %v2830
    %v2976 = vunpack.c.h.b16 %v2830
    %v2977 = vunpack.c.l.b16 %v2831
    %v2978 = vunpack.c.h.b16 %v2831
    %v2979 = vunpack.c.l.b16 %v2832
    %v2980 = vunpack.c.h.b16 %v2832
    %v2981 = vunpack.c.l.b16 %v2833
    %v2982 = vunpack.c.h.b16 %v2833
    %v2983 = vunpack.c.l.b16 %v2834
    %v2984 = vunpack.c.h.b16 %v2834
    %v2985 = vunpack.c.l.b16 %v2835
    %v2986 = vunpack.c.h.b16 %v2835
    %v2987 = vunpack.c.l.b16 %v2836
    %v2988 = vunpack.c.h.b16 %v2836
    %v2989 = vunpack.c.l.b16 %v2837
    %v2990 = vunpack.c.h.b16 %v2837
    %v2991 = vunpack.c.l.b16 %v2838
    %v2992 = vunpack.c.h.b16 %v2838
    %v2993 = vunpack.c.l.b16 %v2839
    %v2994 = vunpack.c.h.b16 %v2839
    %v2995 = vunpack.c.l.b16 %v2840
    %v2996 = vunpack.c.h.b16 %v2840
    %v2997 = vunpack.c.l.b16 %v2841
    %v2998 = vunpack.c.h.b16 %v2841
    %v2999 = vunpack.c.l.b16 %v2842
    %v3000 = vunpack.c.h.b16 %v2842
    %v3001 = vunpack.c.l.b16 %v2843
    %v3002 = vunpack.c.h.b16 %v2843
    %v3003 = vunpack.c.l.b16 %v2844
    %v3004 = vunpack.c.h.b16 %v2844
    %v3005 = vunpack.c.l.b16 %v2845
    %v3006 = vunpack.c.h.b16 %v2845
    %v3007 = vunpack.c.l.b16 %v2846
    %v3008 = vunpack.c.h.b16 %v2846
    %v3009 = vunpack.c.l.b16 %v2847
    %v3010 = vunpack.c.h.b16 %v2847
    %v3011 = vunpack.c.l.b16 %v2848
    %v3012 = vunpack.c.h.b16 %v2848
    %v3013 = vunpack.c.l.b16 %v2849
    %v3014 = vunpack.c.h.b16 %v2849
    %v3015 = vunpack.c.l.b16 %v2850
    %v3016 = vunpack.c.h.b16 %v2850
    %v3017 = vunpack.c.l.b16 %v2851
    %v3018 = vunpack.c.h.b16 %v2851
    %v3019 = vunpack.c.l.b16 %v2852
    %v3020 = vunpack.c.h.b16 %v2852
    %v3021 = vunpack.c.l.b16 %v2853
    %v3022 = vunpack.c.h.b16 %v2853
    %v3023 = vunpack.c.l.b16 %v2854
    %v3024 = vunpack.c.h.b16 %v2854
    %v3025 = vunpack.c.l.b16 %v2855
    %v3026 = vunpack.c.h.b16 %v2855
    %v3027 = vunpack.c.l.b16 %v2856
    %v3028 = vunpack.c.h.b16 %v2856
    %v3029 = vunpack.c.l.b16 %v2857
    %v3030 = vunpack.c.h.b16 %v2857
    %v3031 = vunpack.c.l.b16 %v2858
    %v3032 = vunpack.c.h.b16 %v2858
    %v3033 = vunpack.c.l.b16 %v2859
    %v3034 = vunpack.c.h.b16 %v2859
    %v3035 = vunpack.c.l.b16 %v2860
    %v3036 = vunpack.c.h.b16 %v2860
    %v3037 = vunpack.c.l.b16 %v2861
    %v3038 = vunpack.c.h.b16 %v2861
    %v3039 = vunpack.c.l.b16 %v2862
    %v3040 = vunpack.c.h.b16 %v2862
    %v3041 = vunpack.c.l.b16 %v2863
    %v3042 = vunpack.c.h.b16 %v2863
    %v3043 = vunpack.c.l.b16 %v2864
    %v3044 = vunpack.c.h.b16 %v2864
    %v3045 = vunpack.c.l.b16 %v2865
    %v3046 = vunpack.c.h.b16 %v2865
    %v3047 = vunpack.c.l.b16 %v2866
    %v3048 = vunpack.c.h.b16 %v2866
    %v3049 = vunpack.c.l.b16 %v2867
    %v3050 = vunpack.c.h.b16 %v2867
    %v3051 = vunpack.c.l.b16 %v2868
    %v3052 = vunpack.c.h.b16 %v2868
    %v3053 = vunpack.c.l.b16 %v2869
    %v3054 = vunpack.c.h.b16 %v2869
    %v3055 = vunpack.c.l.b16 %v2870
    %v3056 = vunpack.c.h.b16 %v2870
    %v3057 = vunpack.c.l.b16 %v2871
    %v3058 = vunpack.c.h.b16 %v2871
    %v3059 = vunpack.c.l.b16 %v2872
    %v3060 = vunpack.c.h.b16 %v2872
    %v3061 = vunpack.c.l.b16 %v2873
    %v3062 = vunpack.c.h.b16 %v2873
    %v3063 = vunpack.c.l.b16 %v2874
    %v3064 = vunpack.c.h.b16 %v2874
    %v3065 = vunpack.c.l.b16 %v2875
    %v3066 = vunpack.c.h.b16 %v2875
    %v3067 = vunpack.c.l.b16 %v2876
    %v3068 = vunpack.c.h.b16 %v2876
    %v3069 = vunpack.c.l.b16 %v2877
    %v3070 = vunpack.c.h.b16 %v2877
    %v3071 = vunpack.c.l.b16 %v2878
    %v3072 = vunpack.c.h.b16 %v2878
    %v3073 = vunpack.c.l.b16 %v2879
    %v3074 = vunpack.c.h.b16 %v2879
    %v3075 = vunpack.c.l.b16 %v2880
    %v3076 = vunpack.c.h.b16 %v2880
    %v3077 = vunpack.c.l.b16 %v2881
    %v3078 = vunpack.c.h.b16 %v2881
    %v3079 = vunpack.c.l.b16 %v2882
    %v3080 = vunpack.c.h.b16 %v2882
    %v3081 = vunpack.c.l.b16 %v2883
    %v3082 = vunpack.c.h.b16 %v2883
    %v3083 = vunpack.c.l.b16 %v2884
    %v3084 = vunpack.c.h.b16 %v2884
    %v3085 = vunpack.c.l.b16 %v2885
    %v3086 = vunpack.c.h.b16 %v2885
    %v3087 = vunpack.c.l.b16 %v2886
    %v3088 = vunpack.c.h.b16 %v2886
    %v3089 = vunpack.c.l.b16 %v2887
    %v3090 = vunpack.c.h.b16 %v2887
    %v3091 = vunpack.c.l.b16 %v2888
    %v3092 = vunpack.c.h.b16 %v2888
    %v3093 = vpack.c.b16 %v2967, %v2965
    %v3094 = vpack.c.b16 %v2968, %v2966
    %v3095 = vpack.c.b16 %v2971, %v2969
    %v3096 = vpack.c.b16 %v2972, %v2970
    %v3097 = vpack.c.b16 %v2975, %v2973
    %v3098 = vpack.c.b16 %v2976, %v2974
    %v3099 = vpack.c.b16 %v2979, %v2977
    %v3100 = vpack.c.b16 %v2980, %v2978
    %v3101 = vpack.c.b16 %v2983, %v2981
    %v3102 = vpack.c.b16 %v2984, %v2982
    %v3103 = vpack.c.b16 %v2987, %v2985
    %v3104 = vpack.c.b16 %v2988, %v2986
    %v3105 = vpack.c.b16 %v2991, %v2989
    %v3106 = vpack.c.b16 %v2992, %v2990
    %v3107 = vpack.c.b16 %v2995, %v2993
    %v3108 = vpack.c.b16 %v2996, %v2994
    %v3109 = vpack.c.b16 %v2999, %v2997
    %v3110 = vpack.c.b16 %v3000, %v2998
    %v3111 = vpack.c.b16 %v3003, %v3001
    %v3112 = vpack.c.b16 %v3004, %v3002
    %v3113 = vpack.c.b16 %v3007, %v3005
    %v3114 = vpack.c.b16 %v3008, %v3006
    %v3115 = vpack.c.b16 %v3011, %v3009
    %v3116 = vpack.c.b16 %v3012, %v3010
    %v3117 = vpack.c.b16 %v3015, %v3013
    %v3118 = vpack.c.b16 %v3016, %v3014
    %v3119 = vpack.c.b16 %v3019, %v3017
    %v3120 = vpack.c.b16 %v3020, %v3018
    %v3121 = vpack.c.b16 %v3023, %v3021
    %v3122 = vpack.c.b16 %v3024, %v3022
    %v3123 = vpack.c.b16 %v3027, %v3025
    %v3124 = vpack.c.b16 %v3028, %v3026
    %v3125 = vpack.c.b16 %v3031, %v3029
    %v3126 = vpack.c.b16 %v3032, %v3030
    %v3127 = vpack.c.b16 %v3035, %v3033
    %v3128 = vpack.c.b16 %v3036, %v3034
    %v3129 = vpack.c.b16 %v3039, %v3037
    %v3130 = vpack.c.b16 %v3040, %v3038
    %v3131 = vpack.c.b16 %v3043, %v3041
    %v3132 = vpack.c.b16 %v3044, %v3042
    %v3133 = vpack.c.b16 %v3047, %v3045
    %v3134 = vpack.c.b16 %v3048, %v3046
    %v3135 = vpack.c.b16 %v3051, %v3049
    %v3136 = vpack.c.b16 %v3052, %v3050
    %v3137 = vpack.c.b16 %v3055, %v3053
    %v3138 = vpack.c.b16 %v3056, %v3054
    %v3139 = vpack.c.b16 %v3059, %v3057
    %v3140 = vpack.c.b16 %v3060, %v3058
    %v3141 = vpack.c.b16 %v3063, %v3061
    %v3142 = vpack.c.b16 %v3064, %v3062
    %v3143 = vpack.c.b16 %v3067, %v3065
    %v3144 = vpack.c.b16 %v3068, %v3066
    %v3145 = vpack.c.b16 %v3071, %v3069
    %v3146 = vpack.c.b16 %v3072, %v3070
    %v3147 = vpack.c.b16 %v3075, %v3073
    %v3148 = vpack.c.b16 %v3076, %v3074
    %v3149 = vpack.c.b16 %v3079, %v3077
    %v3150 = vpack.c.b16 %v3080, %v3078
    %v3151 = vpack.c.b16 %v3083, %v3081
    %v3152 = vpack.c.b16 %v3084, %v3082
    %v3153 = vpack.c.b16 %v3087, %v3085
    %v3154 = vpack.c.b16 %v3088, %v3086
    %v3155 = vpack.c.b16 %v3091, %v3089
    %v3156 = vpack.c.b16 %v3092, %v3090
    %3221 = vmatprep.subr.bf16.mxu0 %v3094
    %3222 = vmatpush1.bf16.msra.mxu0 %v3093
    %3223 = vmatprep.subr.bf16.mxu0 %v3096
    %3224 = vmatpush1.bf16.msra.mxu0 %v3095
    %3225 = vmatprep.subr.bf16.mxu0 %v3098
    %3226 = vmatpush1.bf16.msra.mxu0 %v3097
    %3227 = vmatprep.subr.bf16.mxu0 %v3100
    %3228 = vmatpush1.bf16.msra.mxu0 %v3099
    %3229 = vmatprep.subr.bf16.mxu0 %v3102
    %3230 = vmatpush1.bf16.msra.mxu0 %v3101
    %3231 = vmatprep.subr.bf16.mxu0 %v3104
    %3232 = vmatpush1.bf16.msra.mxu0 %v3103
    %3233 = vmatprep.subr.bf16.mxu0 %v3106
    %3234 = vmatpush1.bf16.msra.mxu0 %v3105
    %3235 = vmatprep.subr.bf16.mxu0 %v3108
    %3236 = vmatpush1.bf16.msra.mxu0 %v3107
    %3237 = vmatprep.subr.bf16.mxu0 %v3110
    %3238 = vmatpush1.bf16.msra.mxu0 %v3109
    %3239 = vmatprep.subr.bf16.mxu0 %v3112
    %3240 = vmatpush1.bf16.msra.mxu0 %v3111
    %3241 = vmatprep.subr.bf16.mxu0 %v3114
    %3242 = vmatpush1.bf16.msra.mxu0 %v3113
    %3243 = vmatprep.subr.bf16.mxu0 %v3116
    %3244 = vmatpush1.bf16.msra.mxu0 %v3115
    %3245 = vmatprep.subr.bf16.mxu0 %v3118
    %3246 = vmatpush1.bf16.msra.mxu0 %v3117
    %3247 = vmatprep.subr.bf16.mxu0 %v3120
    %3248 = vmatpush1.bf16.msra.mxu0 %v3119
    %3249 = vmatprep.subr.bf16.mxu0 %v3122
    %3250 = vmatpush1.bf16.msra.mxu0 %v3121
    %3251 = vmatprep.subr.bf16.mxu0 %v3124
    %3252 = vmatpush1.bf16.msra.mxu0 %v3123
    %3253 = vmatprep.mubr.bf16.mxu0 %v2794
    %3254 = vmatmul.mubr.bf16.gmra.mrb[0].mxu0 %v2793
    %v3255 = vpop.f32.mrb[0].mxu0
    %v3256 = vadd.f32 %v2894, %v3255
    %v3257 = vpop.f32.mrb[0].mxu0
    %v3258 = vadd.f32 %v2898, %v3257
    %v3259 = vpop.f32.mrb[0].mxu0
    %v3260 = vadd.f32 %v2894, %v3259
    %v3261 = vpop.f32.mrb[0].mxu0
    %v3262 = vadd.f32 %v2898, %v3261
    %3263 = vmatprep.mubr.bf16.mxu0 %v2798
    %3264 = vmatmul.mubr.bf16.gmra.mrb[0].mxu0 %v2797
    %v3265 = vpop.f32.mrb[0].mxu0
    %v3266 = vadd.f32 %v2894, %v3265
    %v3267 = vpop.f32.mrb[0].mxu0
    %v3268 = vadd.f32 %v2898, %v3267
    %v3269 = vpop.f32.mrb[0].mxu0
    %v3270 = vadd.f32 %v2894, %v3269
    %v3271 = vpop.f32.mrb[0].mxu0
    %v3272 = vadd.f32 %v2898, %v3271
    %3273 = vmatprep.mubr.bf16.mxu0 %v2802
    %3274 = vmatmul.mubr.bf16.gmra.mrb[0].mxu0 %v2801
    %v3275 = vpop.f32.mrb[0].mxu0
    %v3276 = vadd.f32 %v2894, %v3275
    %v3277 = vpop.f32.mrb[0].mxu0
    %v3278 = vadd.f32 %v2898, %v3277
    %v3279 = vpop.f32.mrb[0].mxu0
    %v3280 = vadd.f32 %v2894, %v3279
    %v3281 = vpop.f32.mrb[0].mxu0
    %v3282 = vadd.f32 %v2898, %v3281
    %3283 = vmatprep.mubr.bf16.mxu0 %v2806
    %3284 = vmatmul.mubr.bf16.gmra.mrb[0].mxu0 %v2805
    %v3285 = vpop.f32.mrb[0].mxu0
    %v3286 = vadd.f32 %v2894, %v3285
    %v3287 = vpop.f32.mrb[0].mxu0
    %v3288 = vadd.f32 %v2898, %v3287
    %v3289 = vpop.f32.mrb[0].mxu0
    %v3290 = vadd.f32 %v2894, %v3289
    %v3291 = vpop.f32.mrb[0].mxu0
    %v3292 = vadd.f32 %v2898, %v3291
    %3293 = vmatprep.mubr.bf16.mxu0 %v2810
    %3294 = vmatmul.mubr.bf16.gmra.mrb[0].mxu0 %v2809
    %v3295 = vpop.f32.mrb[0].mxu0
    %v3296 = vadd.f32 %v2894, %v3295
    %v3297 = vpop.f32.mrb[0].mxu0
    %v3298 = vadd.f32 %v2898, %v3297
    %v3299 = vpop.f32.mrb[0].mxu0
    %v3300 = vadd.f32 %v2894, %v3299
    %v3301 = vpop.f32.mrb[0].mxu0
    %v3302 = vadd.f32 %v2898, %v3301
    %3303 = vmatprep.mubr.bf16.mxu0 %v2814
    %3304 = vmatmul.mubr.bf16.gmra.mrb[0].mxu0 %v2813
    %v3305 = vpop.f32.mrb[0].mxu0
    %v3306 = vadd.f32 %v2894, %v3305
    %v3307 = vpop.f32.mrb[0].mxu0
    %v3308 = vadd.f32 %v2898, %v3307
    %v3309 = vpop.f32.mrb[0].mxu0
    %v3310 = vadd.f32 %v2894, %v3309
    %v3311 = vpop.f32.mrb[0].mxu0
    %v3312 = vadd.f32 %v2898, %v3311
    %3313 = vmatprep.mubr.bf16.mxu0 %v2818
    %3314 = vmatmul.mubr.bf16.gmra.mrb[0].mxu0 %v2817
    %v3315 = vpop.f32.mrb[0].mxu0
    %v3316 = vadd.f32 %v2894, %v3315
    %v3317 = vpop.f32.mrb[0].mxu0
    %v3318 = vadd.f32 %v2898, %v3317
    %v3319 = vpop.f32.mrb[0].mxu0
    %v3320 = vadd.f32 %v2894, %v3319
    %v3321 = vpop.f32.mrb[0].mxu0
    %v3322 = vadd.f32 %v2898, %v3321
    %3323 = vmatprep.mubr.bf16.mxu0 %v2822
    %3324 = vmatmul.mubr.bf16.gmra.mrb[0].mxu0 %v2821
    %v3325 = vpop.f32.mrb[0].mxu0
    %v3326 = vadd.f32 %v2894, %v3325
    %v3327 = vpop.f32.mrb[0].mxu0
    %v3328 = vadd.f32 %v2898, %v3327
    %v3329 = vpop.f32.mrb[0].mxu0
    %v3330 = vadd.f32 %v2894, %v3329
    %v3331 = vpop.f32.mrb[0].mxu0
    %v3332 = vadd.f32 %v2898, %v3331
    %3333 = vdwg.mxu0
    %3334 = vmatprep.subr.bf16.mxu0 %v3126
    %3335 = vmatpush1.bf16.msra.mxu0 %v3125
    %3336 = vmatprep.subr.bf16.mxu0 %v3128
    %3337 = vmatpush1.bf16.msra.mxu0 %v3127
    %3338 = vmatprep.subr.bf16.mxu0 %v3130
    %3339 = vmatpush1.bf16.msra.mxu0 %v3129
    %3340 = vmatprep.subr.bf16.mxu0 %v3132
    %3341 = vmatpush1.bf16.msra.mxu0 %v3131
    %3342 = vmatprep.subr.bf16.mxu0 %v3134
    %3343 = vmatpush1.bf16.msra.mxu0 %v3133
    %3344 = vmatprep.subr.bf16.mxu0 %v3136
    %3345 = vmatpush1.bf16.msra.mxu0 %v3135
    %3346 = vmatprep.subr.bf16.mxu0 %v3138
    %3347 = vmatpush1.bf16.msra.mxu0 %v3137
    %3348 = vmatprep.subr.bf16.mxu0 %v3140
    %3349 = vmatpush1.bf16.msra.mxu0 %v3139
    %3350 = vmatprep.subr.bf16.mxu0 %v3142
    %3351 = vmatpush1.bf16.msra.mxu0 %v3141
    %3352 = vmatprep.subr.bf16.mxu0 %v3144
    %3353 = vmatpush1.bf16.msra.mxu0 %v3143
    %3354 = vmatprep.subr.bf16.mxu0 %v3146
    %3355 = vmatpush1.bf16.msra.mxu0 %v3145
    %3356 = vmatprep.subr.bf16.mxu0 %v3148
    %3357 = vmatpush1.bf16.msra.mxu0 %v3147
    %3358 = vmatprep.subr.bf16.mxu0 %v3150
    %3359 = vmatpush1.bf16.msra.mxu0 %v3149
    %3360 = vmatprep.subr.bf16.mxu0 %v3152
    %3361 = vmatpush1.bf16.msra.mxu0 %v3151
    %3362 = vmatprep.subr.bf16.mxu0 %v3154
    %3363 = vmatpush1.bf16.msra.mxu0 %v3153
    %3364 = vmatprep.subr.bf16.mxu0 %v3156
    %3365 = vmatpush1.bf16.msra.mxu0 %v3155
    %3366 = vmatprep.mubr.bf16.mxu0 %v2796
    %3367 = vmatmul.mubr.bf16.gmra.mrb[0].mxu0 %v2795
    %v3368 = vpop.f32.mrb[0].mxu0
    %v3369 = vadd.f32 %v3256, %v3368
    %v3370 = vpop.f32.mrb[0].mxu0
    %v3371 = vadd.f32 %v3258, %v3370
    %v3372 = vpop.f32.mrb[0].mxu0
    %v3373 = vadd.f32 %v3260, %v3372
    %v3374 = vpop.f32.mrb[0].mxu0
    %v3375 = vadd.f32 %v3262, %v3374
    %3376 = vmatprep.mubr.bf16.mxu0 %v2800
    %3377 = vmatmul.mubr.bf16.gmra.mrb[0].mxu0 %v2799
    %v3378 = vpop.f32.mrb[0].mxu0
    %v3379 = vadd.f32 %v3266, %v3378
    %v3380 = vpop.f32.mrb[0].mxu0
    %v3381 = vadd.f32 %v3268, %v3380
    %v3382 = vpop.f32.mrb[0].mxu0
    %v3383 = vadd.f32 %v3270, %v3382
    %v3384 = vpop.f32.mrb[0].mxu0
    %v3385 = vadd.f32 %v3272, %v3384
    %3386 = vmatprep.mubr.bf16.mxu0 %v2804
    %3387 = vmatmul.mubr.bf16.gmra.mrb[0].mxu0 %v2803
    %v3388 = vpop.f32.mrb[0].mxu0
    %v3389 = vadd.f32 %v3276, %v3388
    %v3390 = vpop.f32.mrb[0].mxu0
    %v3391 = vadd.f32 %v3278, %v3390
    %v3392 = vpop.f32.mrb[0].mxu0
    %v3393 = vadd.f32 %v3280, %v3392
    %v3394 = vpop.f32.mrb[0].mxu0
    %v3395 = vadd.f32 %v3282, %v3394
    %3396 = vmatprep.mubr.bf16.mxu0 %v2808
    %3397 = vmatmul.mubr.bf16.gmra.mrb[0].mxu0 %v2807
    %v3398 = vpop.f32.mrb[0].mxu0
    %v3399 = vadd.f32 %v3286, %v3398
    %v3400 = vpop.f32.mrb[0].mxu0
    %v3401 = vadd.f32 %v3288, %v3400
    %v3402 = vpop.f32.mrb[0].mxu0
    %v3403 = vadd.f32 %v3290, %v3402
    %v3404 = vpop.f32.mrb[0].mxu0
    %v3405 = vadd.f32 %v3292, %v3404
    %3406 = vmatprep.mubr.bf16.mxu0 %v2812
    %3407 = vmatmul.mubr.bf16.gmra.mrb[0].mxu0 %v2811
    %v3408 = vpop.f32.mrb[0].mxu0
    %v3409 = vadd.f32 %v3296, %v3408
    %v3410 = vpop.f32.mrb[0].mxu0
    %v3411 = vadd.f32 %v3298, %v3410
    %v3412 = vpop.f32.mrb[0].mxu0
    %v3413 = vadd.f32 %v3300, %v3412
    %v3414 = vpop.f32.mrb[0].mxu0
    %v3415 = vadd.f32 %v3302, %v3414
    %3416 = vmatprep.mubr.bf16.mxu0 %v2816
    %3417 = vmatmul.mubr.bf16.gmra.mrb[0].mxu0 %v2815
    %v3418 = vpop.f32.mrb[0].mxu0
    %v3419 = vadd.f32 %v3306, %v3418
    %v3420 = vpop.f32.mrb[0].mxu0
    %v3421 = vadd.f32 %v3308, %v3420
    %v3422 = vpop.f32.mrb[0].mxu0
    %v3423 = vadd.f32 %v3310, %v3422
    %v3424 = vpop.f32.mrb[0].mxu0
    %v3425 = vadd.f32 %v3312, %v3424
    %3426 = vmatprep.mubr.bf16.mxu0 %v2820
    %3427 = vmatmul.mubr.bf16.gmra.mrb[0].mxu0 %v2819
    %v3428 = vpop.f32.mrb[0].mxu0
    %v3429 = vadd.f32 %v3316, %v3428
    %v3430 = vpop.f32.mrb[0].mxu0
    %v3431 = vadd.f32 %v3318, %v3430
    %v3432 = vpop.f32.mrb[0].mxu0
    %v3433 = vadd.f32 %v3320, %v3432
    %v3434 = vpop.f32.mrb[0].mxu0
    %v3435 = vadd.f32 %v3322, %v3434
    %3436 = vmatprep.mubr.bf16.mxu0 %v2824
    %3437 = vmatmul.mubr.bf16.gmra.mrb[0].mxu0 %v2823
    %v3438 = vpop.f32.mrb[0].mxu0
    %v3439 = vadd.f32 %v3326, %v3438
    %v3440 = vpop.f32.mrb[0].mxu0
    %v3441 = vadd.f32 %v3328, %v3440
    %v3442 = vpop.f32.mrb[0].mxu0
    %v3443 = vadd.f32 %v3330, %v3442
    %v3444 = vpop.f32.mrb[0].mxu0
    %v3445 = vadd.f32 %v3332, %v3444
    %3446 = vdwg.mxu0
    %v3447 = vmax.f32 %v3369, 0.0
    %v3448 = vmax.f32 %v3371, 0.0
    %v3449 = vmax.f32 %v3373, 0.0
    %v3450 = vmax.f32 %v3375, 0.0
    %v3451 = vmax.f32 %v3379, 0.0
    %v3452 = vmax.f32 %v3381, 0.0
    %v3453 = vmax.f32 %v3383, 0.0
    %v3454 = vmax.f32 %v3385, 0.0
    %v3455 = vmax.f32 %v3389, 0.0
    %v3456 = vmax.f32 %v3391, 0.0
    %v3457 = vmax.f32 %v3393, 0.0
    %v3458 = vmax.f32 %v3395, 0.0
    %v3459 = vmax.f32 %v3399, 0.0
    %v3460 = vmax.f32 %v3401, 0.0
    %v3461 = vmax.f32 %v3403, 0.0
    %v3462 = vmax.f32 %v3405, 0.0
    %v3463 = vmax.f32 %v3409, 0.0
    %v3464 = vmax.f32 %v3411, 0.0
    %v3465 = vmax.f32 %v3413, 0.0
    %v3466 = vmax.f32 %v3415, 0.0
    %v3467 = vmax.f32 %v3419, 0.0
    %v3468 = vmax.f32 %v3421, 0.0
    %v3469 = vmax.f32 %v3423, 0.0
    %v3470 = vmax.f32 %v3425, 0.0
    %v3471 = vmax.f32 %v3429, 0.0
    %v3472 = vmax.f32 %v3431, 0.0
    %v3473 = vmax.f32 %v3433, 0.0
    %v3474 = vmax.f32 %v3435, 0.0
    %v3475 = vmax.f32 %v3439, 0.0
    %v3476 = vmax.f32 %v3441, 0.0
    %v3477 = vmax.f32 %v3443, 0.0
    %v3478 = vmax.f32 %v3445, 0.0
    %v3479 = vpack.c.bf16 %v3449, %v3447
    %v3480 = vpack.c.bf16 %v3450, %v3448
    %v3481 = vpack.c.bf16 %v3453, %v3451
    %v3482 = vpack.c.bf16 %v3454, %v3452
    %v3483 = vpack.c.bf16 %v3457, %v3455
    %v3484 = vpack.c.bf16 %v3458, %v3456
    %v3485 = vpack.c.bf16 %v3461, %v3459
    %v3486 = vpack.c.bf16 %v3462, %v3460
    %v3487 = vpack.c.bf16 %v3465, %v3463
    %v3488 = vpack.c.bf16 %v3466, %v3464
    %v3489 = vpack.c.bf16 %v3469, %v3467
    %v3490 = vpack.c.bf16 %v3470, %v3468
    %v3491 = vpack.c.bf16 %v3473, %v3471
    %v3492 = vpack.c.bf16 %v3474, %v3472
    %v3493 = vpack.c.bf16 %v3477, %v3475
    %v3494 = vpack.c.bf16 %v3478, %v3476
    %v3495 = vld [vmem:[%s5] sm:$0xf]
    %v3496 = vld [vmem:[%s5 + $0x4] sm:$0xf]
    %v3497 = vld [vmem:[%s5 + $0x8] sm:$0xf]
    %v3498 = vld [vmem:[%s5 + $0xc] sm:$0xf]
    %v3499 = vld [vmem:[%s5 + $0x10] sm:$0xf]
    %v3500 = vld [vmem:[%s5 + $0x14] sm:$0xf]
    %v3501 = vld [vmem:[%s5 + $0x18] sm:$0xf]
    %v3502 = vld [vmem:[%s5 + $0x1c] sm:$0xf]
    %v3503 = vld [vmem:[%s5 + $0x20] sm:$0xf]
    %v3504 = vld [vmem:[%s5 + $0x24] sm:$0xf]
    %v3505 = vld [vmem:[%s5 + $0x28] sm:$0xf]
    %v3506 = vld [vmem:[%s5 + $0x2c] sm:$0xf]
    %v3507 = vld [vmem:[%s5 + $0x30] sm:$0xf]
    %v3508 = vld [vmem:[%s5 + $0x34] sm:$0xf]
    %v3509 = vld [vmem:[%s5 + $0x38] sm:$0xf]
    %v3510 = vld [vmem:[%s5 + $0x3c] sm:$0xf]
    %v3511 = vld [vmem:[%s5 + $0x40] sm:$0xf]
    %v3512 = vld [vmem:[%s5 + $0x44] sm:$0xf]
    %v3513 = vld [vmem:[%s5 + $0x48] sm:$0xf]
    %v3514 = vld [vmem:[%s5 + $0x4c] sm:$0xf]
    %v3515 = vld [vmem:[%s5 + $0x50] sm:$0xf]
    %v3516 = vld [vmem:[%s5 + $0x54] sm:$0xf]
    %v3517 = vld [vmem:[%s5 + $0x58] sm:$0xf]
    %v3518 = vld [vmem:[%s5 + $0x5c] sm:$0xf]
    %v3519 = vld [vmem:[%s5 + $0x60] sm:$0xf]
    %v3520 = vld [vmem:[%s5 + $0x64] sm:$0xf]
    %v3521 = vld [vmem:[%s5 + $0x68] sm:$0xf]
    %v3522 = vld [vmem:[%s5 + $0x6c] sm:$0xf]
    %v3523 = vld [vmem:[%s5 + $0x70] sm:$0xf]
    %v3524 = vld [vmem:[%s5 + $0x74] sm:$0xf]
    %v3525 = vld [vmem:[%s5 + $0x78] sm:$0xf]
    %v3526 = vld [vmem:[%s5 + $0x7c] sm:$0xf]
    %v3527 = vld [vmem:[%s6] sm:$0x1]
    %v3529 = vlaneseq
    %v3530 = vshrl.u32 %v3529, 7
    %v3531 = vsub.s32 0, %v3530
    %v3532 = vrot.slane %v3527, %v3531
    %v3566 = vunpack.c.l.b16 %v3495
    %v3567 = vunpack.c.l.b16 %v3496
    %v3568 = vunpack.c.l.b16 %v3497
    %v3569 = vunpack.c.l.b16 %v3498
    %v3570 = vunpack.c.l.b16 %v3499
    %v3571 = vunpack.c.l.b16 %v3500
    %v3572 = vunpack.c.l.b16 %v3501
    %v3573 = vunpack.c.l.b16 %v3502
    %v3574 = vunpack.c.l.b16 %v3503
    %v3575 = vunpack.c.l.b16 %v3504
    %v3576 = vunpack.c.l.b16 %v3505
    %v3577 = vunpack.c.l.b16 %v3506
    %v3578 = vunpack.c.l.b16 %v3507
    %v3579 = vunpack.c.l.b16 %v3508
    %v3580 = vunpack.c.l.b16 %v3509
    %v3581 = vunpack.c.l.b16 %v3510
    %v3582 = vunpack.c.l.b16 %v3511
    %v3583 = vunpack.c.l.b16 %v3512
    %v3584 = vunpack.c.l.b16 %v3513
    %v3585 = vunpack.c.l.b16 %v3514
    %v3586 = vunpack.c.l.b16 %v3515
    %v3587 = vunpack.c.l.b16 %v3516
    %v3588 = vunpack.c.l.b16 %v3517
    %v3589 = vunpack.c.l.b16 %v3518
    %v3590 = vunpack.c.l.b16 %v3519
    %v3591 = vunpack.c.l.b16 %v3520
    %v3592 = vunpack.c.l.b16 %v3521
    %v3593 = vunpack.c.l.b16 %v3522
    %v3594 = vunpack.c.l.b16 %v3523
    %v3595 = vunpack.c.l.b16 %v3524
    %v3596 = vunpack.c.l.b16 %v3525
    %v3597 = vunpack.c.l.b16 %v3526
    %v3598 = vpack.c.b16 %v3567, %v3566
    %v3599 = vpack.c.b16 %v3569, %v3568
    %v3600 = vpack.c.b16 %v3571, %v3570
    %v3601 = vpack.c.b16 %v3573, %v3572
    %v3602 = vpack.c.b16 %v3575, %v3574
    %v3603 = vpack.c.b16 %v3577, %v3576
    %v3604 = vpack.c.b16 %v3579, %v3578
    %v3605 = vpack.c.b16 %v3581, %v3580
    %v3606 = vpack.c.b16 %v3583, %v3582
    %v3607 = vpack.c.b16 %v3585, %v3584
    %v3608 = vpack.c.b16 %v3587, %v3586
    %v3609 = vpack.c.b16 %v3589, %v3588
    %v3610 = vpack.c.b16 %v3591, %v3590
    %v3611 = vpack.c.b16 %v3593, %v3592
    %v3612 = vpack.c.b16 %v3595, %v3594
    %v3613 = vpack.c.b16 %v3597, %v3596
    %3630 = vmatprep.subr.bf16.mxu0 0
    %3631 = vmatpush1.bf16.msra.mxu0 %v3598
    %3632 = vmatprep.subr.bf16.mxu0 0
    %3633 = vmatpush1.bf16.msra.mxu0 %v3599
    %3634 = vmatprep.subr.bf16.mxu0 0
    %3635 = vmatpush1.bf16.msra.mxu0 %v3600
    %3636 = vmatprep.subr.bf16.mxu0 0
    %3637 = vmatpush1.bf16.msra.mxu0 %v3601
    %3638 = vmatprep.subr.bf16.mxu0 0
    %3639 = vmatpush1.bf16.msra.mxu0 %v3602
    %3640 = vmatprep.subr.bf16.mxu0 0
    %3641 = vmatpush1.bf16.msra.mxu0 %v3603
    %3642 = vmatprep.subr.bf16.mxu0 0
    %3643 = vmatpush1.bf16.msra.mxu0 %v3604
    %3644 = vmatprep.subr.bf16.mxu0 0
    %3645 = vmatpush1.bf16.msra.mxu0 %v3605
    %3646 = vmatprep.subr.bf16.mxu0 0
    %3647 = vmatpush1.bf16.msra.mxu0 %v3606
    %3648 = vmatprep.subr.bf16.mxu0 0
    %3649 = vmatpush1.bf16.msra.mxu0 %v3607
    %3650 = vmatprep.subr.bf16.mxu0 0
    %3651 = vmatpush1.bf16.msra.mxu0 %v3608
    %3652 = vmatprep.subr.bf16.mxu0 0
    %3653 = vmatpush1.bf16.msra.mxu0 %v3609
    %3654 = vmatprep.subr.bf16.mxu0 0
    %3655 = vmatpush1.bf16.msra.mxu0 %v3610
    %3656 = vmatprep.subr.bf16.mxu0 0
    %3657 = vmatpush1.bf16.msra.mxu0 %v3611
    %3658 = vmatprep.subr.bf16.mxu0 0
    %3659 = vmatpush1.bf16.msra.mxu0 %v3612
    %3660 = vmatprep.subr.bf16.mxu0 0
    %3661 = vmatpush1.bf16.msra.mxu0 %v3613
    %3662 = vmatprep.mubr.bf16.mxu0 %v3480
    %3663 = vmatmul.mubr.bf16.gmra.mrb[0].mxu0 %v3479
    %v3664 = vpop.f32.mrb[0].mxu0
    %v3665 = vadd.f32 %v3532, %v3664
    %v3666 = vpop.f32.mrb[0].mxu0
    %v3667 = vpop.f32.mrb[0].mxu0
    %v3668 = vadd.f32 %v3532, %v3667
    %v3669 = vpop.f32.mrb[0].mxu0
    %3670 = vmatprep.mubr.bf16.mxu0 %v3482
    %3671 = vmatmul.mubr.bf16.gmra.mrb[0].mxu0 %v3481
    %v3672 = vpop.f32.mrb[0].mxu0
    %v3673 = vadd.f32 %v3532, %v3672
    %v3674 = vpop.f32.mrb[0].mxu0
    %v3675 = vpop.f32.mrb[0].mxu0
    %v3676 = vadd.f32 %v3532, %v3675
    %v3677 = vpop.f32.mrb[0].mxu0
    %3678 = vmatprep.mubr.bf16.mxu0 %v3484
    %3679 = vmatmul.mubr.bf16.gmra.mrb[0].mxu0 %v3483
    %v3680 = vpop.f32.mrb[0].mxu0
    %v3681 = vadd.f32 %v3532, %v3680
    %v3682 = vpop.f32.mrb[0].mxu0
    %v3683 = vpop.f32.mrb[0].mxu0
    %v3684 = vadd.f32 %v3532, %v3683
    %v3685 = vpop.f32.mrb[0].mxu0
    %3686 = vmatprep.mubr.bf16.mxu0 %v3486
    %3687 = vmatmul.mubr.bf16.gmra.mrb[0].mxu0 %v3485
    %v3688 = vpop.f32.mrb[0].mxu0
    %v3689 = vadd.f32 %v3532, %v3688
    %v3690 = vpop.f32.mrb[0].mxu0
    %v3691 = vpop.f32.mrb[0].mxu0
    %v3692 = vadd.f32 %v3532, %v3691
    %v3693 = vpop.f32.mrb[0].mxu0
    %3694 = vmatprep.mubr.bf16.mxu0 %v3488
    %3695 = vmatmul.mubr.bf16.gmra.mrb[0].mxu0 %v3487
    %v3696 = vpop.f32.mrb[0].mxu0
    %v3697 = vadd.f32 %v3532, %v3696
    %v3698 = vpop.f32.mrb[0].mxu0
    %v3699 = vpop.f32.mrb[0].mxu0
    %v3700 = vadd.f32 %v3532, %v3699
    %v3701 = vpop.f32.mrb[0].mxu0
    %3702 = vmatprep.mubr.bf16.mxu0 %v3490
    %3703 = vmatmul.mubr.bf16.gmra.mrb[0].mxu0 %v3489
    %v3704 = vpop.f32.mrb[0].mxu0
    %v3705 = vadd.f32 %v3532, %v3704
    %v3706 = vpop.f32.mrb[0].mxu0
    %v3707 = vpop.f32.mrb[0].mxu0
    %v3708 = vadd.f32 %v3532, %v3707
    %v3709 = vpop.f32.mrb[0].mxu0
    %3710 = vmatprep.mubr.bf16.mxu0 %v3492
    %3711 = vmatmul.mubr.bf16.gmra.mrb[0].mxu0 %v3491
    %v3712 = vpop.f32.mrb[0].mxu0
    %v3713 = vadd.f32 %v3532, %v3712
    %v3714 = vpop.f32.mrb[0].mxu0
    %v3715 = vpop.f32.mrb[0].mxu0
    %v3716 = vadd.f32 %v3532, %v3715
    %v3717 = vpop.f32.mrb[0].mxu0
    %3718 = vmatprep.mubr.bf16.mxu0 %v3494
    %3719 = vmatmul.mubr.bf16.gmra.mrb[0].mxu0 %v3493
    %v3720 = vpop.f32.mrb[0].mxu0
    %v3721 = vadd.f32 %v3532, %v3720
    %v3722 = vpop.f32.mrb[0].mxu0
    %v3723 = vpop.f32.mrb[0].mxu0
    %v3724 = vadd.f32 %v3532, %v3723
    %v3725 = vpop.f32.mrb[0].mxu0
    %3726 = vdwg.mxu0
    %v3727 = vmax.f32 %v3665, 0.0
    %v3728 = vmax.f32 %v3668, 0.0
    %v3729 = vmax.f32 %v3673, 0.0
    %v3730 = vmax.f32 %v3676, 0.0
    %v3731 = vmax.f32 %v3681, 0.0
    %v3732 = vmax.f32 %v3684, 0.0
    %v3733 = vmax.f32 %v3689, 0.0
    %v3734 = vmax.f32 %v3692, 0.0
    %v3735 = vmax.f32 %v3697, 0.0
    %v3736 = vmax.f32 %v3700, 0.0
    %v3737 = vmax.f32 %v3705, 0.0
    %v3738 = vmax.f32 %v3708, 0.0
    %v3739 = vmax.f32 %v3713, 0.0
    %v3740 = vmax.f32 %v3716, 0.0
    %v3741 = vmax.f32 %v3721, 0.0
    %v3742 = vmax.f32 %v3724, 0.0
    %v3743 = vpack.c.bf16 %v3728, %v3727
    %v3744 = vpack.c.bf16 %v3730, %v3729
    %v3745 = vpack.c.bf16 %v3732, %v3731
    %v3746 = vpack.c.bf16 %v3734, %v3733
    %v3747 = vpack.c.bf16 %v3736, %v3735
    %v3748 = vpack.c.bf16 %v3738, %v3737
    %v3749 = vpack.c.bf16 %v3740, %v3739
    %v3750 = vpack.c.bf16 %v3742, %v3741
    %v3751 = vld [vmem:[%s7] sm:$0xf]
    %v3752 = vld [vmem:[%s7 + $0x4] sm:$0xf]
    %v3753 = vld [vmem:[%s7 + $0x8] sm:$0xf]
    %v3754 = vld [vmem:[%s7 + $0xc] sm:$0xf]
    %v3755 = vld [vmem:[%s7 + $0x10] sm:$0xf]
    %v3756 = vld [vmem:[%s7 + $0x14] sm:$0xf]
    %v3757 = vld [vmem:[%s7 + $0x18] sm:$0xf]
    %v3758 = vld [vmem:[%s7 + $0x1c] sm:$0xf]
    %v3759 = vld [vmem:[%s8] sm:$0x1]
    %v3761 = vlaneseq
    %v3762 = vshrl.u32 %v3761, 7
    %v3763 = vsub.s32 0, %v3762
    %v3764 = vrot.slane %v3759, %v3763
    %v3774 = vunpack.c.l.b16 %v3751
    %v3775 = vunpack.c.l.b16 %v3752
    %v3776 = vunpack.c.l.b16 %v3753
    %v3777 = vunpack.c.l.b16 %v3754
    %v3778 = vunpack.c.l.b16 %v3755
    %v3779 = vunpack.c.l.b16 %v3756
    %v3780 = vunpack.c.l.b16 %v3757
    %v3781 = vunpack.c.l.b16 %v3758
    %v3782 = vpack.c.b16 %v3775, %v3774
    %v3783 = vpack.c.b16 %v3777, %v3776
    %v3784 = vpack.c.b16 %v3779, %v3778
    %v3785 = vpack.c.b16 %v3781, %v3780
    %vm3790 = vcmask 523264
    %v3792 = vsel %vm3790, %v3743, 0
    %v3795 = vsel %vm3790, %v3744, 0
    %v3798 = vsel %vm3790, %v3745, 0
    %v3801 = vsel %vm3790, %v3746, 0
    %v3804 = vsel %vm3790, %v3747, 0
    %v3807 = vsel %vm3790, %v3748, 0
    %v3810 = vsel %vm3790, %v3749, 0
    %v3813 = vsel %vm3790, %v3750, 0
    %3815 = vmatprep.subr.bf16.mxu0 0
    %3816 = vmatpush1.bf16.msra.mxu0 %v3782
    %3817 = vmatprep.subr.bf16.mxu0 0
    %3818 = vmatpush1.bf16.msra.mxu0 %v3783
    %3819 = vmatprep.subr.bf16.mxu0 0
    %3820 = vmatpush1.bf16.msra.mxu0 %v3784
    %3821 = vmatprep.subr.bf16.mxu0 0
    %3822 = vmatpush1.bf16.msra.mxu0 %v3785
    %3823 = vmatprep.subr.bf16.mxu0 0
    %3824 = vmatpush1.bf16.msra.mxu0 0
    %3825 = vmatprep.subr.bf16.mxu0 0
    %3826 = vmatpush1.bf16.msra.mxu0 0
    %3827 = vmatprep.subr.bf16.mxu0 0
    %3828 = vmatpush1.bf16.msra.mxu0 0
    %3829 = vmatprep.subr.bf16.mxu0 0
    %3830 = vmatpush1.bf16.msra.mxu0 0
    %3831 = vmatprep.subr.bf16.mxu0 0
    %3832 = vmatpush1.bf16.msra.mxu0 0
    %3833 = vmatprep.subr.bf16.mxu0 0
    %3834 = vmatpush1.bf16.msra.mxu0 0
    %3835 = vmatprep.subr.bf16.mxu0 0
    %3836 = vmatpush1.bf16.msra.mxu0 0
    %3837 = vmatprep.subr.bf16.mxu0 0
    %3838 = vmatpush1.bf16.msra.mxu0 0
    %3839 = vmatprep.subr.bf16.mxu0 0
    %3840 = vmatpush1.bf16.msra.mxu0 0
    %3841 = vmatprep.subr.bf16.mxu0 0
    %3842 = vmatpush1.bf16.msra.mxu0 0
    %3843 = vmatprep.subr.bf16.mxu0 0
    %3844 = vmatpush1.bf16.msra.mxu0 0
    %3845 = vmatprep.subr.bf16.mxu0 0
    %3846 = vmatpush1.bf16.msra.mxu0 0
    %3847 = vmatprep.mubr.bf16.mxu0 0
    %3848 = vmatmul.mubr.bf16.gmra.mrb[0].mxu0 %v3792
    %v3849 = vpop.f32.mrb[0].mxu0
    %v3850 = vadd.f32 %v3764, %v3849
    %v3851 = vpop.f32.mrb[0].mxu0
    %v3852 = vpop.f32.mrb[0].mxu0
    %v3853 = vadd.f32 %v3764, %v3852
    %v3854 = vpop.f32.mrb[0].mxu0
    %3855 = vmatprep.mubr.bf16.mxu0 0
    %3856 = vmatmul.mubr.bf16.gmra.mrb[0].mxu0 %v3795
    %v3857 = vpop.f32.mrb[0].mxu0
    %v3858 = vadd.f32 %v3764, %v3857
    %v3859 = vpop.f32.mrb[0].mxu0
    %v3860 = vpop.f32.mrb[0].mxu0
    %v3861 = vadd.f32 %v3764, %v3860
    %v3862 = vpop.f32.mrb[0].mxu0
    %3863 = vmatprep.mubr.bf16.mxu0 0
    %3864 = vmatmul.mubr.bf16.gmra.mrb[0].mxu0 %v3798
    %v3865 = vpop.f32.mrb[0].mxu0
    %v3866 = vadd.f32 %v3764, %v3865
    %v3867 = vpop.f32.mrb[0].mxu0
    %v3868 = vpop.f32.mrb[0].mxu0
    %v3869 = vadd.f32 %v3764, %v3868
    %v3870 = vpop.f32.mrb[0].mxu0
    %3871 = vmatprep.mubr.bf16.mxu0 0
    %3872 = vmatmul.mubr.bf16.gmra.mrb[0].mxu0 %v3801
    %v3873 = vpop.f32.mrb[0].mxu0
    %v3874 = vadd.f32 %v3764, %v3873
    %v3875 = vpop.f32.mrb[0].mxu0
    %v3876 = vpop.f32.mrb[0].mxu0
    %v3877 = vadd.f32 %v3764, %v3876
    %v3878 = vpop.f32.mrb[0].mxu0
    %3879 = vmatprep.mubr.bf16.mxu0 0
    %3880 = vmatmul.mubr.bf16.gmra.mrb[0].mxu0 %v3804
    %v3881 = vpop.f32.mrb[0].mxu0
    %v3882 = vadd.f32 %v3764, %v3881
    %v3883 = vpop.f32.mrb[0].mxu0
    %v3884 = vpop.f32.mrb[0].mxu0
    %v3885 = vadd.f32 %v3764, %v3884
    %v3886 = vpop.f32.mrb[0].mxu0
    %3887 = vmatprep.mubr.bf16.mxu0 0
    %3888 = vmatmul.mubr.bf16.gmra.mrb[0].mxu0 %v3807
    %v3889 = vpop.f32.mrb[0].mxu0
    %v3890 = vadd.f32 %v3764, %v3889
    %v3891 = vpop.f32.mrb[0].mxu0
    %v3892 = vpop.f32.mrb[0].mxu0
    %v3893 = vadd.f32 %v3764, %v3892
    %v3894 = vpop.f32.mrb[0].mxu0
    %3895 = vmatprep.mubr.bf16.mxu0 0
    %3896 = vmatmul.mubr.bf16.gmra.mrb[0].mxu0 %v3810
    %v3897 = vpop.f32.mrb[0].mxu0
    %v3898 = vadd.f32 %v3764, %v3897
    %v3899 = vpop.f32.mrb[0].mxu0
    %v3900 = vpop.f32.mrb[0].mxu0
    %v3901 = vadd.f32 %v3764, %v3900
    %v3902 = vpop.f32.mrb[0].mxu0
    %3903 = vmatprep.mubr.bf16.mxu0 0
    %3904 = vmatmul.mubr.bf16.gmra.mrb[0].mxu0 %v3813
    %v3905 = vpop.f32.mrb[0].mxu0
    %v3906 = vadd.f32 %v3764, %v3905
    %v3907 = vpop.f32.mrb[0].mxu0
    %v3908 = vpop.f32.mrb[0].mxu0
    %v3909 = vadd.f32 %v3764, %v3908
    %v3910 = vpop.f32.mrb[0].mxu0
    %3911 = vdwg.mxu0
    %3912 = vmax.xlane.f32.xlu0 %v3850
    %v3913 = vpop.xlane.xlu0 %3912
    %3914 = vmax.xlane.f32.xlu0 %v3853
    %v3915 = vpop.xlane.xlu0 %3914
    %3916 = vmax.xlane.f32.xlu0 %v3858
    %v3917 = vpop.xlane.xlu0 %3916
    %3918 = vmax.xlane.f32.xlu0 %v3861
    %v3919 = vpop.xlane.xlu0 %3918
    %3920 = vmax.xlane.f32.xlu0 %v3866
    %v3921 = vpop.xlane.xlu0 %3920
    %3922 = vmax.xlane.f32.xlu0 %v3869
    %v3923 = vpop.xlane.xlu0 %3922
    %3924 = vmax.xlane.f32.xlu0 %v3874
    %v3925 = vpop.xlane.xlu0 %3924
    %3926 = vmax.xlane.f32.xlu0 %v3877
    %v3927 = vpop.xlane.xlu0 %3926
    %3928 = vmax.xlane.f32.xlu0 %v3882
    %v3929 = vpop.xlane.xlu0 %3928
    %3930 = vmax.xlane.f32.xlu0 %v3885
    %v3931 = vpop.xlane.xlu0 %3930
    %3932 = vmax.xlane.f32.xlu0 %v3890
    %v3933 = vpop.xlane.xlu0 %3932
    %3934 = vmax.xlane.f32.xlu0 %v3893
    %v3935 = vpop.xlane.xlu0 %3934
    %3936 = vmax.xlane.f32.xlu0 %v3898
    %v3937 = vpop.xlane.xlu0 %3936
    %3938 = vmax.xlane.f32.xlu0 %v3901
    %v3939 = vpop.xlane.xlu0 %3938
    %3940 = vmax.xlane.f32.xlu0 %v3906
    %v3941 = vpop.xlane.xlu0 %3940
    %3942 = vmax.xlane.f32.xlu0 %v3909
    %v3943 = vpop.xlane.xlu0 %3942
    %v3944 = vsub.f32 %v3850, %v3913
    %v3945 = vsub.f32 %v3853, %v3915
    %v3946 = vsub.f32 %v3858, %v3917
    %v3947 = vsub.f32 %v3861, %v3919
    %v3948 = vsub.f32 %v3866, %v3921
    %v3949 = vsub.f32 %v3869, %v3923
    %v3950 = vsub.f32 %v3874, %v3925
    %v3951 = vsub.f32 %v3877, %v3927
    %v3952 = vsub.f32 %v3882, %v3929
    %v3953 = vsub.f32 %v3885, %v3931
    %v3954 = vsub.f32 %v3890, %v3933
    %v3955 = vsub.f32 %v3893, %v3935
    %v3956 = vsub.f32 %v3898, %v3937
    %v3957 = vsub.f32 %v3901, %v3939
    %v3958 = vsub.f32 %v3906, %v3941
    %v3959 = vsub.f32 %v3909, %v3943
    %v3960 = vmul.f32 %v3944, 1.442695
    %v3961 = vpow.pop %v3960
    %v3962 = vmul.f32 %v3945, 1.442695
    %v3963 = vpow.pop %v3962
    %v3964 = vmul.f32 %v3946, 1.442695
    %v3965 = vpow.pop %v3964
    %v3966 = vmul.f32 %v3947, 1.442695
    %v3967 = vpow.pop %v3966
    %v3968 = vmul.f32 %v3948, 1.442695
    %v3969 = vpow.pop %v3968
    %v3970 = vmul.f32 %v3949, 1.442695
    %v3971 = vpow.pop %v3970
    %v3972 = vmul.f32 %v3950, 1.442695
    %v3973 = vpow.pop %v3972
    %v3974 = vmul.f32 %v3951, 1.442695
    %v3975 = vpow.pop %v3974
    %v3976 = vmul.f32 %v3952, 1.442695
    %v3977 = vpow.pop %v3976
    %v3978 = vmul.f32 %v3953, 1.442695
    %v3979 = vpow.pop %v3978
    %v3980 = vmul.f32 %v3954, 1.442695
    %v3981 = vpow.pop %v3980
    %v3982 = vmul.f32 %v3955, 1.442695
    %v3983 = vpow.pop %v3982
    %v3984 = vmul.f32 %v3956, 1.442695
    %v3985 = vpow.pop %v3984
    %v3986 = vmul.f32 %v3957, 1.442695
    %v3987 = vpow.pop %v3986
    %v3988 = vmul.f32 %v3958, 1.442695
    %v3989 = vpow.pop %v3988
    %v3990 = vmul.f32 %v3959, 1.442695
    %v3991 = vpow.pop %v3990
    %3992 = vadd.xlane.f32.xlu0 %v3961
    %v3993 = vpop.xlane.xlu0 %3992
    %3994 = vadd.xlane.f32.xlu0 %v3963
    %v3995 = vpop.xlane.xlu0 %3994
    %3996 = vadd.xlane.f32.xlu0 %v3965
    %v3997 = vpop.xlane.xlu0 %3996
    %3998 = vadd.xlane.f32.xlu0 %v3967
    %v3999 = vpop.xlane.xlu0 %3998
    %4000 = vadd.xlane.f32.xlu0 %v3969
    %v4001 = vpop.xlane.xlu0 %4000
    %4002 = vadd.xlane.f32.xlu0 %v3971
    %v4003 = vpop.xlane.xlu0 %4002
    %4004 = vadd.xlane.f32.xlu0 %v3973
    %v4005 = vpop.xlane.xlu0 %4004
    %4006 = vadd.xlane.f32.xlu0 %v3975
    %v4007 = vpop.xlane.xlu0 %4006
    %4008 = vadd.xlane.f32.xlu0 %v3977
    %v4009 = vpop.xlane.xlu0 %4008
    %4010 = vadd.xlane.f32.xlu0 %v3979
    %v4011 = vpop.xlane.xlu0 %4010
    %4012 = vadd.xlane.f32.xlu0 %v3981
    %v4013 = vpop.xlane.xlu0 %4012
    %4014 = vadd.xlane.f32.xlu0 %v3983
    %v4015 = vpop.xlane.xlu0 %4014
    %4016 = vadd.xlane.f32.xlu0 %v3985
    %v4017 = vpop.xlane.xlu0 %4016
    %4018 = vadd.xlane.f32.xlu0 %v3987
    %v4019 = vpop.xlane.xlu0 %4018
    %4020 = vadd.xlane.f32.xlu0 %v3989
    %v4021 = vpop.xlane.xlu0 %4020
    %4022 = vadd.xlane.f32.xlu0 %v3991
    %v4023 = vpop.xlane.xlu0 %4022
    %v4024 = vrcp.pop %v3993
    %v4025 = vrcp.pop %v3995
    %v4026 = vrcp.pop %v3997
    %v4027 = vrcp.pop %v3999
    %v4028 = vrcp.pop %v4001
    %v4029 = vrcp.pop %v4003
    %v4030 = vrcp.pop %v4005
    %v4031 = vrcp.pop %v4007
    %v4032 = vrcp.pop %v4009
    %v4033 = vrcp.pop %v4011
    %v4034 = vrcp.pop %v4013
    %v4035 = vrcp.pop %v4015
    %v4036 = vrcp.pop %v4017
    %v4037 = vrcp.pop %v4019
    %v4038 = vrcp.pop %v4021
    %v4039 = vrcp.pop %v4023
    %v4040 = vmul.f32 %v3961, %v4024
    %v4041 = vmul.f32 %v3963, %v4025
    %v4042 = vmul.f32 %v3965, %v4026
    %v4043 = vmul.f32 %v3967, %v4027
    %v4044 = vmul.f32 %v3969, %v4028
    %v4045 = vmul.f32 %v3971, %v4029
    %v4046 = vmul.f32 %v3973, %v4030
    %v4047 = vmul.f32 %v3975, %v4031
    %v4048 = vmul.f32 %v3977, %v4032
    %v4049 = vmul.f32 %v3979, %v4033
    %v4050 = vmul.f32 %v3981, %v4034
    %v4051 = vmul.f32 %v3983, %v4035
    %v4052 = vmul.f32 %v3985, %v4036
    %v4053 = vmul.f32 %v3987, %v4037
    %v4054 = vmul.f32 %v3989, %v4038
    %v4055 = vmul.f32 %v3991, %v4039
    %4056 = vst [vmem:[#allocation8] sm:$0xff] %v4040
    %4057 = vst [vmem:[#allocation8 + $0x8] sm:$0xff] %v4041
    %4058 = vst [vmem:[#allocation8 + $0x10] sm:$0xff] %v4042
    %4059 = vst [vmem:[#allocation8 + $0x18] sm:$0xff] %v4043
    %4060 = vst [vmem:[#allocation8 + $0x20] sm:$0xff] %v4044
    %4061 = vst [vmem:[#allocation8 + $0x28] sm:$0xff] %v4045
    %4062 = vst [vmem:[#allocation8 + $0x30] sm:$0xff] %v4046
    %4063 = vst [vmem:[#allocation8 + $0x38] sm:$0xff] %v4047
    %4064 = vst [vmem:[#allocation8 + $0x40] sm:$0xff] %v4048
    %4065 = vst [vmem:[#allocation8 + $0x48] sm:$0xff] %v4049
    %4066 = vst [vmem:[#allocation8 + $0x50] sm:$0xff] %v4050
    %4067 = vst [vmem:[#allocation8 + $0x58] sm:$0xff] %v4051
    %4068 = vst [vmem:[#allocation8 + $0x60] sm:$0xff] %v4052
    %4069 = vst [vmem:[#allocation8 + $0x68] sm:$0xff] %v4053
    %4070 = vst [vmem:[#allocation8 + $0x70] sm:$0xff] %v4054
    %4071 = vst [vmem:[#allocation8 + $0x78] sm:$0xff] %v4055
    // Predicated region
    $region50: #{tpu_custom_call.1} parent=1 // pred_check
      _
    $region51: #{tpu_custom_call.1} parent=1 // pred_check_branch
      %4073 = sbr.rel (0) target = $region53
    $region52: #{tpu_custom_call.1} parent=1 // pred_region
      %s4075 = ssub.s32 2048, 2048
      %4076 = vsyncadd [#allocation4], %s4075
      %s4077 = sshll.u32 [#allocation8], 4
      %s4078 = int_to_ptr.vmem [resolvable:$true] %s4077
      %4083 = dma.vmem_to_hbm [thread:$0]  %s4078, 2048, %s9, [#allocation4], 128, 128, 8
    $region53: #{tpu_custom_call.1} parent=1 // pred_fallthru
      _
    // Predicated region
    $region54: #{tpu_custom_call.1} parent=1 // pred_check
      _
    $region55: #{tpu_custom_call.1} parent=1 // pred_check_branch
      %4085 = sbr.rel (0) target = $region57
    $region56: #{tpu_custom_call.1} parent=1 // pred_region
      %4086 = dma.done [#allocation4], 2048
    $region57: #{tpu_custom_call.1} parent=1 // pred_fallthru
      _
    %4087 = vsyncpa [#allocation3], 1
    %4088 = vsyncpa [#allocation6], 1
    %4089 = vsyncpa [#allocation4], 1

</llo_original>
